<compile_context>
chip_gen: v5e
topology: v5e:2x2
jax: 0.10.0
libtpu: 0.0.40
codegen_flags: <defaults>
</compile_context>

<pallas_src>
import jax
import jax.numpy as jnp
from jax.experimental import pallas as pl
from jax.experimental.pallas import tpu as pltpu


# ---------------------------------------------------------------------------
# Pallas kernels
# ---------------------------------------------------------------------------
def _matmul_bn_relu_kernel(p_ref, w_ref, shift_ref, o_ref, acc_ref):
    """Tiled GEMM with K-reduction accumulator; epilogue = +shift, ReLU."""
    @pl.when(pl.program_id(2) == 0)
    def _():
        acc_ref[...] = jnp.zeros_like(acc_ref)

    acc_ref[...] += jnp.dot(
        p_ref[...], w_ref[...], preferred_element_type=jnp.float32
    )

    @pl.when(pl.program_id(2) == pl.num_programs(2) - 1)
    def _():
        o_ref[...] = jnp.maximum(acc_ref[...] + shift_ref[...], 0.0)


def _maxpool_kernel(s_ref, o_ref):
    # s_ref: (9, tm, Cp) stacked 3x3 window taps;  o_ref: (tm, Cp)
    o_ref[...] = jnp.max(s_ref[...], axis=0)


# ---------------------------------------------------------------------------
# Helpers (layout plumbing, tile selection)
# ---------------------------------------------------------------------------
def _round_up(x, m):
    return (x + m - 1) // m * m


def _pick_tile(extent, unit, max_units):
    """Tile size that is a multiple of `unit`, at most unit*max_units, plus the
    padded extent (a multiple of the tile)."""
    padded_units = _round_up(extent, unit) // unit
    n_tiles = -(-padded_units // max_units)          # cdiv
    tile_units = -(-padded_units // n_tiles)         # cdiv
    tile = tile_units * unit
    return tile, n_tiles * tile


def _im2col(x_nhwc, kh, kw, stride, padding):
    if padding:
        x_nhwc = jnp.pad(
            x_nhwc, ((0, 0), (padding, padding), (padding, padding), (0, 0))
        )
    N, H, W, C = x_nhwc.shape
    Ho = (H - kh) // stride + 1
    Wo = (W - kw) // stride + 1
    cols = []
    for dh in range(kh):
        for dw in range(kw):
            cols.append(
                x_nhwc[
                    :,
                    dh : dh + stride * (Ho - 1) + 1 : stride,
                    dw : dw + stride * (Wo - 1) + 1 : stride,
                    :,
                ]
            )
    # (N, Ho, Wo, kh*kw, C) -> (M, kh*kw*C); flat order = ((dh*kw+dw)*C + ci)
    patches = jnp.stack(cols, axis=3).reshape(N * Ho * Wo, kh * kw * C)
    return patches, Ho, Wo


_VMEM_LIMIT = 48 * 1024 * 1024  # fits all generations (v7x physical = 64 MiB)


# ---------------------------------------------------------------------------
# Conv + BN(eps=1e-3, gamma=1) + ReLU  (PyTorch semantics), tiled GEMM
# ---------------------------------------------------------------------------
def conv_bn_relu(x_nhwc, params, stride=1, padding=0):
    w, beta, mean, var = params          # w: (Cout, Cin, kh, kw) PyTorch layout
    Cout, Cin, kh, kw = w.shape
    N = x_nhwc.shape[0]

    # im2col in bf16 (halves HBM traffic; MXU operands are bf16 anyway).
    # TODO(synk): for very large inputs, fold the 3x3 taps into a grid
    # reduction axis instead of materializing the im2col matrix in HBM.
    patches, Ho, Wo = _im2col(x_nhwc.astype(jnp.bfloat16), kh, kw, stride, padding)
    M, K = patches.shape

    # Fold BN into the GEMM: scale into weights, shift applied in the epilogue.
    scale = 1.0 / jnp.sqrt(var.astype(jnp.float32) + 1e-3)
    shift = beta.astype(jnp.float32) - mean.astype(jnp.float32) * scale
    w_mat = (
        jnp.transpose(w, (2, 3, 1, 0)).reshape(K, Cout).astype(jnp.float32)
        * scale[None, :]
    )

    # Lane-dense / sublane-aligned padding and tile selection.
    Cp = _round_up(Cout, 128)
    tm, Mp = _pick_tile(M, 16, 32)     # tm <= 512, multiple of 16 (bf16 pack)
    tk, Kp = _pick_tile(K, 128, 8)     # tk <= 1024, multiple of 128
    tn = Cp if Cp <= 512 else 256

    patches_p = jnp.zeros((Mp, Kp), jnp.bfloat16).at[:M, :K].set(patches)
    w_p = (
        jnp.zeros((Kp, Cp), jnp.bfloat16)
        .at[:K, :Cout]
        .set(w_mat.astype(jnp.bfloat16))
    )
    shift_p = jnp.zeros((1, Cp), jnp.float32).at[:, :Cout].set(shift[None, :])

    grid = (Mp // tm, Cp // tn, Kp // tk)
    out = pl.pallas_call(
        _matmul_bn_relu_kernel,
        out_shape=jax.ShapeDtypeStruct((Mp, Cp), jnp.float32),
        grid_spec=pltpu.PrefetchScalarGridSpec(
            num_scalar_prefetch=0,
            grid=grid,
            in_specs=[
                pl.BlockSpec((tm, tk), lambda i, j, k: (i, k)),
                pl.BlockSpec((tk, tn), lambda i, j, k: (k, j)),
                pl.BlockSpec((1, tn), lambda i, j, k: (0, j)),
            ],
            out_specs=pl.BlockSpec((tm, tn), lambda i, j, k: (i, j)),
            scratch_shapes=[pltpu.VMEM((tm, tn), jnp.float32)],
        ),
        compiler_params=pltpu.CompilerParams(
            dimension_semantics=("parallel", "parallel", "arbitrary"),
            vmem_limit_bytes=_VMEM_LIMIT,
        ),
    )(patches_p, w_p, shift_p)

    return out[:M, :Cout].reshape(N, Ho, Wo, Cout)


# ---------------------------------------------------------------------------
# 3x3 stride-2 max pool, tiled over M with lane-dense channel pad
# ---------------------------------------------------------------------------
def maxpool_3x3_s2(x_nhwc):
    N, H, W, C = x_nhwc.shape
    Ho = (H - 3) // 2 + 1
    Wo = (W - 3) // 2 + 1
    M = N * Ho * Wo

    slabs = []
    for dh in range(3):
        for dw in range(3):
            slabs.append(
                x_nhwc[
                    :, dh : dh + 2 * (Ho - 1) + 1 : 2, dw : dw + 2 * (Wo - 1) + 1 : 2, :
                ]
            )
    stacked = jnp.stack(slabs, axis=0).reshape(9, M, C).astype(jnp.float32)

    Cp = _round_up(C, 128)
    tm, Mp = _pick_tile(M, 8, 32)      # tm <= 256, multiple of 8
    stacked_p = jnp.zeros((9, Mp, Cp), jnp.float32).at[:, :M, :C].set(stacked)

    out = pl.pallas_call(
        _maxpool_kernel,
        out_shape=jax.ShapeDtypeStruct((Mp, Cp), jnp.float32),
        grid_spec=pltpu.PrefetchScalarGridSpec(
            num_scalar_prefetch=0,
            grid=(Mp // tm,),
            in_specs=[pl.BlockSpec((9, tm, Cp), lambda i: (0, i, 0))],
            out_specs=pl.BlockSpec((tm, Cp), lambda i: (i, 0)),
        ),
        compiler_params=pltpu.CompilerParams(
            dimension_semantics=("parallel",),
            vmem_limit_bytes=_VMEM_LIMIT,
        ),
    )(stacked_p)
    return out[:M, :C].reshape(N, Ho, Wo, C)


# ---------------------------------------------------------------------------
# InceptionB forward
# ---------------------------------------------------------------------------
def inception_b(x_nchw, params):
    """InceptionB forward.  x_nchw: (N, Cin, H, W) -> (N, 384+96+Cin, Ho, Wo)."""
    x = jnp.transpose(x_nchw, (0, 2, 3, 1)).astype(jnp.float32)  # NHWC

    # branch 1: 3x3 stride-2 conv -> 384 ch
    b0 = conv_bn_relu(x, params["conv"], stride=2, padding=0)

    # branch 2: 1x1 -> 3x3(pad1) -> 3x3(stride2) tower -> 96 ch
    t = conv_bn_relu(x, params["tower_conv"], stride=1, padding=0)
    t = conv_bn_relu(t, params["tower_conv_1"], stride=1, padding=1)
    t = conv_bn_relu(t, params["tower_conv_2"], stride=2, padding=0)

    # branch 3: 3x3 stride-2 max pool (keeps Cin channels)
    p = maxpool_3x3_s2(x)

    out = jnp.concatenate([b0, t, p], axis=-1)            # concat on channels
    return jnp.transpose(out, (0, 3, 1, 2))               # back to NCHW


# ---------------------------------------------------------------------------
# Deterministic parameter construction (shapes from InceptionB.__init__)
# ---------------------------------------------------------------------------
def init_conv_params(key, in_c, out_c, kh, kw):
    k1, k2, k3, k4 = jax.random.split(key, 4)
    w = jax.random.normal(k1, (out_c, in_c, kh, kw), jnp.float32) * 0.1
    beta = jax.random.normal(k2, (out_c,), jnp.float32) * 0.1
    mean = jax.random.normal(k3, (out_c,), jnp.float32) * 0.1
    var = jax.random.uniform(k4, (out_c,), jnp.float32, minval=0.5, maxval=1.5)
    return (w, beta, mean, var)


def init_inception_b_params(key, in_channels):
    k0, k1, k2, k3 = jax.random.split(key, 4)
    return {
        "conv": init_conv_params(k0, in_channels, 384, 3, 3),
        "tower_conv": init_conv_params(k1, in_channels, 64, 1, 1),
        "tower_conv_1": init_conv_params(k2, 64, 96, 3, 3),
        "tower_conv_2": init_conv_params(k3, 96, 96, 3, 3),
    }


if __name__ == "__main__":
    key = jax.random.PRNGKey(0)
    kx, kp = jax.random.split(key)

    N, C, H, W = 2, 4, 16, 16
    x = jax.random.normal(kx, (N, C, H, W), jnp.float32)
    params = init_inception_b_params(kp, C)

    y = jax.jit(inception_b)(x, params)
    jax.block_until_ready(y)

    # expected output channels = 384 + 96 + C ; spatial = (H-3)//2 + 1
    Ho = (H - 3) // 2 + 1
    assert y.shape == (N, 384 + 96 + C, Ho, Ho), y.shape
    assert y.dtype == jnp.float32
    print("KERNEL_OK")
</pallas_src>

<mosaic_0001>
module attributes {stable_mosaic.version = 11 : i64} {
  func.func @_matmul_bn_relu_kernel(%arg0: i32, %arg1: i32, %arg2: i32, %arg3: memref<512x128xbf16, #tpu.memory_space<vmem>>, %arg4: memref<128x128xbf16, #tpu.memory_space<vmem>>, %arg5: memref<1x128xf32, #tpu.memory_space<vmem>>, %arg6: memref<512x128xf32, #tpu.memory_space<vmem>>, %arg7: memref<512x128xf32, #tpu.memory_space<vmem>>) attributes {dimension_semantics = [#tpu.dimension_semantics<parallel>, #tpu.dimension_semantics<parallel>, #tpu.dimension_semantics<arbitrary>], iteration_bounds = array<i64: 1, 1, 1>, scalar_prefetch = 0 : i64, scratch_operands = 1 : i64, tpu.core_type = #tpu.core_type<tc>, window_params = [{transform_indices = @transform_0, window_bounds = array<i64: 512, 128>}, {transform_indices = @transform_1, window_bounds = array<i64: 128, 128>}, {transform_indices = @transform_2, window_bounds = array<i64: 1, 128>}, {transform_indices = @transform_3, window_bounds = array<i64: 512, 128>}]} {
    %c0_i32 = arith.constant 0 : i32
    %0 = arith.cmpi eq, %arg2, %c0_i32 : i32
    %1 = arith.extui %0 : i1 to i32
    %c0_i32_0 = arith.constant 0 : i32
    %2 = arith.cmpi ne, %1, %c0_i32_0 : i32
    scf.if %2 {
      %cst_10 = arith.constant 0.000000e+00 : f32
      %12 = vector.broadcast %cst_10 : f32 to vector<512x128xf32>
      %c0_11 = arith.constant 0 : index
      %c0_12 = arith.constant 0 : index
      %13 = vector.load %arg7[%c0_11, %c0_12] : memref<512x128xf32, #tpu.memory_space<vmem>>, vector<512x128xf32>
      tpu.vector_store %arg7[%c0_11, %c0_12], %12 {strides = array<i32>} : memref<512x128xf32, #tpu.memory_space<vmem>>, vector<512x128xf32>,
    } else {
    }
    %c0 = arith.constant 0 : index
    %c0_1 = arith.constant 0 : index
    %3 = vector.load %arg7[%c0, %c0_1] : memref<512x128xf32, #tpu.memory_space<vmem>>, vector<512x128xf32>
    %c0_2 = arith.constant 0 : index
    %c0_3 = arith.constant 0 : index
    %4 = vector.load %arg3[%c0_2, %c0_3] : memref<512x128xbf16, #tpu.memory_space<vmem>>, vector<512x128xbf16>
    %c0_4 = arith.constant 0 : index
    %c0_5 = arith.constant 0 : index
    %5 = vector.load %arg4[%c0_4, %c0_5] : memref<128x128xbf16, #tpu.memory_space<vmem>>, vector<128x128xbf16>
    %cst = arith.constant dense<0.000000e+00> : vector<512x128xf32>
    %6 = tpu.matmul %4, %5, %cst {dimension_numbers = #tpu.dot_dimension_numbers<[1], [0], [0], [1], [0, 0, 1, 1], [], []>} : vector<512x128xbf16>, vector<128x128xbf16>, vector<512x128xf32> -> vector<512x128xf32>
    %7 = arith.addf %3, %6 : vector<512x128xf32>
    %c0_6 = arith.constant 0 : index
    %c0_7 = arith.constant 0 : index
    %8 = vector.load %arg7[%c0_6, %c0_7] : memref<512x128xf32, #tpu.memory_space<vmem>>, vector<512x128xf32>
    tpu.vector_store %arg7[%c0_6, %c0_7], %7 {strides = array<i32>} : memref<512x128xf32, #tpu.memory_space<vmem>>, vector<512x128xf32>,
    %c0_i32_8 = arith.constant 0 : i32
    %9 = arith.cmpi eq, %arg2, %c0_i32_8 : i32
    %10 = arith.extui %9 : i1 to i32
    %c0_i32_9 = arith.constant 0 : i32
    %11 = arith.cmpi ne, %10, %c0_i32_9 : i32
    scf.if %11 {
      %c0_10 = arith.constant 0 : index
      %c0_11 = arith.constant 0 : index
      %12 = vector.load %arg7[%c0_10, %c0_11] : memref<512x128xf32, #tpu.memory_space<vmem>>, vector<512x128xf32>
      %c0_12 = arith.constant 0 : index
      %c0_13 = arith.constant 0 : index
      %13 = vector.load %arg5[%c0_12, %c0_13] : memref<1x128xf32, #tpu.memory_space<vmem>>, vector<1x128xf32>
      %14 = vector.broadcast %13 : vector<1x128xf32> to vector<512x128xf32>
      %15 = arith.addf %12, %14 : vector<512x128xf32>
      %cst_14 = arith.constant 0.000000e+00 : f32
      %16 = vector.broadcast %cst_14 : f32 to vector<512x128xf32>
      %17 = arith.maximumf %15, %16 : vector<512x128xf32>
      %c0_15 = arith.constant 0 : index
      %c0_16 = arith.constant 0 : index
      %18 = vector.load %arg6[%c0_15, %c0_16] : memref<512x128xf32, #tpu.memory_space<vmem>>, vector<512x128xf32>
      tpu.vector_store %arg6[%c0_15, %c0_16], %17 {strides = array<i32>} : memref<512x128xf32, #tpu.memory_space<vmem>>, vector<512x128xf32>,
    } else {
    }
    return
  }
  func.func @transform_0(%arg0: i32, %arg1: i32, %arg2: i32) -> (i32, i32) {
    %c0_i32 = arith.constant 0 : i32
    return %arg0, %arg2 : i32, i32
  }
  func.func @transform_1(%arg0: i32, %arg1: i32, %arg2: i32) -> (i32, i32) {
    %c0_i32 = arith.constant 0 : i32
    return %arg2, %arg1 : i32, i32
  }
  func.func @transform_2(%arg0: i32, %arg1: i32, %arg2: i32) -> (i32, i32) {
    %c0_i32 = arith.constant 0 : i32
    %c0_i32_0 = arith.constant 0 : i32
    return %c0_i32, %arg1 : i32, i32
  }
  func.func @transform_3(%arg0: i32, %arg1: i32, %arg2: i32) -> (i32, i32) {
    %c0_i32 = arith.constant 0 : i32
    return %arg0, %arg1 : i32, i32
  }
}

module attributes {stable_mosaic.version = 11 : i64} {
  func.func @_matmul_bn_relu_kernel(%arg0: i32, %arg1: i32, %arg2: i32, %arg3: memref<512x640xbf16, #tpu.memory_space<vmem>>, %arg4: memref<640x128xbf16, #tpu.memory_space<vmem>>, %arg5: memref<1x128xf32, #tpu.memory_space<vmem>>, %arg6: memref<512x128xf32, #tpu.memory_space<vmem>>, %arg7: memref<512x128xf32, #tpu.memory_space<vmem>>) attributes {dimension_semantics = [#tpu.dimension_semantics<parallel>, #tpu.dimension_semantics<parallel>, #tpu.dimension_semantics<arbitrary>], iteration_bounds = array<i64: 1, 1, 1>, scalar_prefetch = 0 : i64, scratch_operands = 1 : i64, tpu.core_type = #tpu.core_type<tc>, window_params = [{transform_indices = @transform_0, window_bounds = array<i64: 512, 640>}, {transform_indices = @transform_1, window_bounds = array<i64: 640, 128>}, {transform_indices = @transform_2, window_bounds = array<i64: 1, 128>}, {transform_indices = @transform_3, window_bounds = array<i64: 512, 128>}]} {
    %c0_i32 = arith.constant 0 : i32
    %0 = arith.cmpi eq, %arg2, %c0_i32 : i32
    %1 = arith.extui %0 : i1 to i32
    %c0_i32_0 = arith.constant 0 : i32
    %2 = arith.cmpi ne, %1, %c0_i32_0 : i32
    scf.if %2 {
      %cst_10 = arith.constant 0.000000e+00 : f32
      %12 = vector.broadcast %cst_10 : f32 to vector<512x128xf32>
      %c0_11 = arith.constant 0 : index
      %c0_12 = arith.constant 0 : index
      %13 = vector.load %arg7[%c0_11, %c0_12] : memref<512x128xf32, #tpu.memory_space<vmem>>, vector<512x128xf32>
      tpu.vector_store %arg7[%c0_11, %c0_12], %12 {strides = array<i32>} : memref<512x128xf32, #tpu.memory_space<vmem>>, vector<512x128xf32>,
    } else {
    }
    %c0 = arith.constant 0 : index
    %c0_1 = arith.constant 0 : index
    %3 = vector.load %arg7[%c0, %c0_1] : memref<512x128xf32, #tpu.memory_space<vmem>>, vector<512x128xf32>
    %c0_2 = arith.constant 0 : index
    %c0_3 = arith.constant 0 : index
    %4 = vector.load %arg3[%c0_2, %c0_3] : memref<512x640xbf16, #tpu.memory_space<vmem>>, vector<512x640xbf16>
    %c0_4 = arith.constant 0 : index
    %c0_5 = arith.constant 0 : index
    %5 = vector.load %arg4[%c0_4, %c0_5] : memref<640x128xbf16, #tpu.memory_space<vmem>>, vector<640x128xbf16>
    %cst = arith.constant dense<0.000000e+00> : vector<512x128xf32>
    %6 = tpu.matmul %4, %5, %cst {dimension_numbers = #tpu.dot_dimension_numbers<[1], [0], [0], [1], [0, 0, 1, 1], [], []>} : vector<512x640xbf16>, vector<640x128xbf16>, vector<512x128xf32> -> vector<512x128xf32>
    %7 = arith.addf %3, %6 : vector<512x128xf32>
    %c0_6 = arith.constant 0 : index
    %c0_7 = arith.constant 0 : index
    %8 = vector.load %arg7[%c0_6, %c0_7] : memref<512x128xf32, #tpu.memory_space<vmem>>, vector<512x128xf32>
    tpu.vector_store %arg7[%c0_6, %c0_7], %7 {strides = array<i32>} : memref<512x128xf32, #tpu.memory_space<vmem>>, vector<512x128xf32>,
    %c0_i32_8 = arith.constant 0 : i32
    %9 = arith.cmpi eq, %arg2, %c0_i32_8 : i32
    %10 = arith.extui %9 : i1 to i32
    %c0_i32_9 = arith.constant 0 : i32
    %11 = arith.cmpi ne, %10, %c0_i32_9 : i32
    scf.if %11 {
      %c0_10 = arith.constant 0 : index
      %c0_11 = arith.constant 0 : index
      %12 = vector.load %arg7[%c0_10, %c0_11] : memref<512x128xf32, #tpu.memory_space<vmem>>, vector<512x128xf32>
      %c0_12 = arith.constant 0 : index
      %c0_13 = arith.constant 0 : index
      %13 = vector.load %arg5[%c0_12, %c0_13] : memref<1x128xf32, #tpu.memory_space<vmem>>, vector<1x128xf32>
      %14 = vector.broadcast %13 : vector<1x128xf32> to vector<512x128xf32>
      %15 = arith.addf %12, %14 : vector<512x128xf32>
      %cst_14 = arith.constant 0.000000e+00 : f32
      %16 = vector.broadcast %cst_14 : f32 to vector<512x128xf32>
      %17 = arith.maximumf %15, %16 : vector<512x128xf32>
      %c0_15 = arith.constant 0 : index
      %c0_16 = arith.constant 0 : index
      %18 = vector.load %arg6[%c0_15, %c0_16] : memref<512x128xf32, #tpu.memory_space<vmem>>, vector<512x128xf32>
      tpu.vector_store %arg6[%c0_15, %c0_16], %17 {strides = array<i32>} : memref<512x128xf32, #tpu.memory_space<vmem>>, vector<512x128xf32>,
    } else {
    }
    return
  }
  func.func @transform_0(%arg0: i32, %arg1: i32, %arg2: i32) -> (i32, i32) {
    %c0_i32 = arith.constant 0 : i32
    return %arg0, %arg2 : i32, i32
  }
  func.func @transform_1(%arg0: i32, %arg1: i32, %arg2: i32) -> (i32, i32) {
    %c0_i32 = arith.constant 0 : i32
    return %arg2, %arg1 : i32, i32
  }
  func.func @transform_2(%arg0: i32, %arg1: i32, %arg2: i32) -> (i32, i32) {
    %c0_i32 = arith.constant 0 : i32
    %c0_i32_0 = arith.constant 0 : i32
    return %c0_i32, %arg1 : i32, i32
  }
  func.func @transform_3(%arg0: i32, %arg1: i32, %arg2: i32) -> (i32, i32) {
    %c0_i32 = arith.constant 0 : i32
    return %arg0, %arg1 : i32, i32
  }
}

module attributes {stable_mosaic.version = 11 : i64} {
  func.func @_matmul_bn_relu_kernel(%arg0: i32, %arg1: i32, %arg2: i32, %arg3: memref<112x896xbf16, #tpu.memory_space<vmem>>, %arg4: memref<896x128xbf16, #tpu.memory_space<vmem>>, %arg5: memref<1x128xf32, #tpu.memory_space<vmem>>, %arg6: memref<112x128xf32, #tpu.memory_space<vmem>>, %arg7: memref<112x128xf32, #tpu.memory_space<vmem>>) attributes {dimension_semantics = [#tpu.dimension_semantics<parallel>, #tpu.dimension_semantics<parallel>, #tpu.dimension_semantics<arbitrary>], iteration_bounds = array<i64: 1, 1, 1>, scalar_prefetch = 0 : i64, scratch_operands = 1 : i64, tpu.core_type = #tpu.core_type<tc>, window_params = [{transform_indices = @transform_0, window_bounds = array<i64: 112, 896>}, {transform_indices = @transform_1, window_bounds = array<i64: 896, 128>}, {transform_indices = @transform_2, window_bounds = array<i64: 1, 128>}, {transform_indices = @transform_3, window_bounds = array<i64: 112, 128>}]} {
    %c0_i32 = arith.constant 0 : i32
    %0 = arith.cmpi eq, %arg2, %c0_i32 : i32
    %1 = arith.extui %0 : i1 to i32
    %c0_i32_0 = arith.constant 0 : i32
    %2 = arith.cmpi ne, %1, %c0_i32_0 : i32
    scf.if %2 {
      %cst_10 = arith.constant 0.000000e+00 : f32
      %12 = vector.broadcast %cst_10 : f32 to vector<112x128xf32>
      %c0_11 = arith.constant 0 : index
      %c0_12 = arith.constant 0 : index
      %13 = vector.load %arg7[%c0_11, %c0_12] : memref<112x128xf32, #tpu.memory_space<vmem>>, vector<112x128xf32>
      tpu.vector_store %arg7[%c0_11, %c0_12], %12 {strides = array<i32>} : memref<112x128xf32, #tpu.memory_space<vmem>>, vector<112x128xf32>,
    } else {
    }
    %c0 = arith.constant 0 : index
    %c0_1 = arith.constant 0 : index
    %3 = vector.load %arg7[%c0, %c0_1] : memref<112x128xf32, #tpu.memory_space<vmem>>, vector<112x128xf32>
    %c0_2 = arith.constant 0 : index
    %c0_3 = arith.constant 0 : index
    %4 = vector.load %arg3[%c0_2, %c0_3] : memref<112x896xbf16, #tpu.memory_space<vmem>>, vector<112x896xbf16>
    %c0_4 = arith.constant 0 : index
    %c0_5 = arith.constant 0 : index
    %5 = vector.load %arg4[%c0_4, %c0_5] : memref<896x128xbf16, #tpu.memory_space<vmem>>, vector<896x128xbf16>
    %cst = arith.constant dense<0.000000e+00> : vector<112x128xf32>
    %6 = tpu.matmul %4, %5, %cst {dimension_numbers = #tpu.dot_dimension_numbers<[1], [0], [0], [1], [0, 0, 1, 1], [], []>} : vector<112x896xbf16>, vector<896x128xbf16>, vector<112x128xf32> -> vector<112x128xf32>
    %7 = arith.addf %3, %6 : vector<112x128xf32>
    %c0_6 = arith.constant 0 : index
    %c0_7 = arith.constant 0 : index
    %8 = vector.load %arg7[%c0_6, %c0_7] : memref<112x128xf32, #tpu.memory_space<vmem>>, vector<112x128xf32>
    tpu.vector_store %arg7[%c0_6, %c0_7], %7 {strides = array<i32>} : memref<112x128xf32, #tpu.memory_space<vmem>>, vector<112x128xf32>,
    %c0_i32_8 = arith.constant 0 : i32
    %9 = arith.cmpi eq, %arg2, %c0_i32_8 : i32
    %10 = arith.extui %9 : i1 to i32
    %c0_i32_9 = arith.constant 0 : i32
    %11 = arith.cmpi ne, %10, %c0_i32_9 : i32
    scf.if %11 {
      %c0_10 = arith.constant 0 : index
      %c0_11 = arith.constant 0 : index
      %12 = vector.load %arg7[%c0_10, %c0_11] : memref<112x128xf32, #tpu.memory_space<vmem>>, vector<112x128xf32>
      %c0_12 = arith.constant 0 : index
      %c0_13 = arith.constant 0 : index
      %13 = vector.load %arg5[%c0_12, %c0_13] : memref<1x128xf32, #tpu.memory_space<vmem>>, vector<1x128xf32>
      %14 = vector.broadcast %13 : vector<1x128xf32> to vector<112x128xf32>
      %15 = arith.addf %12, %14 : vector<112x128xf32>
      %cst_14 = arith.constant 0.000000e+00 : f32
      %16 = vector.broadcast %cst_14 : f32 to vector<112x128xf32>
      %17 = arith.maximumf %15, %16 : vector<112x128xf32>
      %c0_15 = arith.constant 0 : index
      %c0_16 = arith.constant 0 : index
      %18 = vector.load %arg6[%c0_15, %c0_16] : memref<112x128xf32, #tpu.memory_space<vmem>>, vector<112x128xf32>
      tpu.vector_store %arg6[%c0_15, %c0_16], %17 {strides = array<i32>} : memref<112x128xf32, #tpu.memory_space<vmem>>, vector<112x128xf32>,
    } else {
    }
    return
  }
  func.func @transform_0(%arg0: i32, %arg1: i32, %arg2: i32) -> (i32, i32) {
    %c0_i32 = arith.constant 0 : i32
    return %arg0, %arg2 : i32, i32
  }
  func.func @transform_1(%arg0: i32, %arg1: i32, %arg2: i32) -> (i32, i32) {
    %c0_i32 = arith.constant 0 : i32
    return %arg2, %arg1 : i32, i32
  }
  func.func @transform_2(%arg0: i32, %arg1: i32, %arg2: i32) -> (i32, i32) {
    %c0_i32 = arith.constant 0 : i32
    %c0_i32_0 = arith.constant 0 : i32
    return %c0_i32, %arg1 : i32, i32
  }
  func.func @transform_3(%arg0: i32, %arg1: i32, %arg2: i32) -> (i32, i32) {
    %c0_i32 = arith.constant 0 : i32
    return %arg0, %arg1 : i32, i32
  }
}

module attributes {stable_mosaic.version = 11 : i64} {
  func.func @_matmul_bn_relu_kernel(%arg0: i32, %arg1: i32, %arg2: i32, %arg3: memref<112x128xbf16, #tpu.memory_space<vmem>>, %arg4: memref<128x384xbf16, #tpu.memory_space<vmem>>, %arg5: memref<1x384xf32, #tpu.memory_space<vmem>>, %arg6: memref<112x384xf32, #tpu.memory_space<vmem>>, %arg7: memref<112x384xf32, #tpu.memory_space<vmem>>) attributes {dimension_semantics = [#tpu.dimension_semantics<parallel>, #tpu.dimension_semantics<parallel>, #tpu.dimension_semantics<arbitrary>], iteration_bounds = array<i64: 1, 1, 1>, scalar_prefetch = 0 : i64, scratch_operands = 1 : i64, tpu.core_type = #tpu.core_type<tc>, window_params = [{transform_indices = @transform_0, window_bounds = array<i64: 112, 128>}, {transform_indices = @transform_1, window_bounds = array<i64: 128, 384>}, {transform_indices = @transform_2, window_bounds = array<i64: 1, 384>}, {transform_indices = @transform_3, window_bounds = array<i64: 112, 384>}]} {
    %c0_i32 = arith.constant 0 : i32
    %0 = arith.cmpi eq, %arg2, %c0_i32 : i32
    %1 = arith.extui %0 : i1 to i32
    %c0_i32_0 = arith.constant 0 : i32
    %2 = arith.cmpi ne, %1, %c0_i32_0 : i32
    scf.if %2 {
      %cst_10 = arith.constant 0.000000e+00 : f32
      %12 = vector.broadcast %cst_10 : f32 to vector<112x384xf32>
      %c0_11 = arith.constant 0 : index
      %c0_12 = arith.constant 0 : index
      %13 = vector.load %arg7[%c0_11, %c0_12] : memref<112x384xf32, #tpu.memory_space<vmem>>, vector<112x384xf32>
      tpu.vector_store %arg7[%c0_11, %c0_12], %12 {strides = array<i32>} : memref<112x384xf32, #tpu.memory_space<vmem>>, vector<112x384xf32>,
    } else {
    }
    %c0 = arith.constant 0 : index
    %c0_1 = arith.constant 0 : index
    %3 = vector.load %arg7[%c0, %c0_1] : memref<112x384xf32, #tpu.memory_space<vmem>>, vector<112x384xf32>
    %c0_2 = arith.constant 0 : index
    %c0_3 = arith.constant 0 : index
    %4 = vector.load %arg3[%c0_2, %c0_3] : memref<112x128xbf16, #tpu.memory_space<vmem>>, vector<112x128xbf16>
    %c0_4 = arith.constant 0 : index
    %c0_5 = arith.constant 0 : index
    %5 = vector.load %arg4[%c0_4, %c0_5] : memref<128x384xbf16, #tpu.memory_space<vmem>>, vector<128x384xbf16>
    %cst = arith.constant dense<0.000000e+00> : vector<112x384xf32>
    %6 = tpu.matmul %4, %5, %cst {dimension_numbers = #tpu.dot_dimension_numbers<[1], [0], [0], [1], [0, 0, 1, 1], [], []>} : vector<112x128xbf16>, vector<128x384xbf16>, vector<112x384xf32> -> vector<112x384xf32>
    %7 = arith.addf %3, %6 : vector<112x384xf32>
    %c0_6 = arith.constant 0 : index
    %c0_7 = arith.constant 0 : index
    %8 = vector.load %arg7[%c0_6, %c0_7] : memref<112x384xf32, #tpu.memory_space<vmem>>, vector<112x384xf32>
    tpu.vector_store %arg7[%c0_6, %c0_7], %7 {strides = array<i32>} : memref<112x384xf32, #tpu.memory_space<vmem>>, vector<112x384xf32>,
    %c0_i32_8 = arith.constant 0 : i32
    %9 = arith.cmpi eq, %arg2, %c0_i32_8 : i32
    %10 = arith.extui %9 : i1 to i32
    %c0_i32_9 = arith.constant 0 : i32
    %11 = arith.cmpi ne, %10, %c0_i32_9 : i32
    scf.if %11 {
      %c0_10 = arith.constant 0 : index
      %c0_11 = arith.constant 0 : index
      %12 = vector.load %arg7[%c0_10, %c0_11] : memref<112x384xf32, #tpu.memory_space<vmem>>, vector<112x384xf32>
      %c0_12 = arith.constant 0 : index
      %c0_13 = arith.constant 0 : index
      %13 = vector.load %arg5[%c0_12, %c0_13] : memref<1x384xf32, #tpu.memory_space<vmem>>, vector<1x384xf32>
      %14 = vector.broadcast %13 : vector<1x384xf32> to vector<112x384xf32>
      %15 = arith.addf %12, %14 : vector<112x384xf32>
      %cst_14 = arith.constant 0.000000e+00 : f32
      %16 = vector.broadcast %cst_14 : f32 to vector<112x384xf32>
      %17 = arith.maximumf %15, %16 : vector<112x384xf32>
      %c0_15 = arith.constant 0 : index
      %c0_16 = arith.constant 0 : index
      %18 = vector.load %arg6[%c0_15, %c0_16] : memref<112x384xf32, #tpu.memory_space<vmem>>, vector<112x384xf32>
      tpu.vector_store %arg6[%c0_15, %c0_16], %17 {strides = array<i32>} : memref<112x384xf32, #tpu.memory_space<vmem>>, vector<112x384xf32>,
    } else {
    }
    return
  }
  func.func @transform_0(%arg0: i32, %arg1: i32, %arg2: i32) -> (i32, i32) {
    %c0_i32 = arith.constant 0 : i32
    return %arg0, %arg2 : i32, i32
  }
  func.func @transform_1(%arg0: i32, %arg1: i32, %arg2: i32) -> (i32, i32) {
    %c0_i32 = arith.constant 0 : i32
    return %arg2, %arg1 : i32, i32
  }
  func.func @transform_2(%arg0: i32, %arg1: i32, %arg2: i32) -> (i32, i32) {
    %c0_i32 = arith.constant 0 : i32
    %c0_i32_0 = arith.constant 0 : i32
    return %c0_i32, %arg1 : i32, i32
  }
  func.func @transform_3(%arg0: i32, %arg1: i32, %arg2: i32) -> (i32, i32) {
    %c0_i32 = arith.constant 0 : i32
    return %arg0, %arg1 : i32, i32
  }
}

module attributes {stable_mosaic.version = 11 : i64} {
  func.func @_maxpool_kernel(%arg0: i32, %arg1: memref<9x104x128xf32, #tpu.memory_space<vmem>>, %arg2: memref<104x128xf32, #tpu.memory_space<vmem>>) attributes {dimension_semantics = [#tpu.dimension_semantics<parallel>], iteration_bounds = array<i64: 1>, scalar_prefetch = 0 : i64, scratch_operands = 0 : i64, tpu.core_type = #tpu.core_type<tc>, window_params = [{transform_indices = @transform_0, window_bounds = array<i64: 9, 104, 128>}, {transform_indices = @transform_1, window_bounds = array<i64: 104, 128>}]} {
    %c0 = arith.constant 0 : index
    %c0_0 = arith.constant 0 : index
    %c0_1 = arith.constant 0 : index
    %0 = vector.load %arg1[%c0, %c0_0, %c0_1] : memref<9x104x128xf32, #tpu.memory_space<vmem>>, vector<9x104x128xf32>
    %cst = arith.constant dense<0xFF800000> : vector<104x128xf32>
    %1 = vector.multi_reduction <maximumf>, %0, %cst [0] : vector<9x104x128xf32> to vector<104x128xf32>
    %c0_2 = arith.constant 0 : index
    %c0_3 = arith.constant 0 : index
    %2 = vector.load %arg2[%c0_2, %c0_3] : memref<104x128xf32, #tpu.memory_space<vmem>>, vector<104x128xf32>
    tpu.vector_store %arg2[%c0_2, %c0_3], %1 {strides = array<i32>} : memref<104x128xf32, #tpu.memory_space<vmem>>, vector<104x128xf32>,
    return
  }
  func.func @transform_0(%arg0: i32) -> (i32, i32, i32) {
    %c0_i32 = arith.constant 0 : i32
    %c0_i32_0 = arith.constant 0 : i32
    %c0_i32_1 = arith.constant 0 : i32
    return %c0_i32, %arg0, %c0_i32_0 : i32, i32, i32
  }
  func.func @transform_1(%arg0: i32) -> (i32, i32) {
    %c0_i32 = arith.constant 0 : i32
    %c0_i32_0 = arith.constant 0 : i32
    return %arg0, %c0_i32 : i32, i32
  }
}

</mosaic_0001>

<llo_original>
// kernel: inception_b.6
$region0: #{inception_b.6}
  #allocation0 [shape = 'u32[]', space=smem, size = 0x4, offset = 0x4, fixed_abs, tag = 'smem constant byte address 0x4 - core index']
  #allocation1 [shape = 'u32[72,128]{1,0:T(1,128)}', space=vmem, size = 0x9000, scoped, tag = 'internal scratch']
  #allocation2 [shape = 'f32[512,128]{1,0:T(8,128)}', space=vmem, size = 0x40000, scoped, tag = 'scratch operand']
  %s0 = inlined_call_operand.vmem [shape: bf16[512,128], index: 0, kind: input, shape index: {}]
  %s1 = inlined_call_operand.vmem [shape: bf16[128,128], index: 1, kind: input, shape index: {}]
  %s2 = inlined_call_operand.vmem [shape: f32[1,128], index: 2, kind: input, shape index: {}]
  %s3 = inlined_call_operand.vmem [shape: f32[512,128], index: 3, kind: output, shape index: {}]
  %s4 = sld [smem:[#allocation0]]
  $region30: #{inception_b.6} parent=0
    _
  %s6 = ssub.s32 1, %s4
  %s7 = scalar_select 0, %s6, %s4
  // Predicated region
  $region2: #{inception_b.6} parent=0 // pred_check
    _
  $region3: #{inception_b.6} parent=0 // pred_check_branch
    %9 = sbr.rel (0) target = $region5
  $region4: #{inception_b.6} parent=0 // pred_region
    _
  $region5: #{inception_b.6} parent=0 // pred_fallthru
    _
  // Predicated region
  $region6: #{inception_b.6} parent=0 // pred_check
    _
  $region7: #{inception_b.6} parent=0 // pred_check_branch
    %11 = sbr.rel (0) target = $region9
  $region8: #{inception_b.6} parent=0 // pred_region
    _
  $region9: #{inception_b.6} parent=0 // pred_fallthru
    _
  // Predicated region
  $region10: #{inception_b.6} parent=0 // pred_check
    _
  $region11: #{inception_b.6} parent=0 // pred_check_branch
    %13 = sbr.rel (0) target = $region13
  $region12: #{inception_b.6} parent=0 // pred_region
    _
  $region13: #{inception_b.6} parent=0 // pred_fallthru
    _
  %p14 = scmp.eq.s32.totalorder 0, 0
  // Predicated region
  $region14: #{inception_b.6} parent=0 // pred_check
    %p15 = pneg %p14
  $region15: #{inception_b.6} parent=0 // pred_check_branch
    %17 = sbr.rel (%p15) target = $region17
  $region16: #{inception_b.6} parent=0 // pred_region
    %18 = vst [vmem:[#allocation2] sm:$0xff] 0.0
    %19 = vst [vmem:[#allocation2 + $0x8] sm:$0xff] 0.0
    %20 = vst [vmem:[#allocation2 + $0x10] sm:$0xff] 0.0
    %21 = vst [vmem:[#allocation2 + $0x18] sm:$0xff] 0.0
    %22 = vst [vmem:[#allocation2 + $0x20] sm:$0xff] 0.0
    %23 = vst [vmem:[#allocation2 + $0x28] sm:$0xff] 0.0
    %24 = vst [vmem:[#allocation2 + $0x30] sm:$0xff] 0.0
    %25 = vst [vmem:[#allocation2 + $0x38] sm:$0xff] 0.0
    %26 = vst [vmem:[#allocation2 + $0x40] sm:$0xff] 0.0
    %27 = vst [vmem:[#allocation2 + $0x48] sm:$0xff] 0.0
    %28 = vst [vmem:[#allocation2 + $0x50] sm:$0xff] 0.0
    %29 = vst [vmem:[#allocation2 + $0x58] sm:$0xff] 0.0
    %30 = vst [vmem:[#allocation2 + $0x60] sm:$0xff] 0.0
    %31 = vst [vmem:[#allocation2 + $0x68] sm:$0xff] 0.0
    %32 = vst [vmem:[#allocation2 + $0x70] sm:$0xff] 0.0
    %33 = vst [vmem:[#allocation2 + $0x78] sm:$0xff] 0.0
    %34 = vst [vmem:[#allocation2 + $0x80] sm:$0xff] 0.0
    %35 = vst [vmem:[#allocation2 + $0x88] sm:$0xff] 0.0
    %36 = vst [vmem:[#allocation2 + $0x90] sm:$0xff] 0.0
    %37 = vst [vmem:[#allocation2 + $0x98] sm:$0xff] 0.0
    %38 = vst [vmem:[#allocation2 + $0xa0] sm:$0xff] 0.0
    %39 = vst [vmem:[#allocation2 + $0xa8] sm:$0xff] 0.0
    %40 = vst [vmem:[#allocation2 + $0xb0] sm:$0xff] 0.0
    %41 = vst [vmem:[#allocation2 + $0xb8] sm:$0xff] 0.0
    %42 = vst [vmem:[#allocation2 + $0xc0] sm:$0xff] 0.0
    %43 = vst [vmem:[#allocation2 + $0xc8] sm:$0xff] 0.0
    %44 = vst [vmem:[#allocation2 + $0xd0] sm:$0xff] 0.0
    %45 = vst [vmem:[#allocation2 + $0xd8] sm:$0xff] 0.0
    %46 = vst [vmem:[#allocation2 + $0xe0] sm:$0xff] 0.0
    %47 = vst [vmem:[#allocation2 + $0xe8] sm:$0xff] 0.0
    %48 = vst [vmem:[#allocation2 + $0xf0] sm:$0xff] 0.0
    %49 = vst [vmem:[#allocation2 + $0xf8] sm:$0xff] 0.0
    %50 = vst [vmem:[#allocation2 + $0x100] sm:$0xff] 0.0
    %51 = vst [vmem:[#allocation2 + $0x108] sm:$0xff] 0.0
    %52 = vst [vmem:[#allocation2 + $0x110] sm:$0xff] 0.0
    %53 = vst [vmem:[#allocation2 + $0x118] sm:$0xff] 0.0
    %54 = vst [vmem:[#allocation2 + $0x120] sm:$0xff] 0.0
    %55 = vst [vmem:[#allocation2 + $0x128] sm:$0xff] 0.0
    %56 = vst [vmem:[#allocation2 + $0x130] sm:$0xff] 0.0
    %57 = vst [vmem:[#allocation2 + $0x138] sm:$0xff] 0.0
    %58 = vst [vmem:[#allocation2 + $0x140] sm:$0xff] 0.0
    %59 = vst [vmem:[#allocation2 + $0x148] sm:$0xff] 0.0
    %60 = vst [vmem:[#allocation2 + $0x150] sm:$0xff] 0.0
    %61 = vst [vmem:[#allocation2 + $0x158] sm:$0xff] 0.0
    %62 = vst [vmem:[#allocation2 + $0x160] sm:$0xff] 0.0
    %63 = vst [vmem:[#allocation2 + $0x168] sm:$0xff] 0.0
    %64 = vst [vmem:[#allocation2 + $0x170] sm:$0xff] 0.0
    %65 = vst [vmem:[#allocation2 + $0x178] sm:$0xff] 0.0
    %66 = vst [vmem:[#allocation2 + $0x180] sm:$0xff] 0.0
    %67 = vst [vmem:[#allocation2 + $0x188] sm:$0xff] 0.0
    %68 = vst [vmem:[#allocation2 + $0x190] sm:$0xff] 0.0
    %69 = vst [vmem:[#allocation2 + $0x198] sm:$0xff] 0.0
    %70 = vst [vmem:[#allocation2 + $0x1a0] sm:$0xff] 0.0
    %71 = vst [vmem:[#allocation2 + $0x1a8] sm:$0xff] 0.0
    %72 = vst [vmem:[#allocation2 + $0x1b0] sm:$0xff] 0.0
    %73 = vst [vmem:[#allocation2 + $0x1b8] sm:$0xff] 0.0
    %74 = vst [vmem:[#allocation2 + $0x1c0] sm:$0xff] 0.0
    %75 = vst [vmem:[#allocation2 + $0x1c8] sm:$0xff] 0.0
    %76 = vst [vmem:[#allocation2 + $0x1d0] sm:$0xff] 0.0
    %77 = vst [vmem:[#allocation2 + $0x1d8] sm:$0xff] 0.0
    %78 = vst [vmem:[#allocation2 + $0x1e0] sm:$0xff] 0.0
    %79 = vst [vmem:[#allocation2 + $0x1e8] sm:$0xff] 0.0
    %80 = vst [vmem:[#allocation2 + $0x1f0] sm:$0xff] 0.0
    %81 = vst [vmem:[#allocation2 + $0x1f8] sm:$0xff] 0.0
  $region17: #{inception_b.6} parent=0 // pred_fallthru
    _
  %v82 = vld [vmem:[#allocation2] sm:$0xff]
  %v83 = vld [vmem:[#allocation2 + $0x8] sm:$0xff]
  %v84 = vld [vmem:[#allocation2 + $0x10] sm:$0xff]
  %v85 = vld [vmem:[#allocation2 + $0x18] sm:$0xff]
  %v86 = vld [vmem:[#allocation2 + $0x20] sm:$0xff]
  %v87 = vld [vmem:[#allocation2 + $0x28] sm:$0xff]
  %v88 = vld [vmem:[#allocation2 + $0x30] sm:$0xff]
  %v89 = vld [vmem:[#allocation2 + $0x38] sm:$0xff]
  %v90 = vld [vmem:[#allocation2 + $0x40] sm:$0xff]
  %v91 = vld [vmem:[#allocation2 + $0x48] sm:$0xff]
  %v92 = vld [vmem:[#allocation2 + $0x50] sm:$0xff]
  %v93 = vld [vmem:[#allocation2 + $0x58] sm:$0xff]
  %v94 = vld [vmem:[#allocation2 + $0x60] sm:$0xff]
  %v95 = vld [vmem:[#allocation2 + $0x68] sm:$0xff]
  %v96 = vld [vmem:[#allocation2 + $0x70] sm:$0xff]
  %v97 = vld [vmem:[#allocation2 + $0x78] sm:$0xff]
  %v98 = vld [vmem:[#allocation2 + $0x80] sm:$0xff]
  %v99 = vld [vmem:[#allocation2 + $0x88] sm:$0xff]
  %v100 = vld [vmem:[#allocation2 + $0x90] sm:$0xff]
  %v101 = vld [vmem:[#allocation2 + $0x98] sm:$0xff]
  %v102 = vld [vmem:[#allocation2 + $0xa0] sm:$0xff]
  %v103 = vld [vmem:[#allocation2 + $0xa8] sm:$0xff]
  %v104 = vld [vmem:[#allocation2 + $0xb0] sm:$0xff]
  %v105 = vld [vmem:[#allocation2 + $0xb8] sm:$0xff]
  %v106 = vld [vmem:[#allocation2 + $0xc0] sm:$0xff]
  %v107 = vld [vmem:[#allocation2 + $0xc8] sm:$0xff]
  %v108 = vld [vmem:[#allocation2 + $0xd0] sm:$0xff]
  %v109 = vld [vmem:[#allocation2 + $0xd8] sm:$0xff]
  %v110 = vld [vmem:[#allocation2 + $0xe0] sm:$0xff]
  %v111 = vld [vmem:[#allocation2 + $0xe8] sm:$0xff]
  %v112 = vld [vmem:[#allocation2 + $0xf0] sm:$0xff]
  %v113 = vld [vmem:[#allocation2 + $0xf8] sm:$0xff]
  %v114 = vld [vmem:[#allocation2 + $0x100] sm:$0xff]
  %v115 = vld [vmem:[#allocation2 + $0x108] sm:$0xff]
  %v116 = vld [vmem:[#allocation2 + $0x110] sm:$0xff]
  %v117 = vld [vmem:[#allocation2 + $0x118] sm:$0xff]
  %v118 = vld [vmem:[#allocation2 + $0x120] sm:$0xff]
  %v119 = vld [vmem:[#allocation2 + $0x128] sm:$0xff]
  %v120 = vld [vmem:[#allocation2 + $0x130] sm:$0xff]
  %v121 = vld [vmem:[#allocation2 + $0x138] sm:$0xff]
  %v122 = vld [vmem:[#allocation2 + $0x140] sm:$0xff]
  %v123 = vld [vmem:[#allocation2 + $0x148] sm:$0xff]
  %v124 = vld [vmem:[#allocation2 + $0x150] sm:$0xff]
  %v125 = vld [vmem:[#allocation2 + $0x158] sm:$0xff]
  %v126 = vld [vmem:[#allocation2 + $0x160] sm:$0xff]
  %v127 = vld [vmem:[#allocation2 + $0x168] sm:$0xff]
  %v128 = vld [vmem:[#allocation2 + $0x170] sm:$0xff]
  %v129 = vld [vmem:[#allocation2 + $0x178] sm:$0xff]
  %v130 = vld [vmem:[#allocation2 + $0x180] sm:$0xff]
  %v131 = vld [vmem:[#allocation2 + $0x188] sm:$0xff]
  %v132 = vld [vmem:[#allocation2 + $0x190] sm:$0xff]
  %v133 = vld [vmem:[#allocation2 + $0x198] sm:$0xff]
  %v134 = vld [vmem:[#allocation2 + $0x1a0] sm:$0xff]
  %v135 = vld [vmem:[#allocation2 + $0x1a8] sm:$0xff]
  %v136 = vld [vmem:[#allocation2 + $0x1b0] sm:$0xff]
  %v137 = vld [vmem:[#allocation2 + $0x1b8] sm:$0xff]
  %v138 = vld [vmem:[#allocation2 + $0x1c0] sm:$0xff]
  %v139 = vld [vmem:[#allocation2 + $0x1c8] sm:$0xff]
  %v140 = vld [vmem:[#allocation2 + $0x1d0] sm:$0xff]
  %v141 = vld [vmem:[#allocation2 + $0x1d8] sm:$0xff]
  %v142 = vld [vmem:[#allocation2 + $0x1e0] sm:$0xff]
  %v143 = vld [vmem:[#allocation2 + $0x1e8] sm:$0xff]
  %v144 = vld [vmem:[#allocation2 + $0x1f0] sm:$0xff]
  %v145 = vld [vmem:[#allocation2 + $0x1f8] sm:$0xff]
  %v146 = vld [vmem:[%s0] sm:$0xf]
  %v147 = vld [vmem:[%s0 + $0x4] sm:$0xf]
  %v148 = vld [vmem:[%s0 + $0x8] sm:$0xf]
  %v149 = vld [vmem:[%s0 + $0xc] sm:$0xf]
  %v150 = vld [vmem:[%s0 + $0x10] sm:$0xf]
  %v151 = vld [vmem:[%s0 + $0x14] sm:$0xf]
  %v152 = vld [vmem:[%s0 + $0x18] sm:$0xf]
  %v153 = vld [vmem:[%s0 + $0x1c] sm:$0xf]
  %v154 = vld [vmem:[%s0 + $0x20] sm:$0xf]
  %v155 = vld [vmem:[%s0 + $0x24] sm:$0xf]
  %v156 = vld [vmem:[%s0 + $0x28] sm:$0xf]
  %v157 = vld [vmem:[%s0 + $0x2c] sm:$0xf]
  %v158 = vld [vmem:[%s0 + $0x30] sm:$0xf]
  %v159 = vld [vmem:[%s0 + $0x34] sm:$0xf]
  %v160 = vld [vmem:[%s0 + $0x38] sm:$0xf]
  %v161 = vld [vmem:[%s0 + $0x3c] sm:$0xf]
  %v162 = vld [vmem:[%s0 + $0x40] sm:$0xf]
  %v163 = vld [vmem:[%s0 + $0x44] sm:$0xf]
  %v164 = vld [vmem:[%s0 + $0x48] sm:$0xf]
  %v165 = vld [vmem:[%s0 + $0x4c] sm:$0xf]
  %v166 = vld [vmem:[%s0 + $0x50] sm:$0xf]
  %v167 = vld [vmem:[%s0 + $0x54] sm:$0xf]
  %v168 = vld [vmem:[%s0 + $0x58] sm:$0xf]
  %v169 = vld [vmem:[%s0 + $0x5c] sm:$0xf]
  %v170 = vld [vmem:[%s0 + $0x60] sm:$0xf]
  %v171 = vld [vmem:[%s0 + $0x64] sm:$0xf]
  %v172 = vld [vmem:[%s0 + $0x68] sm:$0xf]
  %v173 = vld [vmem:[%s0 + $0x6c] sm:$0xf]
  %v174 = vld [vmem:[%s0 + $0x70] sm:$0xf]
  %v175 = vld [vmem:[%s0 + $0x74] sm:$0xf]
  %v176 = vld [vmem:[%s0 + $0x78] sm:$0xf]
  %v177 = vld [vmem:[%s0 + $0x7c] sm:$0xf]
  %v178 = vld [vmem:[%s0 + $0x80] sm:$0xf]
  %v179 = vld [vmem:[%s0 + $0x84] sm:$0xf]
  %v180 = vld [vmem:[%s0 + $0x88] sm:$0xf]
  %v181 = vld [vmem:[%s0 + $0x8c] sm:$0xf]
  %v182 = vld [vmem:[%s0 + $0x90] sm:$0xf]
  %v183 = vld [vmem:[%s0 + $0x94] sm:$0xf]
  %v184 = vld [vmem:[%s0 + $0x98] sm:$0xf]
  %v185 = vld [vmem:[%s0 + $0x9c] sm:$0xf]
  %v186 = vld [vmem:[%s0 + $0xa0] sm:$0xf]
  %v187 = vld [vmem:[%s0 + $0xa4] sm:$0xf]
  %v188 = vld [vmem:[%s0 + $0xa8] sm:$0xf]
  %v189 = vld [vmem:[%s0 + $0xac] sm:$0xf]
  %v190 = vld [vmem:[%s0 + $0xb0] sm:$0xf]
  %v191 = vld [vmem:[%s0 + $0xb4] sm:$0xf]
  %v192 = vld [vmem:[%s0 + $0xb8] sm:$0xf]
  %v193 = vld [vmem:[%s0 + $0xbc] sm:$0xf]
  %v194 = vld [vmem:[%s0 + $0xc0] sm:$0xf]
  %v195 = vld [vmem:[%s0 + $0xc4] sm:$0xf]
  %v196 = vld [vmem:[%s0 + $0xc8] sm:$0xf]
  %v197 = vld [vmem:[%s0 + $0xcc] sm:$0xf]
  %v198 = vld [vmem:[%s0 + $0xd0] sm:$0xf]
  %v199 = vld [vmem:[%s0 + $0xd4] sm:$0xf]
  %v200 = vld [vmem:[%s0 + $0xd8] sm:$0xf]
  %v201 = vld [vmem:[%s0 + $0xdc] sm:$0xf]
  %v202 = vld [vmem:[%s0 + $0xe0] sm:$0xf]
  %v203 = vld [vmem:[%s0 + $0xe4] sm:$0xf]
  %v204 = vld [vmem:[%s0 + $0xe8] sm:$0xf]
  %v205 = vld [vmem:[%s0 + $0xec] sm:$0xf]
  %v206 = vld [vmem:[%s0 + $0xf0] sm:$0xf]
  %v207 = vld [vmem:[%s0 + $0xf4] sm:$0xf]
  %v208 = vld [vmem:[%s0 + $0xf8] sm:$0xf]
  %v209 = vld [vmem:[%s0 + $0xfc] sm:$0xf]
  %v210 = vld [vmem:[%s1] sm:$0xf]
  %v211 = vld [vmem:[%s1 + $0x4] sm:$0xf]
  %v212 = vld [vmem:[%s1 + $0x8] sm:$0xf]
  %v213 = vld [vmem:[%s1 + $0xc] sm:$0xf]
  %v214 = vld [vmem:[%s1 + $0x10] sm:$0xf]
  %v215 = vld [vmem:[%s1 + $0x14] sm:$0xf]
  %v216 = vld [vmem:[%s1 + $0x18] sm:$0xf]
  %v217 = vld [vmem:[%s1 + $0x1c] sm:$0xf]
  %v218 = vld [vmem:[%s1 + $0x20] sm:$0xf]
  %v219 = vld [vmem:[%s1 + $0x24] sm:$0xf]
  %v220 = vld [vmem:[%s1 + $0x28] sm:$0xf]
  %v221 = vld [vmem:[%s1 + $0x2c] sm:$0xf]
  %v222 = vld [vmem:[%s1 + $0x30] sm:$0xf]
  %v223 = vld [vmem:[%s1 + $0x34] sm:$0xf]
  %v224 = vld [vmem:[%s1 + $0x38] sm:$0xf]
  %v225 = vld [vmem:[%s1 + $0x3c] sm:$0xf]
  %v290 = vunpack.c.l.b16 %v146
  %v291 = vunpack.c.l.b16 %v147
  %v292 = vunpack.c.l.b16 %v148
  %v293 = vunpack.c.l.b16 %v149
  %v294 = vunpack.c.l.b16 %v150
  %v295 = vunpack.c.l.b16 %v151
  %v296 = vunpack.c.l.b16 %v152
  %v297 = vunpack.c.l.b16 %v153
  %v298 = vunpack.c.l.b16 %v154
  %v299 = vunpack.c.l.b16 %v155
  %v300 = vunpack.c.l.b16 %v156
  %v301 = vunpack.c.l.b16 %v157
  %v302 = vunpack.c.l.b16 %v158
  %v303 = vunpack.c.l.b16 %v159
  %v304 = vunpack.c.l.b16 %v160
  %v305 = vunpack.c.l.b16 %v161
  %v306 = vunpack.c.l.b16 %v162
  %v307 = vunpack.c.l.b16 %v163
  %v308 = vunpack.c.l.b16 %v164
  %v309 = vunpack.c.l.b16 %v165
  %v310 = vunpack.c.l.b16 %v166
  %v311 = vunpack.c.l.b16 %v167
  %v312 = vunpack.c.l.b16 %v168
  %v313 = vunpack.c.l.b16 %v169
  %v314 = vunpack.c.l.b16 %v170
  %v315 = vunpack.c.l.b16 %v171
  %v316 = vunpack.c.l.b16 %v172
  %v317 = vunpack.c.l.b16 %v173
  %v318 = vunpack.c.l.b16 %v174
  %v319 = vunpack.c.l.b16 %v175
  %v320 = vunpack.c.l.b16 %v176
  %v321 = vunpack.c.l.b16 %v177
  %v322 = vunpack.c.l.b16 %v178
  %v323 = vunpack.c.l.b16 %v179
  %v324 = vunpack.c.l.b16 %v180
  %v325 = vunpack.c.l.b16 %v181
  %v326 = vunpack.c.l.b16 %v182
  %v327 = vunpack.c.l.b16 %v183
  %v328 = vunpack.c.l.b16 %v184
  %v329 = vunpack.c.l.b16 %v185
  %v330 = vunpack.c.l.b16 %v186
  %v331 = vunpack.c.l.b16 %v187
  %v332 = vunpack.c.l.b16 %v188
  %v333 = vunpack.c.l.b16 %v189
  %v334 = vunpack.c.l.b16 %v190
  %v335 = vunpack.c.l.b16 %v191
  %v336 = vunpack.c.l.b16 %v192
  %v337 = vunpack.c.l.b16 %v193
  %v338 = vunpack.c.l.b16 %v194
  %v339 = vunpack.c.l.b16 %v195
  %v340 = vunpack.c.l.b16 %v196
  %v341 = vunpack.c.l.b16 %v197
  %v342 = vunpack.c.l.b16 %v198
  %v343 = vunpack.c.l.b16 %v199
  %v344 = vunpack.c.l.b16 %v200
  %v345 = vunpack.c.l.b16 %v201
  %v346 = vunpack.c.l.b16 %v202
  %v347 = vunpack.c.l.b16 %v203
  %v348 = vunpack.c.l.b16 %v204
  %v349 = vunpack.c.l.b16 %v205
  %v350 = vunpack.c.l.b16 %v206
  %v351 = vunpack.c.l.b16 %v207
  %v352 = vunpack.c.l.b16 %v208
  %v353 = vunpack.c.l.b16 %v209
  %v354 = vpack.c.b16 %v291, %v290
  %v355 = vpack.c.b16 %v293, %v292
  %v356 = vpack.c.b16 %v295, %v294
  %v357 = vpack.c.b16 %v297, %v296
  %v358 = vpack.c.b16 %v299, %v298
  %v359 = vpack.c.b16 %v301, %v300
  %v360 = vpack.c.b16 %v303, %v302
  %v361 = vpack.c.b16 %v305, %v304
  %v362 = vpack.c.b16 %v307, %v306
  %v363 = vpack.c.b16 %v309, %v308
  %v364 = vpack.c.b16 %v311, %v310
  %v365 = vpack.c.b16 %v313, %v312
  %v366 = vpack.c.b16 %v315, %v314
  %v367 = vpack.c.b16 %v317, %v316
  %v368 = vpack.c.b16 %v319, %v318
  %v369 = vpack.c.b16 %v321, %v320
  %v370 = vpack.c.b16 %v323, %v322
  %v371 = vpack.c.b16 %v325, %v324
  %v372 = vpack.c.b16 %v327, %v326
  %v373 = vpack.c.b16 %v329, %v328
  %v374 = vpack.c.b16 %v331, %v330
  %v375 = vpack.c.b16 %v333, %v332
  %v376 = vpack.c.b16 %v335, %v334
  %v377 = vpack.c.b16 %v337, %v336
  %v378 = vpack.c.b16 %v339, %v338
  %v379 = vpack.c.b16 %v341, %v340
  %v380 = vpack.c.b16 %v343, %v342
  %v381 = vpack.c.b16 %v345, %v344
  %v382 = vpack.c.b16 %v347, %v346
  %v383 = vpack.c.b16 %v349, %v348
  %v384 = vpack.c.b16 %v351, %v350
  %v385 = vpack.c.b16 %v353, %v352
  %v434 = vunpack.c.l.b16 %v210
  %v435 = vunpack.c.l.b16 %v211
  %v436 = vunpack.c.l.b16 %v212
  %v437 = vunpack.c.l.b16 %v213
  %v438 = vunpack.c.l.b16 %v214
  %v439 = vunpack.c.l.b16 %v215
  %v440 = vunpack.c.l.b16 %v216
  %v441 = vunpack.c.l.b16 %v217
  %v442 = vunpack.c.l.b16 %v218
  %v443 = vunpack.c.l.b16 %v219
  %v444 = vunpack.c.l.b16 %v220
  %v445 = vunpack.c.l.b16 %v221
  %v446 = vunpack.c.l.b16 %v222
  %v447 = vunpack.c.l.b16 %v223
  %v448 = vunpack.c.l.b16 %v224
  %v449 = vunpack.c.l.b16 %v225
  %v450 = vpack.c.b16 %v435, %v434
  %v451 = vpack.c.b16 %v437, %v436
  %v452 = vpack.c.b16 %v439, %v438
  %v453 = vpack.c.b16 %v441, %v440
  %v454 = vpack.c.b16 %v443, %v442
  %v455 = vpack.c.b16 %v445, %v444
  %v456 = vpack.c.b16 %v447, %v446
  %v457 = vpack.c.b16 %v449, %v448
  %466 = vmatpush.bf16.msra.mxu0 %v457
  %467 = vmatpush.bf16.msra.mxu0 %v456
  %468 = vmatpush.bf16.msra.mxu0 %v455
  %469 = vmatpush.bf16.msra.mxu0 %v454
  %470 = vmatpush.bf16.msra.mxu0 %v453
  %471 = vmatpush.bf16.msra.mxu0 %v452
  %472 = vmatpush.bf16.msra.mxu0 %v451
  %473 = vmatpush.bf16.msra.mxu0 %v450
  %474 = vmatmul.bf16.gmra.mxu0 %v354
  %v475 = vpop.f32.mrf.mxu0
  %v476 = vadd.f32 0.0, %v475
  %v477 = vpop.f32.mrf.mxu0
  %v478 = vadd.f32 0.0, %v477
  %479 = vmatmul.bf16.gmra.mxu0 %v355
  %v480 = vpop.f32.mrf.mxu0
  %v481 = vadd.f32 0.0, %v480
  %v482 = vpop.f32.mrf.mxu0
  %v483 = vadd.f32 0.0, %v482
  %484 = vmatmul.bf16.gmra.mxu0 %v356
  %v485 = vpop.f32.mrf.mxu0
  %v486 = vadd.f32 0.0, %v485
  %v487 = vpop.f32.mrf.mxu0
  %v488 = vadd.f32 0.0, %v487
  %489 = vmatmul.bf16.gmra.mxu0 %v357
  %v490 = vpop.f32.mrf.mxu0
  %v491 = vadd.f32 0.0, %v490
  %v492 = vpop.f32.mrf.mxu0
  %v493 = vadd.f32 0.0, %v492
  %494 = vmatmul.bf16.gmra.mxu0 %v358
  %v495 = vpop.f32.mrf.mxu0
  %v496 = vadd.f32 0.0, %v495
  %v497 = vpop.f32.mrf.mxu0
  %v498 = vadd.f32 0.0, %v497
  %499 = vmatmul.bf16.gmra.mxu0 %v359
  %v500 = vpop.f32.mrf.mxu0
  %v501 = vadd.f32 0.0, %v500
  %v502 = vpop.f32.mrf.mxu0
  %v503 = vadd.f32 0.0, %v502
  %504 = vmatmul.bf16.gmra.mxu0 %v360
  %v505 = vpop.f32.mrf.mxu0
  %v506 = vadd.f32 0.0, %v505
  %v507 = vpop.f32.mrf.mxu0
  %v508 = vadd.f32 0.0, %v507
  %509 = vmatmul.bf16.gmra.mxu0 %v361
  %v510 = vpop.f32.mrf.mxu0
  %v511 = vadd.f32 0.0, %v510
  %v512 = vpop.f32.mrf.mxu0
  %v513 = vadd.f32 0.0, %v512
  %514 = vmatmul.bf16.gmra.mxu0 %v362
  %v515 = vpop.f32.mrf.mxu0
  %v516 = vadd.f32 0.0, %v515
  %v517 = vpop.f32.mrf.mxu0
  %v518 = vadd.f32 0.0, %v517
  %519 = vmatmul.bf16.gmra.mxu0 %v363
  %v520 = vpop.f32.mrf.mxu0
  %v521 = vadd.f32 0.0, %v520
  %v522 = vpop.f32.mrf.mxu0
  %v523 = vadd.f32 0.0, %v522
  %524 = vmatmul.bf16.gmra.mxu0 %v364
  %v525 = vpop.f32.mrf.mxu0
  %v526 = vadd.f32 0.0, %v525
  %v527 = vpop.f32.mrf.mxu0
  %v528 = vadd.f32 0.0, %v527
  %529 = vmatmul.bf16.gmra.mxu0 %v365
  %v530 = vpop.f32.mrf.mxu0
  %v531 = vadd.f32 0.0, %v530
  %v532 = vpop.f32.mrf.mxu0
  %v533 = vadd.f32 0.0, %v532
  %534 = vmatmul.bf16.gmra.mxu0 %v366
  %v535 = vpop.f32.mrf.mxu0
  %v536 = vadd.f32 0.0, %v535
  %v537 = vpop.f32.mrf.mxu0
  %v538 = vadd.f32 0.0, %v537
  %539 = vmatmul.bf16.gmra.mxu0 %v367
  %v540 = vpop.f32.mrf.mxu0
  %v541 = vadd.f32 0.0, %v540
  %v542 = vpop.f32.mrf.mxu0
  %v543 = vadd.f32 0.0, %v542
  %544 = vmatmul.bf16.gmra.mxu0 %v368
  %v545 = vpop.f32.mrf.mxu0
  %v546 = vadd.f32 0.0, %v545
  %v547 = vpop.f32.mrf.mxu0
  %v548 = vadd.f32 0.0, %v547
  %549 = vmatmul.bf16.gmra.mxu0 %v369
  %v550 = vpop.f32.mrf.mxu0
  %v551 = vadd.f32 0.0, %v550
  %v552 = vpop.f32.mrf.mxu0
  %v553 = vadd.f32 0.0, %v552
  %554 = vmatmul.bf16.gmra.mxu0 %v370
  %v555 = vpop.f32.mrf.mxu0
  %v556 = vadd.f32 0.0, %v555
  %v557 = vpop.f32.mrf.mxu0
  %v558 = vadd.f32 0.0, %v557
  %559 = vmatmul.bf16.gmra.mxu0 %v371
  %v560 = vpop.f32.mrf.mxu0
  %v561 = vadd.f32 0.0, %v560
  %v562 = vpop.f32.mrf.mxu0
  %v563 = vadd.f32 0.0, %v562
  %564 = vmatmul.bf16.gmra.mxu0 %v372
  %v565 = vpop.f32.mrf.mxu0
  %v566 = vadd.f32 0.0, %v565
  %v567 = vpop.f32.mrf.mxu0
  %v568 = vadd.f32 0.0, %v567
  %569 = vmatmul.bf16.gmra.mxu0 %v373
  %v570 = vpop.f32.mrf.mxu0
  %v571 = vadd.f32 0.0, %v570
  %v572 = vpop.f32.mrf.mxu0
  %v573 = vadd.f32 0.0, %v572
  %574 = vmatmul.bf16.gmra.mxu0 %v374
  %v575 = vpop.f32.mrf.mxu0
  %v576 = vadd.f32 0.0, %v575
  %v577 = vpop.f32.mrf.mxu0
  %v578 = vadd.f32 0.0, %v577
  %579 = vmatmul.bf16.gmra.mxu0 %v375
  %v580 = vpop.f32.mrf.mxu0
  %v581 = vadd.f32 0.0, %v580
  %v582 = vpop.f32.mrf.mxu0
  %v583 = vadd.f32 0.0, %v582
  %584 = vmatmul.bf16.gmra.mxu0 %v376
  %v585 = vpop.f32.mrf.mxu0
  %v586 = vadd.f32 0.0, %v585
  %v587 = vpop.f32.mrf.mxu0
  %v588 = vadd.f32 0.0, %v587
  %589 = vmatmul.bf16.gmra.mxu0 %v377
  %v590 = vpop.f32.mrf.mxu0
  %v591 = vadd.f32 0.0, %v590
  %v592 = vpop.f32.mrf.mxu0
  %v593 = vadd.f32 0.0, %v592
  %594 = vmatmul.bf16.gmra.mxu0 %v378
  %v595 = vpop.f32.mrf.mxu0
  %v596 = vadd.f32 0.0, %v595
  %v597 = vpop.f32.mrf.mxu0
  %v598 = vadd.f32 0.0, %v597
  %599 = vmatmul.bf16.gmra.mxu0 %v379
  %v600 = vpop.f32.mrf.mxu0
  %v601 = vadd.f32 0.0, %v600
  %v602 = vpop.f32.mrf.mxu0
  %v603 = vadd.f32 0.0, %v602
  %604 = vmatmul.bf16.gmra.mxu0 %v380
  %v605 = vpop.f32.mrf.mxu0
  %v606 = vadd.f32 0.0, %v605
  %v607 = vpop.f32.mrf.mxu0
  %v608 = vadd.f32 0.0, %v607
  %609 = vmatmul.bf16.gmra.mxu0 %v381
  %v610 = vpop.f32.mrf.mxu0
  %v611 = vadd.f32 0.0, %v610
  %v612 = vpop.f32.mrf.mxu0
  %v613 = vadd.f32 0.0, %v612
  %614 = vmatmul.bf16.gmra.mxu0 %v382
  %v615 = vpop.f32.mrf.mxu0
  %v616 = vadd.f32 0.0, %v615
  %v617 = vpop.f32.mrf.mxu0
  %v618 = vadd.f32 0.0, %v617
  %619 = vmatmul.bf16.gmra.mxu0 %v383
  %v620 = vpop.f32.mrf.mxu0
  %v621 = vadd.f32 0.0, %v620
  %v622 = vpop.f32.mrf.mxu0
  %v623 = vadd.f32 0.0, %v622
  %624 = vmatmul.bf16.gmra.mxu0 %v384
  %v625 = vpop.f32.mrf.mxu0
  %v626 = vadd.f32 0.0, %v625
  %v627 = vpop.f32.mrf.mxu0
  %v628 = vadd.f32 0.0, %v627
  %629 = vmatmul.bf16.gmra.mxu0 %v385
  %v630 = vpop.f32.mrf.mxu0
  %v631 = vadd.f32 0.0, %v630
  %v632 = vpop.f32.mrf.mxu0
  %v633 = vadd.f32 0.0, %v632
  %634 = vdwg.mxu0
  %v635 = vadd.f32 %v82, %v476
  %v636 = vadd.f32 %v83, %v478
  %v637 = vadd.f32 %v84, %v481
  %v638 = vadd.f32 %v85, %v483
  %v639 = vadd.f32 %v86, %v486
  %v640 = vadd.f32 %v87, %v488
  %v641 = vadd.f32 %v88, %v491
  %v642 = vadd.f32 %v89, %v493
  %v643 = vadd.f32 %v90, %v496
  %v644 = vadd.f32 %v91, %v498
  %v645 = vadd.f32 %v92, %v501
  %v646 = vadd.f32 %v93, %v503
  %v647 = vadd.f32 %v94, %v506
  %v648 = vadd.f32 %v95, %v508
  %v649 = vadd.f32 %v96, %v511
  %v650 = vadd.f32 %v97, %v513
  %v651 = vadd.f32 %v98, %v516
  %v652 = vadd.f32 %v99, %v518
  %v653 = vadd.f32 %v100, %v521
  %v654 = vadd.f32 %v101, %v523
  %v655 = vadd.f32 %v102, %v526
  %v656 = vadd.f32 %v103, %v528
  %v657 = vadd.f32 %v104, %v531
  %v658 = vadd.f32 %v105, %v533
  %v659 = vadd.f32 %v106, %v536
  %v660 = vadd.f32 %v107, %v538
  %v661 = vadd.f32 %v108, %v541
  %v662 = vadd.f32 %v109, %v543
  %v663 = vadd.f32 %v110, %v546
  %v664 = vadd.f32 %v111, %v548
  %v665 = vadd.f32 %v112, %v551
  %v666 = vadd.f32 %v113, %v553
  %v667 = vadd.f32 %v114, %v556
  %v668 = vadd.f32 %v115, %v558
  %v669 = vadd.f32 %v116, %v561
  %v670 = vadd.f32 %v117, %v563
  %v671 = vadd.f32 %v118, %v566
  %v672 = vadd.f32 %v119, %v568
  %v673 = vadd.f32 %v120, %v571
  %v674 = vadd.f32 %v121, %v573
  %v675 = vadd.f32 %v122, %v576
  %v676 = vadd.f32 %v123, %v578
  %v677 = vadd.f32 %v124, %v581
  %v678 = vadd.f32 %v125, %v583
  %v679 = vadd.f32 %v126, %v586
  %v680 = vadd.f32 %v127, %v588
  %v681 = vadd.f32 %v128, %v591
  %v682 = vadd.f32 %v129, %v593
  %v683 = vadd.f32 %v130, %v596
  %v684 = vadd.f32 %v131, %v598
  %v685 = vadd.f32 %v132, %v601
  %v686 = vadd.f32 %v133, %v603
  %v687 = vadd.f32 %v134, %v606
  %v688 = vadd.f32 %v135, %v608
  %v689 = vadd.f32 %v136, %v611
  %v690 = vadd.f32 %v137, %v613
  %v691 = vadd.f32 %v138, %v616
  %v692 = vadd.f32 %v139, %v618
  %v693 = vadd.f32 %v140, %v621
  %v694 = vadd.f32 %v141, %v623
  %v695 = vadd.f32 %v142, %v626
  %v696 = vadd.f32 %v143, %v628
  %v697 = vadd.f32 %v144, %v631
  %v698 = vadd.f32 %v145, %v633
  %699 = vst [vmem:[#allocation2] sm:$0xff] %v635
  %700 = vst [vmem:[#allocation2 + $0x8] sm:$0xff] %v636
  %701 = vst [vmem:[#allocation2 + $0x10] sm:$0xff] %v637
  %702 = vst [vmem:[#allocation2 + $0x18] sm:$0xff] %v638
  %703 = vst [vmem:[#allocation2 + $0x20] sm:$0xff] %v639
  %704 = vst [vmem:[#allocation2 + $0x28] sm:$0xff] %v640
  %705 = vst [vmem:[#allocation2 + $0x30] sm:$0xff] %v641
  %706 = vst [vmem:[#allocation2 + $0x38] sm:$0xff] %v642
  %707 = vst [vmem:[#allocation2 + $0x40] sm:$0xff] %v643
  %708 = vst [vmem:[#allocation2 + $0x48] sm:$0xff] %v644
  %709 = vst [vmem:[#allocation2 + $0x50] sm:$0xff] %v645
  %710 = vst [vmem:[#allocation2 + $0x58] sm:$0xff] %v646
  %711 = vst [vmem:[#allocation2 + $0x60] sm:$0xff] %v647
  %712 = vst [vmem:[#allocation2 + $0x68] sm:$0xff] %v648
  %713 = vst [vmem:[#allocation2 + $0x70] sm:$0xff] %v649
  %714 = vst [vmem:[#allocation2 + $0x78] sm:$0xff] %v650
  %715 = vst [vmem:[#allocation2 + $0x80] sm:$0xff] %v651
  %716 = vst [vmem:[#allocation2 + $0x88] sm:$0xff] %v652
  %717 = vst [vmem:[#allocation2 + $0x90] sm:$0xff] %v653
  %718 = vst [vmem:[#allocation2 + $0x98] sm:$0xff] %v654
  %719 = vst [vmem:[#allocation2 + $0xa0] sm:$0xff] %v655
  %720 = vst [vmem:[#allocation2 + $0xa8] sm:$0xff] %v656
  %721 = vst [vmem:[#allocation2 + $0xb0] sm:$0xff] %v657
  %722 = vst [vmem:[#allocation2 + $0xb8] sm:$0xff] %v658
  %723 = vst [vmem:[#allocation2 + $0xc0] sm:$0xff] %v659
  %724 = vst [vmem:[#allocation2 + $0xc8] sm:$0xff] %v660
  %725 = vst [vmem:[#allocation2 + $0xd0] sm:$0xff] %v661
  %726 = vst [vmem:[#allocation2 + $0xd8] sm:$0xff] %v662
  %727 = vst [vmem:[#allocation2 + $0xe0] sm:$0xff] %v663
  %728 = vst [vmem:[#allocation2 + $0xe8] sm:$0xff] %v664
  %729 = vst [vmem:[#allocation2 + $0xf0] sm:$0xff] %v665
  %730 = vst [vmem:[#allocation2 + $0xf8] sm:$0xff] %v666
  %731 = vst [vmem:[#allocation2 + $0x100] sm:$0xff] %v667
  %732 = vst [vmem:[#allocation2 + $0x108] sm:$0xff] %v668
  %733 = vst [vmem:[#allocation2 + $0x110] sm:$0xff] %v669
  %734 = vst [vmem:[#allocation2 + $0x118] sm:$0xff] %v670
  %735 = vst [vmem:[#allocation2 + $0x120] sm:$0xff] %v671
  %736 = vst [vmem:[#allocation2 + $0x128] sm:$0xff] %v672
  %737 = vst [vmem:[#allocation2 + $0x130] sm:$0xff] %v673
  %738 = vst [vmem:[#allocation2 + $0x138] sm:$0xff] %v674
  %739 = vst [vmem:[#allocation2 + $0x140] sm:$0xff] %v675
  %740 = vst [vmem:[#allocation2 + $0x148] sm:$0xff] %v676
  %741 = vst [vmem:[#allocation2 + $0x150] sm:$0xff] %v677
  %742 = vst [vmem:[#allocation2 + $0x158] sm:$0xff] %v678
  %743 = vst [vmem:[#allocation2 + $0x160] sm:$0xff] %v679
  %744 = vst [vmem:[#allocation2 + $0x168] sm:$0xff] %v680
  %745 = vst [vmem:[#allocation2 + $0x170] sm:$0xff] %v681
  %746 = vst [vmem:[#allocation2 + $0x178] sm:$0xff] %v682
  %747 = vst [vmem:[#allocation2 + $0x180] sm:$0xff] %v683
  %748 = vst [vmem:[#allocation2 + $0x188] sm:$0xff] %v684
  %749 = vst [vmem:[#allocation2 + $0x190] sm:$0xff] %v685
  %750 = vst [vmem:[#allocation2 + $0x198] sm:$0xff] %v686
  %751 = vst [vmem:[#allocation2 + $0x1a0] sm:$0xff] %v687
  %752 = vst [vmem:[#allocation2 + $0x1a8] sm:$0xff] %v688
  %753 = vst [vmem:[#allocation2 + $0x1b0] sm:$0xff] %v689
  %754 = vst [vmem:[#allocation2 + $0x1b8] sm:$0xff] %v690
  %755 = vst [vmem:[#allocation2 + $0x1c0] sm:$0xff] %v691
  %756 = vst [vmem:[#allocation2 + $0x1c8] sm:$0xff] %v692
  %757 = vst [vmem:[#allocation2 + $0x1d0] sm:$0xff] %v693
  %758 = vst [vmem:[#allocation2 + $0x1d8] sm:$0xff] %v694
  %759 = vst [vmem:[#allocation2 + $0x1e0] sm:$0xff] %v695
  %760 = vst [vmem:[#allocation2 + $0x1e8] sm:$0xff] %v696
  %761 = vst [vmem:[#allocation2 + $0x1f0] sm:$0xff] %v697
  %762 = vst [vmem:[#allocation2 + $0x1f8] sm:$0xff] %v698
  // Predicated region
  $region18: #{inception_b.6} parent=0 // pred_check
    %p763 = pneg %p14
  $region19: #{inception_b.6} parent=0 // pred_check_branch
    %765 = sbr.rel (%p763) target = $region21
  $region20: #{inception_b.6} parent=0 // pred_region
    %v766 = vld [vmem:[#allocation2] sm:$0xff]
    %v767 = vld [vmem:[#allocation2 + $0x8] sm:$0xff]
    %v768 = vld [vmem:[#allocation2 + $0x10] sm:$0xff]
    %v769 = vld [vmem:[#allocation2 + $0x18] sm:$0xff]
    %v770 = vld [vmem:[#allocation2 + $0x20] sm:$0xff]
    %v771 = vld [vmem:[#allocation2 + $0x28] sm:$0xff]
    %v772 = vld [vmem:[#allocation2 + $0x30] sm:$0xff]
    %v773 = vld [vmem:[#allocation2 + $0x38] sm:$0xff]
    %v774 = vld [vmem:[#allocation2 + $0x40] sm:$0xff]
    %v775 = vld [vmem:[#allocation2 + $0x48] sm:$0xff]
    %v776 = vld [vmem:[#allocation2 + $0x50] sm:$0xff]
    %v777 = vld [vmem:[#allocation2 + $0x58] sm:$0xff]
    %v778 = vld [vmem:[#allocation2 + $0x60] sm:$0xff]
    %v779 = vld [vmem:[#allocation2 + $0x68] sm:$0xff]
    %v780 = vld [vmem:[#allocation2 + $0x70] sm:$0xff]
    %v781 = vld [vmem:[#allocation2 + $0x78] sm:$0xff]
    %v782 = vld [vmem:[#allocation2 + $0x80] sm:$0xff]
    %v783 = vld [vmem:[#allocation2 + $0x88] sm:$0xff]
    %v784 = vld [vmem:[#allocation2 + $0x90] sm:$0xff]
    %v785 = vld [vmem:[#allocation2 + $0x98] sm:$0xff]
    %v786 = vld [vmem:[#allocation2 + $0xa0] sm:$0xff]
    %v787 = vld [vmem:[#allocation2 + $0xa8] sm:$0xff]
    %v788 = vld [vmem:[#allocation2 + $0xb0] sm:$0xff]
    %v789 = vld [vmem:[#allocation2 + $0xb8] sm:$0xff]
    %v790 = vld [vmem:[#allocation2 + $0xc0] sm:$0xff]
    %v791 = vld [vmem:[#allocation2 + $0xc8] sm:$0xff]
    %v792 = vld [vmem:[#allocation2 + $0xd0] sm:$0xff]
    %v793 = vld [vmem:[#allocation2 + $0xd8] sm:$0xff]
    %v794 = vld [vmem:[#allocation2 + $0xe0] sm:$0xff]
    %v795 = vld [vmem:[#allocation2 + $0xe8] sm:$0xff]
    %v796 = vld [vmem:[#allocation2 + $0xf0] sm:$0xff]
    %v797 = vld [vmem:[#allocation2 + $0xf8] sm:$0xff]
    %v798 = vld [vmem:[#allocation2 + $0x100] sm:$0xff]
    %v799 = vld [vmem:[#allocation2 + $0x108] sm:$0xff]
    %v800 = vld [vmem:[#allocation2 + $0x110] sm:$0xff]
    %v801 = vld [vmem:[#allocation2 + $0x118] sm:$0xff]
    %v802 = vld [vmem:[#allocation2 + $0x120] sm:$0xff]
    %v803 = vld [vmem:[#allocation2 + $0x128] sm:$0xff]
    %v804 = vld [vmem:[#allocation2 + $0x130] sm:$0xff]
    %v805 = vld [vmem:[#allocation2 + $0x138] sm:$0xff]
    %v806 = vld [vmem:[#allocation2 + $0x140] sm:$0xff]
    %v807 = vld [vmem:[#allocation2 + $0x148] sm:$0xff]
    %v808 = vld [vmem:[#allocation2 + $0x150] sm:$0xff]
    %v809 = vld [vmem:[#allocation2 + $0x158] sm:$0xff]
    %v810 = vld [vmem:[#allocation2 + $0x160] sm:$0xff]
    %v811 = vld [vmem:[#allocation2 + $0x168] sm:$0xff]
    %v812 = vld [vmem:[#allocation2 + $0x170] sm:$0xff]
    %v813 = vld [vmem:[#allocation2 + $0x178] sm:$0xff]
    %v814 = vld [vmem:[#allocation2 + $0x180] sm:$0xff]
    %v815 = vld [vmem:[#allocation2 + $0x188] sm:$0xff]
    %v816 = vld [vmem:[#allocation2 + $0x190] sm:$0xff]
    %v817 = vld [vmem:[#allocation2 + $0x198] sm:$0xff]
    %v818 = vld [vmem:[#allocation2 + $0x1a0] sm:$0xff]
    %v819 = vld [vmem:[#allocation2 + $0x1a8] sm:$0xff]
    %v820 = vld [vmem:[#allocation2 + $0x1b0] sm:$0xff]
    %v821 = vld [vmem:[#allocation2 + $0x1b8] sm:$0xff]
    %v822 = vld [vmem:[#allocation2 + $0x1c0] sm:$0xff]
    %v823 = vld [vmem:[#allocation2 + $0x1c8] sm:$0xff]
    %v824 = vld [vmem:[#allocation2 + $0x1d0] sm:$0xff]
    %v825 = vld [vmem:[#allocation2 + $0x1d8] sm:$0xff]
    %v826 = vld [vmem:[#allocation2 + $0x1e0] sm:$0xff]
    %v827 = vld [vmem:[#allocation2 + $0x1e8] sm:$0xff]
    %v828 = vld [vmem:[#allocation2 + $0x1f0] sm:$0xff]
    %v829 = vld [vmem:[#allocation2 + $0x1f8] sm:$0xff]
    %v830 = vld [vmem:[%s2] sm:$0x1]
    %v832 = vperm.slane %v830, 0
    %v834 = vadd.f32 %v766, %v832
    %v835 = vadd.f32 %v767, %v832
    %v836 = vadd.f32 %v768, %v832
    %v837 = vadd.f32 %v769, %v832
    %v838 = vadd.f32 %v770, %v832
    %v839 = vadd.f32 %v771, %v832
    %v840 = vadd.f32 %v772, %v832
    %v841 = vadd.f32 %v773, %v832
    %v842 = vadd.f32 %v774, %v832
    %v843 = vadd.f32 %v775, %v832
    %v844 = vadd.f32 %v776, %v832
    %v845 = vadd.f32 %v777, %v832
    %v846 = vadd.f32 %v778, %v832
    %v847 = vadd.f32 %v779, %v832
    %v848 = vadd.f32 %v780, %v832
    %v849 = vadd.f32 %v781, %v832
    %v850 = vadd.f32 %v782, %v832
    %v851 = vadd.f32 %v783, %v832
    %v852 = vadd.f32 %v784, %v832
    %v853 = vadd.f32 %v785, %v832
    %v854 = vadd.f32 %v786, %v832
    %v855 = vadd.f32 %v787, %v832
    %v856 = vadd.f32 %v788, %v832
    %v857 = vadd.f32 %v789, %v832
    %v858 = vadd.f32 %v790, %v832
    %v859 = vadd.f32 %v791, %v832
    %v860 = vadd.f32 %v792, %v832
    %v861 = vadd.f32 %v793, %v832
    %v862 = vadd.f32 %v794, %v832
    %v863 = vadd.f32 %v795, %v832
    %v864 = vadd.f32 %v796, %v832
    %v865 = vadd.f32 %v797, %v832
    %v866 = vadd.f32 %v798, %v832
    %v867 = vadd.f32 %v799, %v832
    %v868 = vadd.f32 %v800, %v832
    %v869 = vadd.f32 %v801, %v832
    %v870 = vadd.f32 %v802, %v832
    %v871 = vadd.f32 %v803, %v832
    %v872 = vadd.f32 %v804, %v832
    %v873 = vadd.f32 %v805, %v832
    %v874 = vadd.f32 %v806, %v832
    %v875 = vadd.f32 %v807, %v832
    %v876 = vadd.f32 %v808, %v832
    %v877 = vadd.f32 %v809, %v832
    %v878 = vadd.f32 %v810, %v832
    %v879 = vadd.f32 %v811, %v832
    %v880 = vadd.f32 %v812, %v832
    %v881 = vadd.f32 %v813, %v832
    %v882 = vadd.f32 %v814, %v832
    %v883 = vadd.f32 %v815, %v832
    %v884 = vadd.f32 %v816, %v832
    %v885 = vadd.f32 %v817, %v832
    %v886 = vadd.f32 %v818, %v832
    %v887 = vadd.f32 %v819, %v832
    %v888 = vadd.f32 %v820, %v832
    %v889 = vadd.f32 %v821, %v832
    %v890 = vadd.f32 %v822, %v832
    %v891 = vadd.f32 %v823, %v832
    %v892 = vadd.f32 %v824, %v832
    %v893 = vadd.f32 %v825, %v832
    %v894 = vadd.f32 %v826, %v832
    %v895 = vadd.f32 %v827, %v832
    %v896 = vadd.f32 %v828, %v832
    %v897 = vadd.f32 %v829, %v832
    %v898 = vmax.f32 %v834, 0.0
    %v899 = vmax.f32 %v835, 0.0
    %v900 = vmax.f32 %v836, 0.0
    %v901 = vmax.f32 %v837, 0.0
    %v902 = vmax.f32 %v838, 0.0
    %v903 = vmax.f32 %v839, 0.0
    %v904 = vmax.f32 %v840, 0.0
    %v905 = vmax.f32 %v841, 0.0
    %v906 = vmax.f32 %v842, 0.0
    %v907 = vmax.f32 %v843, 0.0
    %v908 = vmax.f32 %v844, 0.0
    %v909 = vmax.f32 %v845, 0.0
    %v910 = vmax.f32 %v846, 0.0
    %v911 = vmax.f32 %v847, 0.0
    %v912 = vmax.f32 %v848, 0.0
    %v913 = vmax.f32 %v849, 0.0
    %v914 = vmax.f32 %v850, 0.0
    %v915 = vmax.f32 %v851, 0.0
    %v916 = vmax.f32 %v852, 0.0
    %v917 = vmax.f32 %v853, 0.0
    %v918 = vmax.f32 %v854, 0.0
    %v919 = vmax.f32 %v855, 0.0
    %v920 = vmax.f32 %v856, 0.0
    %v921 = vmax.f32 %v857, 0.0
    %v922 = vmax.f32 %v858, 0.0
    %v923 = vmax.f32 %v859, 0.0
    %v924 = vmax.f32 %v860, 0.0
    %v925 = vmax.f32 %v861, 0.0
    %v926 = vmax.f32 %v862, 0.0
    %v927 = vmax.f32 %v863, 0.0
    %v928 = vmax.f32 %v864, 0.0
    %v929 = vmax.f32 %v865, 0.0
    %v930 = vmax.f32 %v866, 0.0
    %v931 = vmax.f32 %v867, 0.0
    %v932 = vmax.f32 %v868, 0.0
    %v933 = vmax.f32 %v869, 0.0
    %v934 = vmax.f32 %v870, 0.0
    %v935 = vmax.f32 %v871, 0.0
    %v936 = vmax.f32 %v872, 0.0
    %v937 = vmax.f32 %v873, 0.0
    %v938 = vmax.f32 %v874, 0.0
    %v939 = vmax.f32 %v875, 0.0
    %v940 = vmax.f32 %v876, 0.0
    %v941 = vmax.f32 %v877, 0.0
    %v942 = vmax.f32 %v878, 0.0
    %v943 = vmax.f32 %v879, 0.0
    %v944 = vmax.f32 %v880, 0.0
    %v945 = vmax.f32 %v881, 0.0
    %v946 = vmax.f32 %v882, 0.0
    %v947 = vmax.f32 %v883, 0.0
    %v948 = vmax.f32 %v884, 0.0
    %v949 = vmax.f32 %v885, 0.0
    %v950 = vmax.f32 %v886, 0.0
    %v951 = vmax.f32 %v887, 0.0
    %v952 = vmax.f32 %v888, 0.0
    %v953 = vmax.f32 %v889, 0.0
    %v954 = vmax.f32 %v890, 0.0
    %v955 = vmax.f32 %v891, 0.0
    %v956 = vmax.f32 %v892, 0.0
    %v957 = vmax.f32 %v893, 0.0
    %v958 = vmax.f32 %v894, 0.0
    %v959 = vmax.f32 %v895, 0.0
    %v960 = vmax.f32 %v896, 0.0
    %v961 = vmax.f32 %v897, 0.0
    %962 = vst [vmem:[%s3] sm:$0xff] %v898
    %963 = vst [vmem:[%s3 + $0x8] sm:$0xff] %v899
    %964 = vst [vmem:[%s3 + $0x10] sm:$0xff] %v900
    %965 = vst [vmem:[%s3 + $0x18] sm:$0xff] %v901
    %966 = vst [vmem:[%s3 + $0x20] sm:$0xff] %v902
    %967 = vst [vmem:[%s3 + $0x28] sm:$0xff] %v903
    %968 = vst [vmem:[%s3 + $0x30] sm:$0xff] %v904
    %969 = vst [vmem:[%s3 + $0x38] sm:$0xff] %v905
    %970 = vst [vmem:[%s3 + $0x40] sm:$0xff] %v906
    %971 = vst [vmem:[%s3 + $0x48] sm:$0xff] %v907
    %972 = vst [vmem:[%s3 + $0x50] sm:$0xff] %v908
    %973 = vst [vmem:[%s3 + $0x58] sm:$0xff] %v909
    %974 = vst [vmem:[%s3 + $0x60] sm:$0xff] %v910
    %975 = vst [vmem:[%s3 + $0x68] sm:$0xff] %v911
    %976 = vst [vmem:[%s3 + $0x70] sm:$0xff] %v912
    %977 = vst [vmem:[%s3 + $0x78] sm:$0xff] %v913
    %978 = vst [vmem:[%s3 + $0x80] sm:$0xff] %v914
    %979 = vst [vmem:[%s3 + $0x88] sm:$0xff] %v915
    %980 = vst [vmem:[%s3 + $0x90] sm:$0xff] %v916
    %981 = vst [vmem:[%s3 + $0x98] sm:$0xff] %v917
    %982 = vst [vmem:[%s3 + $0xa0] sm:$0xff] %v918
    %983 = vst [vmem:[%s3 + $0xa8] sm:$0xff] %v919
    %984 = vst [vmem:[%s3 + $0xb0] sm:$0xff] %v920
    %985 = vst [vmem:[%s3 + $0xb8] sm:$0xff] %v921
    %986 = vst [vmem:[%s3 + $0xc0] sm:$0xff] %v922
    %987 = vst [vmem:[%s3 + $0xc8] sm:$0xff] %v923
    %988 = vst [vmem:[%s3 + $0xd0] sm:$0xff] %v924
    %989 = vst [vmem:[%s3 + $0xd8] sm:$0xff] %v925
    %990 = vst [vmem:[%s3 + $0xe0] sm:$0xff] %v926
    %991 = vst [vmem:[%s3 + $0xe8] sm:$0xff] %v927
    %992 = vst [vmem:[%s3 + $0xf0] sm:$0xff] %v928
    %993 = vst [vmem:[%s3 + $0xf8] sm:$0xff] %v929
    %994 = vst [vmem:[%s3 + $0x100] sm:$0xff] %v930
    %995 = vst [vmem:[%s3 + $0x108] sm:$0xff] %v931
    %996 = vst [vmem:[%s3 + $0x110] sm:$0xff] %v932
    %997 = vst [vmem:[%s3 + $0x118] sm:$0xff] %v933
    %998 = vst [vmem:[%s3 + $0x120] sm:$0xff] %v934
    %999 = vst [vmem:[%s3 + $0x128] sm:$0xff] %v935
    %1000 = vst [vmem:[%s3 + $0x130] sm:$0xff] %v936
    %1001 = vst [vmem:[%s3 + $0x138] sm:$0xff] %v937
    %1002 = vst [vmem:[%s3 + $0x140] sm:$0xff] %v938
    %1003 = vst [vmem:[%s3 + $0x148] sm:$0xff] %v939
    %1004 = vst [vmem:[%s3 + $0x150] sm:$0xff] %v940
    %1005 = vst [vmem:[%s3 + $0x158] sm:$0xff] %v941
    %1006 = vst [vmem:[%s3 + $0x160] sm:$0xff] %v942
    %1007 = vst [vmem:[%s3 + $0x168] sm:$0xff] %v943
    %1008 = vst [vmem:[%s3 + $0x170] sm:$0xff] %v944
    %1009 = vst [vmem:[%s3 + $0x178] sm:$0xff] %v945
    %1010 = vst [vmem:[%s3 + $0x180] sm:$0xff] %v946
    %1011 = vst [vmem:[%s3 + $0x188] sm:$0xff] %v947
    %1012 = vst [vmem:[%s3 + $0x190] sm:$0xff] %v948
    %1013 = vst [vmem:[%s3 + $0x198] sm:$0xff] %v949
    %1014 = vst [vmem:[%s3 + $0x1a0] sm:$0xff] %v950
    %1015 = vst [vmem:[%s3 + $0x1a8] sm:$0xff] %v951
    %1016 = vst [vmem:[%s3 + $0x1b0] sm:$0xff] %v952
    %1017 = vst [vmem:[%s3 + $0x1b8] sm:$0xff] %v953
    %1018 = vst [vmem:[%s3 + $0x1c0] sm:$0xff] %v954
    %1019 = vst [vmem:[%s3 + $0x1c8] sm:$0xff] %v955
    %1020 = vst [vmem:[%s3 + $0x1d0] sm:$0xff] %v956
    %1021 = vst [vmem:[%s3 + $0x1d8] sm:$0xff] %v957
    %1022 = vst [vmem:[%s3 + $0x1e0] sm:$0xff] %v958
    %1023 = vst [vmem:[%s3 + $0x1e8] sm:$0xff] %v959
    %1024 = vst [vmem:[%s3 + $0x1f0] sm:$0xff] %v960
    %1025 = vst [vmem:[%s3 + $0x1f8] sm:$0xff] %v961
  $region21: #{inception_b.6} parent=0 // pred_fallthru
    _
  // Predicated region
  $region22: #{inception_b.6} parent=0 // pred_check
    _
  $region23: #{inception_b.6} parent=0 // pred_check_branch
    %1027 = sbr.rel (0) target = $region25
  $region24: #{inception_b.6} parent=0 // pred_region
    _
  $region25: #{inception_b.6} parent=0 // pred_fallthru
    _
  // Predicated region
  $region26: #{inception_b.6} parent=0 // pred_check
    _
  $region27: #{inception_b.6} parent=0 // pred_check_branch
    %1029 = sbr.rel (0) target = $region29
  $region28: #{inception_b.6} parent=0 // pred_region
    _
  $region29: #{inception_b.6} parent=0 // pred_fallthru
    _

// kernel: inception_b.7
$region0: #{inception_b.7}
  #allocation0 [shape = 'u32[]', space=smem, size = 0x4, offset = 0x4, fixed_abs, tag = 'smem constant byte address 0x4 - core index']
  #allocation1 [shape = 'u32[72,128]{1,0:T(1,128)}', space=vmem, size = 0x9000, scoped, tag = 'internal scratch']
  #allocation2 [shape = 'f32[512,128]{1,0:T(8,128)}', space=vmem, size = 0x40000, scoped, tag = 'scratch operand']
  %s0 = inlined_call_operand.vmem [shape: bf16[512,640], index: 0, kind: input, shape index: {}]
  %s1 = inlined_call_operand.vmem [shape: bf16[640,128], index: 1, kind: input, shape index: {}]
  %s2 = inlined_call_operand.vmem [shape: f32[1,128], index: 2, kind: input, shape index: {}]
  %s3 = inlined_call_operand.vmem [shape: f32[512,128], index: 3, kind: output, shape index: {}]
  %s4 = sld [smem:[#allocation0]]
  $region30: #{inception_b.7} parent=0
    _
  %s6 = ssub.s32 1, %s4
  %s7 = scalar_select 0, %s6, %s4
  // Predicated region
  $region2: #{inception_b.7} parent=0 // pred_check
    _
  $region3: #{inception_b.7} parent=0 // pred_check_branch
    %9 = sbr.rel (0) target = $region5
  $region4: #{inception_b.7} parent=0 // pred_region
    _
  $region5: #{inception_b.7} parent=0 // pred_fallthru
    _
  // Predicated region
  $region6: #{inception_b.7} parent=0 // pred_check
    _
  $region7: #{inception_b.7} parent=0 // pred_check_branch
    %11 = sbr.rel (0) target = $region9
  $region8: #{inception_b.7} parent=0 // pred_region
    _
  $region9: #{inception_b.7} parent=0 // pred_fallthru
    _
  // Predicated region
  $region10: #{inception_b.7} parent=0 // pred_check
    _
  $region11: #{inception_b.7} parent=0 // pred_check_branch
    %13 = sbr.rel (0) target = $region13
  $region12: #{inception_b.7} parent=0 // pred_region
    _
  $region13: #{inception_b.7} parent=0 // pred_fallthru
    _
  %p14 = scmp.eq.s32.totalorder 0, 0
  // Predicated region
  $region14: #{inception_b.7} parent=0 // pred_check
    %p15 = pneg %p14
  $region15: #{inception_b.7} parent=0 // pred_check_branch
    %17 = sbr.rel (%p15) target = $region17
  $region16: #{inception_b.7} parent=0 // pred_region
    %18 = vst [vmem:[#allocation2] sm:$0xff] 0.0
    %19 = vst [vmem:[#allocation2 + $0x8] sm:$0xff] 0.0
    %20 = vst [vmem:[#allocation2 + $0x10] sm:$0xff] 0.0
    %21 = vst [vmem:[#allocation2 + $0x18] sm:$0xff] 0.0
    %22 = vst [vmem:[#allocation2 + $0x20] sm:$0xff] 0.0
    %23 = vst [vmem:[#allocation2 + $0x28] sm:$0xff] 0.0
    %24 = vst [vmem:[#allocation2 + $0x30] sm:$0xff] 0.0
    %25 = vst [vmem:[#allocation2 + $0x38] sm:$0xff] 0.0
    %26 = vst [vmem:[#allocation2 + $0x40] sm:$0xff] 0.0
    %27 = vst [vmem:[#allocation2 + $0x48] sm:$0xff] 0.0
    %28 = vst [vmem:[#allocation2 + $0x50] sm:$0xff] 0.0
    %29 = vst [vmem:[#allocation2 + $0x58] sm:$0xff] 0.0
    %30 = vst [vmem:[#allocation2 + $0x60] sm:$0xff] 0.0
    %31 = vst [vmem:[#allocation2 + $0x68] sm:$0xff] 0.0
    %32 = vst [vmem:[#allocation2 + $0x70] sm:$0xff] 0.0
    %33 = vst [vmem:[#allocation2 + $0x78] sm:$0xff] 0.0
    %34 = vst [vmem:[#allocation2 + $0x80] sm:$0xff] 0.0
    %35 = vst [vmem:[#allocation2 + $0x88] sm:$0xff] 0.0
    %36 = vst [vmem:[#allocation2 + $0x90] sm:$0xff] 0.0
    %37 = vst [vmem:[#allocation2 + $0x98] sm:$0xff] 0.0
    %38 = vst [vmem:[#allocation2 + $0xa0] sm:$0xff] 0.0
    %39 = vst [vmem:[#allocation2 + $0xa8] sm:$0xff] 0.0
    %40 = vst [vmem:[#allocation2 + $0xb0] sm:$0xff] 0.0
    %41 = vst [vmem:[#allocation2 + $0xb8] sm:$0xff] 0.0
    %42 = vst [vmem:[#allocation2 + $0xc0] sm:$0xff] 0.0
    %43 = vst [vmem:[#allocation2 + $0xc8] sm:$0xff] 0.0
    %44 = vst [vmem:[#allocation2 + $0xd0] sm:$0xff] 0.0
    %45 = vst [vmem:[#allocation2 + $0xd8] sm:$0xff] 0.0
    %46 = vst [vmem:[#allocation2 + $0xe0] sm:$0xff] 0.0
    %47 = vst [vmem:[#allocation2 + $0xe8] sm:$0xff] 0.0
    %48 = vst [vmem:[#allocation2 + $0xf0] sm:$0xff] 0.0
    %49 = vst [vmem:[#allocation2 + $0xf8] sm:$0xff] 0.0
    %50 = vst [vmem:[#allocation2 + $0x100] sm:$0xff] 0.0
    %51 = vst [vmem:[#allocation2 + $0x108] sm:$0xff] 0.0
    %52 = vst [vmem:[#allocation2 + $0x110] sm:$0xff] 0.0
    %53 = vst [vmem:[#allocation2 + $0x118] sm:$0xff] 0.0
    %54 = vst [vmem:[#allocation2 + $0x120] sm:$0xff] 0.0
    %55 = vst [vmem:[#allocation2 + $0x128] sm:$0xff] 0.0
    %56 = vst [vmem:[#allocation2 + $0x130] sm:$0xff] 0.0
    %57 = vst [vmem:[#allocation2 + $0x138] sm:$0xff] 0.0
    %58 = vst [vmem:[#allocation2 + $0x140] sm:$0xff] 0.0
    %59 = vst [vmem:[#allocation2 + $0x148] sm:$0xff] 0.0
    %60 = vst [vmem:[#allocation2 + $0x150] sm:$0xff] 0.0
    %61 = vst [vmem:[#allocation2 + $0x158] sm:$0xff] 0.0
    %62 = vst [vmem:[#allocation2 + $0x160] sm:$0xff] 0.0
    %63 = vst [vmem:[#allocation2 + $0x168] sm:$0xff] 0.0
    %64 = vst [vmem:[#allocation2 + $0x170] sm:$0xff] 0.0
    %65 = vst [vmem:[#allocation2 + $0x178] sm:$0xff] 0.0
    %66 = vst [vmem:[#allocation2 + $0x180] sm:$0xff] 0.0
    %67 = vst [vmem:[#allocation2 + $0x188] sm:$0xff] 0.0
    %68 = vst [vmem:[#allocation2 + $0x190] sm:$0xff] 0.0
    %69 = vst [vmem:[#allocation2 + $0x198] sm:$0xff] 0.0
    %70 = vst [vmem:[#allocation2 + $0x1a0] sm:$0xff] 0.0
    %71 = vst [vmem:[#allocation2 + $0x1a8] sm:$0xff] 0.0
    %72 = vst [vmem:[#allocation2 + $0x1b0] sm:$0xff] 0.0
    %73 = vst [vmem:[#allocation2 + $0x1b8] sm:$0xff] 0.0
    %74 = vst [vmem:[#allocation2 + $0x1c0] sm:$0xff] 0.0
    %75 = vst [vmem:[#allocation2 + $0x1c8] sm:$0xff] 0.0
    %76 = vst [vmem:[#allocation2 + $0x1d0] sm:$0xff] 0.0
    %77 = vst [vmem:[#allocation2 + $0x1d8] sm:$0xff] 0.0
    %78 = vst [vmem:[#allocation2 + $0x1e0] sm:$0xff] 0.0
    %79 = vst [vmem:[#allocation2 + $0x1e8] sm:$0xff] 0.0
    %80 = vst [vmem:[#allocation2 + $0x1f0] sm:$0xff] 0.0
    %81 = vst [vmem:[#allocation2 + $0x1f8] sm:$0xff] 0.0
  $region17: #{inception_b.7} parent=0 // pred_fallthru
    _
  %v82 = vld [vmem:[#allocation2] sm:$0xff]
  %v83 = vld [vmem:[#allocation2 + $0x8] sm:$0xff]
  %v84 = vld [vmem:[#allocation2 + $0x10] sm:$0xff]
  %v85 = vld [vmem:[#allocation2 + $0x18] sm:$0xff]
  %v86 = vld [vmem:[#allocation2 + $0x20] sm:$0xff]
  %v87 = vld [vmem:[#allocation2 + $0x28] sm:$0xff]
  %v88 = vld [vmem:[#allocation2 + $0x30] sm:$0xff]
  %v89 = vld [vmem:[#allocation2 + $0x38] sm:$0xff]
  %v90 = vld [vmem:[#allocation2 + $0x40] sm:$0xff]
  %v91 = vld [vmem:[#allocation2 + $0x48] sm:$0xff]
  %v92 = vld [vmem:[#allocation2 + $0x50] sm:$0xff]
  %v93 = vld [vmem:[#allocation2 + $0x58] sm:$0xff]
  %v94 = vld [vmem:[#allocation2 + $0x60] sm:$0xff]
  %v95 = vld [vmem:[#allocation2 + $0x68] sm:$0xff]
  %v96 = vld [vmem:[#allocation2 + $0x70] sm:$0xff]
  %v97 = vld [vmem:[#allocation2 + $0x78] sm:$0xff]
  %v98 = vld [vmem:[#allocation2 + $0x80] sm:$0xff]
  %v99 = vld [vmem:[#allocation2 + $0x88] sm:$0xff]
  %v100 = vld [vmem:[#allocation2 + $0x90] sm:$0xff]
  %v101 = vld [vmem:[#allocation2 + $0x98] sm:$0xff]
  %v102 = vld [vmem:[#allocation2 + $0xa0] sm:$0xff]
  %v103 = vld [vmem:[#allocation2 + $0xa8] sm:$0xff]
  %v104 = vld [vmem:[#allocation2 + $0xb0] sm:$0xff]
  %v105 = vld [vmem:[#allocation2 + $0xb8] sm:$0xff]
  %v106 = vld [vmem:[#allocation2 + $0xc0] sm:$0xff]
  %v107 = vld [vmem:[#allocation2 + $0xc8] sm:$0xff]
  %v108 = vld [vmem:[#allocation2 + $0xd0] sm:$0xff]
  %v109 = vld [vmem:[#allocation2 + $0xd8] sm:$0xff]
  %v110 = vld [vmem:[#allocation2 + $0xe0] sm:$0xff]
  %v111 = vld [vmem:[#allocation2 + $0xe8] sm:$0xff]
  %v112 = vld [vmem:[#allocation2 + $0xf0] sm:$0xff]
  %v113 = vld [vmem:[#allocation2 + $0xf8] sm:$0xff]
  %v114 = vld [vmem:[#allocation2 + $0x100] sm:$0xff]
  %v115 = vld [vmem:[#allocation2 + $0x108] sm:$0xff]
  %v116 = vld [vmem:[#allocation2 + $0x110] sm:$0xff]
  %v117 = vld [vmem:[#allocation2 + $0x118] sm:$0xff]
  %v118 = vld [vmem:[#allocation2 + $0x120] sm:$0xff]
  %v119 = vld [vmem:[#allocation2 + $0x128] sm:$0xff]
  %v120 = vld [vmem:[#allocation2 + $0x130] sm:$0xff]
  %v121 = vld [vmem:[#allocation2 + $0x138] sm:$0xff]
  %v122 = vld [vmem:[#allocation2 + $0x140] sm:$0xff]
  %v123 = vld [vmem:[#allocation2 + $0x148] sm:$0xff]
  %v124 = vld [vmem:[#allocation2 + $0x150] sm:$0xff]
  %v125 = vld [vmem:[#allocation2 + $0x158] sm:$0xff]
  %v126 = vld [vmem:[#allocation2 + $0x160] sm:$0xff]
  %v127 = vld [vmem:[#allocation2 + $0x168] sm:$0xff]
  %v128 = vld [vmem:[#allocation2 + $0x170] sm:$0xff]
  %v129 = vld [vmem:[#allocation2 + $0x178] sm:$0xff]
  %v130 = vld [vmem:[#allocation2 + $0x180] sm:$0xff]
  %v131 = vld [vmem:[#allocation2 + $0x188] sm:$0xff]
  %v132 = vld [vmem:[#allocation2 + $0x190] sm:$0xff]
  %v133 = vld [vmem:[#allocation2 + $0x198] sm:$0xff]
  %v134 = vld [vmem:[#allocation2 + $0x1a0] sm:$0xff]
  %v135 = vld [vmem:[#allocation2 + $0x1a8] sm:$0xff]
  %v136 = vld [vmem:[#allocation2 + $0x1b0] sm:$0xff]
  %v137 = vld [vmem:[#allocation2 + $0x1b8] sm:$0xff]
  %v138 = vld [vmem:[#allocation2 + $0x1c0] sm:$0xff]
  %v139 = vld [vmem:[#allocation2 + $0x1c8] sm:$0xff]
  %v140 = vld [vmem:[#allocation2 + $0x1d0] sm:$0xff]
  %v141 = vld [vmem:[#allocation2 + $0x1d8] sm:$0xff]
  %v142 = vld [vmem:[#allocation2 + $0x1e0] sm:$0xff]
  %v143 = vld [vmem:[#allocation2 + $0x1e8] sm:$0xff]
  %v144 = vld [vmem:[#allocation2 + $0x1f0] sm:$0xff]
  %v145 = vld [vmem:[#allocation2 + $0x1f8] sm:$0xff]
  %v146 = vld [vmem:[%s0] sm:$0xff]
  %v147 = vld [vmem:[%s0 + $0x8] sm:$0xff]
  %v148 = vld [vmem:[%s0 + $0x10] sm:$0xf]
  %v149 = vld [vmem:[%s0 + $0x14] sm:$0xff]
  %v150 = vld [vmem:[%s0 + $0x1c] sm:$0xff]
  %v151 = vld [vmem:[%s0 + $0x24] sm:$0xf]
  %v152 = vld [vmem:[%s0 + $0x28] sm:$0xff]
  %v153 = vld [vmem:[%s0 + $0x30] sm:$0xff]
  %v154 = vld [vmem:[%s0 + $0x38] sm:$0xf]
  %v155 = vld [vmem:[%s0 + $0x3c] sm:$0xff]
  %v156 = vld [vmem:[%s0 + $0x44] sm:$0xff]
  %v157 = vld [vmem:[%s0 + $0x4c] sm:$0xf]
  %v158 = vld [vmem:[%s0 + $0x50] sm:$0xff]
  %v159 = vld [vmem:[%s0 + $0x58] sm:$0xff]
  %v160 = vld [vmem:[%s0 + $0x60] sm:$0xf]
  %v161 = vld [vmem:[%s0 + $0x64] sm:$0xff]
  %v162 = vld [vmem:[%s0 + $0x6c] sm:$0xff]
  %v163 = vld [vmem:[%s0 + $0x74] sm:$0xf]
  %v164 = vld [vmem:[%s0 + $0x78] sm:$0xff]
  %v165 = vld [vmem:[%s0 + $0x80] sm:$0xff]
  %v166 = vld [vmem:[%s0 + $0x88] sm:$0xf]
  %v167 = vld [vmem:[%s0 + $0x8c] sm:$0xff]
  %v168 = vld [vmem:[%s0 + $0x94] sm:$0xff]
  %v169 = vld [vmem:[%s0 + $0x9c] sm:$0xf]
  %v170 = vld [vmem:[%s0 + $0xa0] sm:$0xff]
  %v171 = vld [vmem:[%s0 + $0xa8] sm:$0xff]
  %v172 = vld [vmem:[%s0 + $0xb0] sm:$0xf]
  %v173 = vld [vmem:[%s0 + $0xb4] sm:$0xff]
  %v174 = vld [vmem:[%s0 + $0xbc] sm:$0xff]
  %v175 = vld [vmem:[%s0 + $0xc4] sm:$0xf]
  %v176 = vld [vmem:[%s0 + $0xc8] sm:$0xff]
  %v177 = vld [vmem:[%s0 + $0xd0] sm:$0xff]
  %v178 = vld [vmem:[%s0 + $0xd8] sm:$0xf]
  %v179 = vld [vmem:[%s0 + $0xdc] sm:$0xff]
  %v180 = vld [vmem:[%s0 + $0xe4] sm:$0xff]
  %v181 = vld [vmem:[%s0 + $0xec] sm:$0xf]
  %v182 = vld [vmem:[%s0 + $0xf0] sm:$0xff]
  %v183 = vld [vmem:[%s0 + $0xf8] sm:$0xff]
  %v184 = vld [vmem:[%s0 + $0x100] sm:$0xf]
  %v185 = vld [vmem:[%s0 + $0x104] sm:$0xff]
  %v186 = vld [vmem:[%s0 + $0x10c] sm:$0xff]
  %v187 = vld [vmem:[%s0 + $0x114] sm:$0xf]
  %v188 = vld [vmem:[%s0 + $0x118] sm:$0xff]
  %v189 = vld [vmem:[%s0 + $0x120] sm:$0xff]
  %v190 = vld [vmem:[%s0 + $0x128] sm:$0xf]
  %v191 = vld [vmem:[%s0 + $0x12c] sm:$0xff]
  %v192 = vld [vmem:[%s0 + $0x134] sm:$0xff]
  %v193 = vld [vmem:[%s0 + $0x13c] sm:$0xf]
  %v194 = vld [vmem:[%s0 + $0x140] sm:$0xff]
  %v195 = vld [vmem:[%s0 + $0x148] sm:$0xff]
  %v196 = vld [vmem:[%s0 + $0x150] sm:$0xf]
  %v197 = vld [vmem:[%s0 + $0x154] sm:$0xff]
  %v198 = vld [vmem:[%s0 + $0x15c] sm:$0xff]
  %v199 = vld [vmem:[%s0 + $0x164] sm:$0xf]
  %v200 = vld [vmem:[%s0 + $0x168] sm:$0xff]
  %v201 = vld [vmem:[%s0 + $0x170] sm:$0xff]
  %v202 = vld [vmem:[%s0 + $0x178] sm:$0xf]
  %v203 = vld [vmem:[%s0 + $0x17c] sm:$0xff]
  %v204 = vld [vmem:[%s0 + $0x184] sm:$0xff]
  %v205 = vld [vmem:[%s0 + $0x18c] sm:$0xf]
  %v206 = vld [vmem:[%s0 + $0x190] sm:$0xff]
  %v207 = vld [vmem:[%s0 + $0x198] sm:$0xff]
  %v208 = vld [vmem:[%s0 + $0x1a0] sm:$0xf]
  %v209 = vld [vmem:[%s0 + $0x1a4] sm:$0xff]
  %v210 = vld [vmem:[%s0 + $0x1ac] sm:$0xff]
  %v211 = vld [vmem:[%s0 + $0x1b4] sm:$0xf]
  %v212 = vld [vmem:[%s0 + $0x1b8] sm:$0xff]
  %v213 = vld [vmem:[%s0 + $0x1c0] sm:$0xff]
  %v214 = vld [vmem:[%s0 + $0x1c8] sm:$0xf]
  %v215 = vld [vmem:[%s0 + $0x1cc] sm:$0xff]
  %v216 = vld [vmem:[%s0 + $0x1d4] sm:$0xff]
  %v217 = vld [vmem:[%s0 + $0x1dc] sm:$0xf]
  %v218 = vld [vmem:[%s0 + $0x1e0] sm:$0xff]
  %v219 = vld [vmem:[%s0 + $0x1e8] sm:$0xff]
  %v220 = vld [vmem:[%s0 + $0x1f0] sm:$0xf]
  %v221 = vld [vmem:[%s0 + $0x1f4] sm:$0xff]
  %v222 = vld [vmem:[%s0 + $0x1fc] sm:$0xff]
  %v223 = vld [vmem:[%s0 + $0x204] sm:$0xf]
  %v224 = vld [vmem:[%s0 + $0x208] sm:$0xff]
  %v225 = vld [vmem:[%s0 + $0x210] sm:$0xff]
  %v226 = vld [vmem:[%s0 + $0x218] sm:$0xf]
  %v227 = vld [vmem:[%s0 + $0x21c] sm:$0xff]
  %v228 = vld [vmem:[%s0 + $0x224] sm:$0xff]
  %v229 = vld [vmem:[%s0 + $0x22c] sm:$0xf]
  %v230 = vld [vmem:[%s0 + $0x230] sm:$0xff]
  %v231 = vld [vmem:[%s0 + $0x238] sm:$0xff]
  %v232 = vld [vmem:[%s0 + $0x240] sm:$0xf]
  %v233 = vld [vmem:[%s0 + $0x244] sm:$0xff]
  %v234 = vld [vmem:[%s0 + $0x24c] sm:$0xff]
  %v235 = vld [vmem:[%s0 + $0x254] sm:$0xf]
  %v236 = vld [vmem:[%s0 + $0x258] sm:$0xff]
  %v237 = vld [vmem:[%s0 + $0x260] sm:$0xff]
  %v238 = vld [vmem:[%s0 + $0x268] sm:$0xf]
  %v239 = vld [vmem:[%s0 + $0x26c] sm:$0xff]
  %v240 = vld [vmem:[%s0 + $0x274] sm:$0xff]
  %v241 = vld [vmem:[%s0 + $0x27c] sm:$0xf]
  %v242 = vld [vmem:[%s0 + $0x280] sm:$0xff]
  %v243 = vld [vmem:[%s0 + $0x288] sm:$0xff]
  %v244 = vld [vmem:[%s0 + $0x290] sm:$0xf]
  %v245 = vld [vmem:[%s0 + $0x294] sm:$0xff]
  %v246 = vld [vmem:[%s0 + $0x29c] sm:$0xff]
  %v247 = vld [vmem:[%s0 + $0x2a4] sm:$0xf]
  %v248 = vld [vmem:[%s0 + $0x2a8] sm:$0xff]
  %v249 = vld [vmem:[%s0 + $0x2b0] sm:$0xff]
  %v250 = vld [vmem:[%s0 + $0x2b8] sm:$0xf]
  %v251 = vld [vmem:[%s0 + $0x2bc] sm:$0xff]
  %v252 = vld [vmem:[%s0 + $0x2c4] sm:$0xff]
  %v253 = vld [vmem:[%s0 + $0x2cc] sm:$0xf]
  %v254 = vld [vmem:[%s0 + $0x2d0] sm:$0xff]
  %v255 = vld [vmem:[%s0 + $0x2d8] sm:$0xff]
  %v256 = vld [vmem:[%s0 + $0x2e0] sm:$0xf]
  %v257 = vld [vmem:[%s0 + $0x2e4] sm:$0xff]
  %v258 = vld [vmem:[%s0 + $0x2ec] sm:$0xff]
  %v259 = vld [vmem:[%s0 + $0x2f4] sm:$0xf]
  %v260 = vld [vmem:[%s0 + $0x2f8] sm:$0xff]
  %v261 = vld [vmem:[%s0 + $0x300] sm:$0xff]
  %v262 = vld [vmem:[%s0 + $0x308] sm:$0xf]
  %v263 = vld [vmem:[%s0 + $0x30c] sm:$0xff]
  %v264 = vld [vmem:[%s0 + $0x314] sm:$0xff]
  %v265 = vld [vmem:[%s0 + $0x31c] sm:$0xf]
  %v266 = vld [vmem:[%s0 + $0x320] sm:$0xff]
  %v267 = vld [vmem:[%s0 + $0x328] sm:$0xff]
  %v268 = vld [vmem:[%s0 + $0x330] sm:$0xf]
  %v269 = vld [vmem:[%s0 + $0x334] sm:$0xff]
  %v270 = vld [vmem:[%s0 + $0x33c] sm:$0xff]
  %v271 = vld [vmem:[%s0 + $0x344] sm:$0xf]
  %v272 = vld [vmem:[%s0 + $0x348] sm:$0xff]
  %v273 = vld [vmem:[%s0 + $0x350] sm:$0xff]
  %v274 = vld [vmem:[%s0 + $0x358] sm:$0xf]
  %v275 = vld [vmem:[%s0 + $0x35c] sm:$0xff]
  %v276 = vld [vmem:[%s0 + $0x364] sm:$0xff]
  %v277 = vld [vmem:[%s0 + $0x36c] sm:$0xf]
  %v278 = vld [vmem:[%s0 + $0x370] sm:$0xff]
  %v279 = vld [vmem:[%s0 + $0x378] sm:$0xff]
  %v280 = vld [vmem:[%s0 + $0x380] sm:$0xf]
  %v281 = vld [vmem:[%s0 + $0x384] sm:$0xff]
  %v282 = vld [vmem:[%s0 + $0x38c] sm:$0xff]
  %v283 = vld [vmem:[%s0 + $0x394] sm:$0xf]
  %v284 = vld [vmem:[%s0 + $0x398] sm:$0xff]
  %v285 = vld [vmem:[%s0 + $0x3a0] sm:$0xff]
  %v286 = vld [vmem:[%s0 + $0x3a8] sm:$0xf]
  %v287 = vld [vmem:[%s0 + $0x3ac] sm:$0xff]
  %v288 = vld [vmem:[%s0 + $0x3b4] sm:$0xff]
  %v289 = vld [vmem:[%s0 + $0x3bc] sm:$0xf]
  %v290 = vld [vmem:[%s0 + $0x3c0] sm:$0xff]
  %v291 = vld [vmem:[%s0 + $0x3c8] sm:$0xff]
  %v292 = vld [vmem:[%s0 + $0x3d0] sm:$0xf]
  %v293 = vld [vmem:[%s0 + $0x3d4] sm:$0xff]
  %v294 = vld [vmem:[%s0 + $0x3dc] sm:$0xff]
  %v295 = vld [vmem:[%s0 + $0x3e4] sm:$0xf]
  %v296 = vld [vmem:[%s0 + $0x3e8] sm:$0xff]
  %v297 = vld [vmem:[%s0 + $0x3f0] sm:$0xff]
  %v298 = vld [vmem:[%s0 + $0x3f8] sm:$0xf]
  %v299 = vld [vmem:[%s0 + $0x3fc] sm:$0xff]
  %v300 = vld [vmem:[%s0 + $0x404] sm:$0xff]
  %v301 = vld [vmem:[%s0 + $0x40c] sm:$0xf]
  %v302 = vld [vmem:[%s0 + $0x410] sm:$0xff]
  %v303 = vld [vmem:[%s0 + $0x418] sm:$0xff]
  %v304 = vld [vmem:[%s0 + $0x420] sm:$0xf]
  %v305 = vld [vmem:[%s0 + $0x424] sm:$0xff]
  %v306 = vld [vmem:[%s0 + $0x42c] sm:$0xff]
  %v307 = vld [vmem:[%s0 + $0x434] sm:$0xf]
  %v308 = vld [vmem:[%s0 + $0x438] sm:$0xff]
  %v309 = vld [vmem:[%s0 + $0x440] sm:$0xff]
  %v310 = vld [vmem:[%s0 + $0x448] sm:$0xf]
  %v311 = vld [vmem:[%s0 + $0x44c] sm:$0xff]
  %v312 = vld [vmem:[%s0 + $0x454] sm:$0xff]
  %v313 = vld [vmem:[%s0 + $0x45c] sm:$0xf]
  %v314 = vld [vmem:[%s0 + $0x460] sm:$0xff]
  %v315 = vld [vmem:[%s0 + $0x468] sm:$0xff]
  %v316 = vld [vmem:[%s0 + $0x470] sm:$0xf]
  %v317 = vld [vmem:[%s0 + $0x474] sm:$0xff]
  %v318 = vld [vmem:[%s0 + $0x47c] sm:$0xff]
  %v319 = vld [vmem:[%s0 + $0x484] sm:$0xf]
  %v320 = vld [vmem:[%s0 + $0x488] sm:$0xff]
  %v321 = vld [vmem:[%s0 + $0x490] sm:$0xff]
  %v322 = vld [vmem:[%s0 + $0x498] sm:$0xf]
  %v323 = vld [vmem:[%s0 + $0x49c] sm:$0xff]
  %v324 = vld [vmem:[%s0 + $0x4a4] sm:$0xff]
  %v325 = vld [vmem:[%s0 + $0x4ac] sm:$0xf]
  %v326 = vld [vmem:[%s0 + $0x4b0] sm:$0xff]
  %v327 = vld [vmem:[%s0 + $0x4b8] sm:$0xff]
  %v328 = vld [vmem:[%s0 + $0x4c0] sm:$0xf]
  %v329 = vld [vmem:[%s0 + $0x4c4] sm:$0xff]
  %v330 = vld [vmem:[%s0 + $0x4cc] sm:$0xff]
  %v331 = vld [vmem:[%s0 + $0x4d4] sm:$0xf]
  %v332 = vld [vmem:[%s0 + $0x4d8] sm:$0xff]
  %v333 = vld [vmem:[%s0 + $0x4e0] sm:$0xff]
  %v334 = vld [vmem:[%s0 + $0x4e8] sm:$0xf]
  %v335 = vld [vmem:[%s0 + $0x4ec] sm:$0xff]
  %v336 = vld [vmem:[%s0 + $0x4f4] sm:$0xff]
  %v337 = vld [vmem:[%s0 + $0x4fc] sm:$0xf]
  %v338 = vld [vmem:[%s1] sm:$0xf]
  %v339 = vld [vmem:[%s1 + $0x4] sm:$0xf]
  %v340 = vld [vmem:[%s1 + $0x8] sm:$0xf]
  %v341 = vld [vmem:[%s1 + $0xc] sm:$0xf]
  %v342 = vld [vmem:[%s1 + $0x10] sm:$0xf]
  %v343 = vld [vmem:[%s1 + $0x14] sm:$0xf]
  %v344 = vld [vmem:[%s1 + $0x18] sm:$0xf]
  %v345 = vld [vmem:[%s1 + $0x1c] sm:$0xf]
  %v346 = vld [vmem:[%s1 + $0x20] sm:$0xf]
  %v347 = vld [vmem:[%s1 + $0x24] sm:$0xf]
  %v348 = vld [vmem:[%s1 + $0x28] sm:$0xf]
  %v349 = vld [vmem:[%s1 + $0x2c] sm:$0xf]
  %v350 = vld [vmem:[%s1 + $0x30] sm:$0xf]
  %v351 = vld [vmem:[%s1 + $0x34] sm:$0xf]
  %v352 = vld [vmem:[%s1 + $0x38] sm:$0xf]
  %v353 = vld [vmem:[%s1 + $0x3c] sm:$0xf]
  %v354 = vld [vmem:[%s1 + $0x40] sm:$0xf]
  %v355 = vld [vmem:[%s1 + $0x44] sm:$0xf]
  %v356 = vld [vmem:[%s1 + $0x48] sm:$0xf]
  %v357 = vld [vmem:[%s1 + $0x4c] sm:$0xf]
  %v358 = vld [vmem:[%s1 + $0x50] sm:$0xf]
  %v359 = vld [vmem:[%s1 + $0x54] sm:$0xf]
  %v360 = vld [vmem:[%s1 + $0x58] sm:$0xf]
  %v361 = vld [vmem:[%s1 + $0x5c] sm:$0xf]
  %v362 = vld [vmem:[%s1 + $0x60] sm:$0xf]
  %v363 = vld [vmem:[%s1 + $0x64] sm:$0xf]
  %v364 = vld [vmem:[%s1 + $0x68] sm:$0xf]
  %v365 = vld [vmem:[%s1 + $0x6c] sm:$0xf]
  %v366 = vld [vmem:[%s1 + $0x70] sm:$0xf]
  %v367 = vld [vmem:[%s1 + $0x74] sm:$0xf]
  %v368 = vld [vmem:[%s1 + $0x78] sm:$0xf]
  %v369 = vld [vmem:[%s1 + $0x7c] sm:$0xf]
  %v370 = vld [vmem:[%s1 + $0x80] sm:$0xf]
  %v371 = vld [vmem:[%s1 + $0x84] sm:$0xf]
  %v372 = vld [vmem:[%s1 + $0x88] sm:$0xf]
  %v373 = vld [vmem:[%s1 + $0x8c] sm:$0xf]
  %v374 = vld [vmem:[%s1 + $0x90] sm:$0xf]
  %v375 = vld [vmem:[%s1 + $0x94] sm:$0xf]
  %v376 = vld [vmem:[%s1 + $0x98] sm:$0xf]
  %v377 = vld [vmem:[%s1 + $0x9c] sm:$0xf]
  %v378 = vld [vmem:[%s1 + $0xa0] sm:$0xf]
  %v379 = vld [vmem:[%s1 + $0xa4] sm:$0xf]
  %v380 = vld [vmem:[%s1 + $0xa8] sm:$0xf]
  %v381 = vld [vmem:[%s1 + $0xac] sm:$0xf]
  %v382 = vld [vmem:[%s1 + $0xb0] sm:$0xf]
  %v383 = vld [vmem:[%s1 + $0xb4] sm:$0xf]
  %v384 = vld [vmem:[%s1 + $0xb8] sm:$0xf]
  %v385 = vld [vmem:[%s1 + $0xbc] sm:$0xf]
  %v386 = vld [vmem:[%s1 + $0xc0] sm:$0xf]
  %v387 = vld [vmem:[%s1 + $0xc4] sm:$0xf]
  %v388 = vld [vmem:[%s1 + $0xc8] sm:$0xf]
  %v389 = vld [vmem:[%s1 + $0xcc] sm:$0xf]
  %v390 = vld [vmem:[%s1 + $0xd0] sm:$0xf]
  %v391 = vld [vmem:[%s1 + $0xd4] sm:$0xf]
  %v392 = vld [vmem:[%s1 + $0xd8] sm:$0xf]
  %v393 = vld [vmem:[%s1 + $0xdc] sm:$0xf]
  %v394 = vld [vmem:[%s1 + $0xe0] sm:$0xf]
  %v395 = vld [vmem:[%s1 + $0xe4] sm:$0xf]
  %v396 = vld [vmem:[%s1 + $0xe8] sm:$0xf]
  %v397 = vld [vmem:[%s1 + $0xec] sm:$0xf]
  %v398 = vld [vmem:[%s1 + $0xf0] sm:$0xf]
  %v399 = vld [vmem:[%s1 + $0xf4] sm:$0xf]
  %v400 = vld [vmem:[%s1 + $0xf8] sm:$0xf]
  %v401 = vld [vmem:[%s1 + $0xfc] sm:$0xf]
  %v402 = vld [vmem:[%s1 + $0x100] sm:$0xf]
  %v403 = vld [vmem:[%s1 + $0x104] sm:$0xf]
  %v404 = vld [vmem:[%s1 + $0x108] sm:$0xf]
  %v405 = vld [vmem:[%s1 + $0x10c] sm:$0xf]
  %v406 = vld [vmem:[%s1 + $0x110] sm:$0xf]
  %v407 = vld [vmem:[%s1 + $0x114] sm:$0xf]
  %v408 = vld [vmem:[%s1 + $0x118] sm:$0xf]
  %v409 = vld [vmem:[%s1 + $0x11c] sm:$0xf]
  %v410 = vld [vmem:[%s1 + $0x120] sm:$0xf]
  %v411 = vld [vmem:[%s1 + $0x124] sm:$0xf]
  %v412 = vld [vmem:[%s1 + $0x128] sm:$0xf]
  %v413 = vld [vmem:[%s1 + $0x12c] sm:$0xf]
  %v414 = vld [vmem:[%s1 + $0x130] sm:$0xf]
  %v415 = vld [vmem:[%s1 + $0x134] sm:$0xf]
  %v416 = vld [vmem:[%s1 + $0x138] sm:$0xf]
  %v417 = vld [vmem:[%s1 + $0x13c] sm:$0xf]
  %v610 = vunpack.c.l.b16 %v146
  %v611 = vunpack.c.h.b16 %v146
  %v612 = vunpack.c.l.b16 %v147
  %v613 = vunpack.c.h.b16 %v147
  %v614 = vunpack.c.l.b16 %v148
  %v615 = vunpack.c.l.b16 %v149
  %v616 = vunpack.c.h.b16 %v149
  %v617 = vunpack.c.l.b16 %v150
  %v618 = vunpack.c.h.b16 %v150
  %v619 = vunpack.c.l.b16 %v151
  %v620 = vunpack.c.l.b16 %v152
  %v621 = vunpack.c.h.b16 %v152
  %v622 = vunpack.c.l.b16 %v153
  %v623 = vunpack.c.h.b16 %v153
  %v624 = vunpack.c.l.b16 %v154
  %v625 = vunpack.c.l.b16 %v155
  %v626 = vunpack.c.h.b16 %v155
  %v627 = vunpack.c.l.b16 %v156
  %v628 = vunpack.c.h.b16 %v156
  %v629 = vunpack.c.l.b16 %v157
  %v630 = vunpack.c.l.b16 %v158
  %v631 = vunpack.c.h.b16 %v158
  %v632 = vunpack.c.l.b16 %v159
  %v633 = vunpack.c.h.b16 %v159
  %v634 = vunpack.c.l.b16 %v160
  %v635 = vunpack.c.l.b16 %v161
  %v636 = vunpack.c.h.b16 %v161
  %v637 = vunpack.c.l.b16 %v162
  %v638 = vunpack.c.h.b16 %v162
  %v639 = vunpack.c.l.b16 %v163
  %v640 = vunpack.c.l.b16 %v164
  %v641 = vunpack.c.h.b16 %v164
  %v642 = vunpack.c.l.b16 %v165
  %v643 = vunpack.c.h.b16 %v165
  %v644 = vunpack.c.l.b16 %v166
  %v645 = vunpack.c.l.b16 %v167
  %v646 = vunpack.c.h.b16 %v167
  %v647 = vunpack.c.l.b16 %v168
  %v648 = vunpack.c.h.b16 %v168
  %v649 = vunpack.c.l.b16 %v169
  %v650 = vunpack.c.l.b16 %v170
  %v651 = vunpack.c.h.b16 %v170
  %v652 = vunpack.c.l.b16 %v171
  %v653 = vunpack.c.h.b16 %v171
  %v654 = vunpack.c.l.b16 %v172
  %v655 = vunpack.c.l.b16 %v173
  %v656 = vunpack.c.h.b16 %v173
  %v657 = vunpack.c.l.b16 %v174
  %v658 = vunpack.c.h.b16 %v174
  %v659 = vunpack.c.l.b16 %v175
  %v660 = vunpack.c.l.b16 %v176
  %v661 = vunpack.c.h.b16 %v176
  %v662 = vunpack.c.l.b16 %v177
  %v663 = vunpack.c.h.b16 %v177
  %v664 = vunpack.c.l.b16 %v178
  %v665 = vunpack.c.l.b16 %v179
  %v666 = vunpack.c.h.b16 %v179
  %v667 = vunpack.c.l.b16 %v180
  %v668 = vunpack.c.h.b16 %v180
  %v669 = vunpack.c.l.b16 %v181
  %v670 = vunpack.c.l.b16 %v182
  %v671 = vunpack.c.h.b16 %v182
  %v672 = vunpack.c.l.b16 %v183
  %v673 = vunpack.c.h.b16 %v183
  %v674 = vunpack.c.l.b16 %v184
  %v675 = vunpack.c.l.b16 %v185
  %v676 = vunpack.c.h.b16 %v185
  %v677 = vunpack.c.l.b16 %v186
  %v678 = vunpack.c.h.b16 %v186
  %v679 = vunpack.c.l.b16 %v187
  %v680 = vunpack.c.l.b16 %v188
  %v681 = vunpack.c.h.b16 %v188
  %v682 = vunpack.c.l.b16 %v189
  %v683 = vunpack.c.h.b16 %v189
  %v684 = vunpack.c.l.b16 %v190
  %v685 = vunpack.c.l.b16 %v191
  %v686 = vunpack.c.h.b16 %v191
  %v687 = vunpack.c.l.b16 %v192
  %v688 = vunpack.c.h.b16 %v192
  %v689 = vunpack.c.l.b16 %v193
  %v690 = vunpack.c.l.b16 %v194
  %v691 = vunpack.c.h.b16 %v194
  %v692 = vunpack.c.l.b16 %v195
  %v693 = vunpack.c.h.b16 %v195
  %v694 = vunpack.c.l.b16 %v196
  %v695 = vunpack.c.l.b16 %v197
  %v696 = vunpack.c.h.b16 %v197
  %v697 = vunpack.c.l.b16 %v198
  %v698 = vunpack.c.h.b16 %v198
  %v699 = vunpack.c.l.b16 %v199
  %v700 = vunpack.c.l.b16 %v200
  %v701 = vunpack.c.h.b16 %v200
  %v702 = vunpack.c.l.b16 %v201
  %v703 = vunpack.c.h.b16 %v201
  %v704 = vunpack.c.l.b16 %v202
  %v705 = vunpack.c.l.b16 %v203
  %v706 = vunpack.c.h.b16 %v203
  %v707 = vunpack.c.l.b16 %v204
  %v708 = vunpack.c.h.b16 %v204
  %v709 = vunpack.c.l.b16 %v205
  %v710 = vunpack.c.l.b16 %v206
  %v711 = vunpack.c.h.b16 %v206
  %v712 = vunpack.c.l.b16 %v207
  %v713 = vunpack.c.h.b16 %v207
  %v714 = vunpack.c.l.b16 %v208
  %v715 = vunpack.c.l.b16 %v209
  %v716 = vunpack.c.h.b16 %v209
  %v717 = vunpack.c.l.b16 %v210
  %v718 = vunpack.c.h.b16 %v210
  %v719 = vunpack.c.l.b16 %v211
  %v720 = vunpack.c.l.b16 %v212
  %v721 = vunpack.c.h.b16 %v212
  %v722 = vunpack.c.l.b16 %v213
  %v723 = vunpack.c.h.b16 %v213
  %v724 = vunpack.c.l.b16 %v214
  %v725 = vunpack.c.l.b16 %v215
  %v726 = vunpack.c.h.b16 %v215
  %v727 = vunpack.c.l.b16 %v216
  %v728 = vunpack.c.h.b16 %v216
  %v729 = vunpack.c.l.b16 %v217
  %v730 = vunpack.c.l.b16 %v218
  %v731 = vunpack.c.h.b16 %v218
  %v732 = vunpack.c.l.b16 %v219
  %v733 = vunpack.c.h.b16 %v219
  %v734 = vunpack.c.l.b16 %v220
  %v735 = vunpack.c.l.b16 %v221
  %v736 = vunpack.c.h.b16 %v221
  %v737 = vunpack.c.l.b16 %v222
  %v738 = vunpack.c.h.b16 %v222
  %v739 = vunpack.c.l.b16 %v223
  %v740 = vunpack.c.l.b16 %v224
  %v741 = vunpack.c.h.b16 %v224
  %v742 = vunpack.c.l.b16 %v225
  %v743 = vunpack.c.h.b16 %v225
  %v744 = vunpack.c.l.b16 %v226
  %v745 = vunpack.c.l.b16 %v227
  %v746 = vunpack.c.h.b16 %v227
  %v747 = vunpack.c.l.b16 %v228
  %v748 = vunpack.c.h.b16 %v228
  %v749 = vunpack.c.l.b16 %v229
  %v750 = vunpack.c.l.b16 %v230
  %v751 = vunpack.c.h.b16 %v230
  %v752 = vunpack.c.l.b16 %v231
  %v753 = vunpack.c.h.b16 %v231
  %v754 = vunpack.c.l.b16 %v232
  %v755 = vunpack.c.l.b16 %v233
  %v756 = vunpack.c.h.b16 %v233
  %v757 = vunpack.c.l.b16 %v234
  %v758 = vunpack.c.h.b16 %v234
  %v759 = vunpack.c.l.b16 %v235
  %v760 = vunpack.c.l.b16 %v236
  %v761 = vunpack.c.h.b16 %v236
  %v762 = vunpack.c.l.b16 %v237
  %v763 = vunpack.c.h.b16 %v237
  %v764 = vunpack.c.l.b16 %v238
  %v765 = vunpack.c.l.b16 %v239
  %v766 = vunpack.c.h.b16 %v239
  %v767 = vunpack.c.l.b16 %v240
  %v768 = vunpack.c.h.b16 %v240
  %v769 = vunpack.c.l.b16 %v241
  %v770 = vunpack.c.l.b16 %v242
  %v771 = vunpack.c.h.b16 %v242
  %v772 = vunpack.c.l.b16 %v243
  %v773 = vunpack.c.h.b16 %v243
  %v774 = vunpack.c.l.b16 %v244
  %v775 = vunpack.c.l.b16 %v245
  %v776 = vunpack.c.h.b16 %v245
  %v777 = vunpack.c.l.b16 %v246
  %v778 = vunpack.c.h.b16 %v246
  %v779 = vunpack.c.l.b16 %v247
  %v780 = vunpack.c.l.b16 %v248
  %v781 = vunpack.c.h.b16 %v248
  %v782 = vunpack.c.l.b16 %v249
  %v783 = vunpack.c.h.b16 %v249
  %v784 = vunpack.c.l.b16 %v250
  %v785 = vunpack.c.l.b16 %v251
  %v786 = vunpack.c.h.b16 %v251
  %v787 = vunpack.c.l.b16 %v252
  %v788 = vunpack.c.h.b16 %v252
  %v789 = vunpack.c.l.b16 %v253
  %v790 = vunpack.c.l.b16 %v254
  %v791 = vunpack.c.h.b16 %v254
  %v792 = vunpack.c.l.b16 %v255
  %v793 = vunpack.c.h.b16 %v255
  %v794 = vunpack.c.l.b16 %v256
  %v795 = vunpack.c.l.b16 %v257
  %v796 = vunpack.c.h.b16 %v257
  %v797 = vunpack.c.l.b16 %v258
  %v798 = vunpack.c.h.b16 %v258
  %v799 = vunpack.c.l.b16 %v259
  %v800 = vunpack.c.l.b16 %v260
  %v801 = vunpack.c.h.b16 %v260
  %v802 = vunpack.c.l.b16 %v261
  %v803 = vunpack.c.h.b16 %v261
  %v804 = vunpack.c.l.b16 %v262
  %v805 = vunpack.c.l.b16 %v263
  %v806 = vunpack.c.h.b16 %v263
  %v807 = vunpack.c.l.b16 %v264
  %v808 = vunpack.c.h.b16 %v264
  %v809 = vunpack.c.l.b16 %v265
  %v810 = vunpack.c.l.b16 %v266
  %v811 = vunpack.c.h.b16 %v266
  %v812 = vunpack.c.l.b16 %v267
  %v813 = vunpack.c.h.b16 %v267
  %v814 = vunpack.c.l.b16 %v268
  %v815 = vunpack.c.l.b16 %v269
  %v816 = vunpack.c.h.b16 %v269
  %v817 = vunpack.c.l.b16 %v270
  %v818 = vunpack.c.h.b16 %v270
  %v819 = vunpack.c.l.b16 %v271
  %v820 = vunpack.c.l.b16 %v272
  %v821 = vunpack.c.h.b16 %v272
  %v822 = vunpack.c.l.b16 %v273
  %v823 = vunpack.c.h.b16 %v273
  %v824 = vunpack.c.l.b16 %v274
  %v825 = vunpack.c.l.b16 %v275
  %v826 = vunpack.c.h.b16 %v275
  %v827 = vunpack.c.l.b16 %v276
  %v828 = vunpack.c.h.b16 %v276
  %v829 = vunpack.c.l.b16 %v277
  %v830 = vunpack.c.l.b16 %v278
  %v831 = vunpack.c.h.b16 %v278
  %v832 = vunpack.c.l.b16 %v279
  %v833 = vunpack.c.h.b16 %v279
  %v834 = vunpack.c.l.b16 %v280
  %v835 = vunpack.c.l.b16 %v281
  %v836 = vunpack.c.h.b16 %v281
  %v837 = vunpack.c.l.b16 %v282
  %v838 = vunpack.c.h.b16 %v282
  %v839 = vunpack.c.l.b16 %v283
  %v840 = vunpack.c.l.b16 %v284
  %v841 = vunpack.c.h.b16 %v284
  %v842 = vunpack.c.l.b16 %v285
  %v843 = vunpack.c.h.b16 %v285
  %v844 = vunpack.c.l.b16 %v286
  %v845 = vunpack.c.l.b16 %v287
  %v846 = vunpack.c.h.b16 %v287
  %v847 = vunpack.c.l.b16 %v288
  %v848 = vunpack.c.h.b16 %v288
  %v849 = vunpack.c.l.b16 %v289
  %v850 = vunpack.c.l.b16 %v290
  %v851 = vunpack.c.h.b16 %v290
  %v852 = vunpack.c.l.b16 %v291
  %v853 = vunpack.c.h.b16 %v291
  %v854 = vunpack.c.l.b16 %v292
  %v855 = vunpack.c.l.b16 %v293
  %v856 = vunpack.c.h.b16 %v293
  %v857 = vunpack.c.l.b16 %v294
  %v858 = vunpack.c.h.b16 %v294
  %v859 = vunpack.c.l.b16 %v295
  %v860 = vunpack.c.l.b16 %v296
  %v861 = vunpack.c.h.b16 %v296
  %v862 = vunpack.c.l.b16 %v297
  %v863 = vunpack.c.h.b16 %v297
  %v864 = vunpack.c.l.b16 %v298
  %v865 = vunpack.c.l.b16 %v299
  %v866 = vunpack.c.h.b16 %v299
  %v867 = vunpack.c.l.b16 %v300
  %v868 = vunpack.c.h.b16 %v300
  %v869 = vunpack.c.l.b16 %v301
  %v870 = vunpack.c.l.b16 %v302
  %v871 = vunpack.c.h.b16 %v302
  %v872 = vunpack.c.l.b16 %v303
  %v873 = vunpack.c.h.b16 %v303
  %v874 = vunpack.c.l.b16 %v304
  %v875 = vunpack.c.l.b16 %v305
  %v876 = vunpack.c.h.b16 %v305
  %v877 = vunpack.c.l.b16 %v306
  %v878 = vunpack.c.h.b16 %v306
  %v879 = vunpack.c.l.b16 %v307
  %v880 = vunpack.c.l.b16 %v308
  %v881 = vunpack.c.h.b16 %v308
  %v882 = vunpack.c.l.b16 %v309
  %v883 = vunpack.c.h.b16 %v309
  %v884 = vunpack.c.l.b16 %v310
  %v885 = vunpack.c.l.b16 %v311
  %v886 = vunpack.c.h.b16 %v311
  %v887 = vunpack.c.l.b16 %v312
  %v888 = vunpack.c.h.b16 %v312
  %v889 = vunpack.c.l.b16 %v313
  %v890 = vunpack.c.l.b16 %v314
  %v891 = vunpack.c.h.b16 %v314
  %v892 = vunpack.c.l.b16 %v315
  %v893 = vunpack.c.h.b16 %v315
  %v894 = vunpack.c.l.b16 %v316
  %v895 = vunpack.c.l.b16 %v317
  %v896 = vunpack.c.h.b16 %v317
  %v897 = vunpack.c.l.b16 %v318
  %v898 = vunpack.c.h.b16 %v318
  %v899 = vunpack.c.l.b16 %v319
  %v900 = vunpack.c.l.b16 %v320
  %v901 = vunpack.c.h.b16 %v320
  %v902 = vunpack.c.l.b16 %v321
  %v903 = vunpack.c.h.b16 %v321
  %v904 = vunpack.c.l.b16 %v322
  %v905 = vunpack.c.l.b16 %v323
  %v906 = vunpack.c.h.b16 %v323
  %v907 = vunpack.c.l.b16 %v324
  %v908 = vunpack.c.h.b16 %v324
  %v909 = vunpack.c.l.b16 %v325
  %v910 = vunpack.c.l.b16 %v326
  %v911 = vunpack.c.h.b16 %v326
  %v912 = vunpack.c.l.b16 %v327
  %v913 = vunpack.c.h.b16 %v327
  %v914 = vunpack.c.l.b16 %v328
  %v915 = vunpack.c.l.b16 %v329
  %v916 = vunpack.c.h.b16 %v329
  %v917 = vunpack.c.l.b16 %v330
  %v918 = vunpack.c.h.b16 %v330
  %v919 = vunpack.c.l.b16 %v331
  %v920 = vunpack.c.l.b16 %v332
  %v921 = vunpack.c.h.b16 %v332
  %v922 = vunpack.c.l.b16 %v333
  %v923 = vunpack.c.h.b16 %v333
  %v924 = vunpack.c.l.b16 %v334
  %v925 = vunpack.c.l.b16 %v335
  %v926 = vunpack.c.h.b16 %v335
  %v927 = vunpack.c.l.b16 %v336
  %v928 = vunpack.c.h.b16 %v336
  %v929 = vunpack.c.l.b16 %v337
  %v930 = vpack.c.b16 %v615, %v610
  %v931 = vpack.c.b16 %v616, %v611
  %v932 = vpack.c.b16 %v617, %v612
  %v933 = vpack.c.b16 %v618, %v613
  %v934 = vpack.c.b16 %v619, %v614
  %v935 = vpack.c.b16 %v625, %v620
  %v936 = vpack.c.b16 %v626, %v621
  %v937 = vpack.c.b16 %v627, %v622
  %v938 = vpack.c.b16 %v628, %v623
  %v939 = vpack.c.b16 %v629, %v624
  %v940 = vpack.c.b16 %v635, %v630
  %v941 = vpack.c.b16 %v636, %v631
  %v942 = vpack.c.b16 %v637, %v632
  %v943 = vpack.c.b16 %v638, %v633
  %v944 = vpack.c.b16 %v639, %v634
  %v945 = vpack.c.b16 %v645, %v640
  %v946 = vpack.c.b16 %v646, %v641
  %v947 = vpack.c.b16 %v647, %v642
  %v948 = vpack.c.b16 %v648, %v643
  %v949 = vpack.c.b16 %v649, %v644
  %v950 = vpack.c.b16 %v655, %v650
  %v951 = vpack.c.b16 %v656, %v651
  %v952 = vpack.c.b16 %v657, %v652
  %v953 = vpack.c.b16 %v658, %v653
  %v954 = vpack.c.b16 %v659, %v654
  %v955 = vpack.c.b16 %v665, %v660
  %v956 = vpack.c.b16 %v666, %v661
  %v957 = vpack.c.b16 %v667, %v662
  %v958 = vpack.c.b16 %v668, %v663
  %v959 = vpack.c.b16 %v669, %v664
  %v960 = vpack.c.b16 %v675, %v670
  %v961 = vpack.c.b16 %v676, %v671
  %v962 = vpack.c.b16 %v677, %v672
  %v963 = vpack.c.b16 %v678, %v673
  %v964 = vpack.c.b16 %v679, %v674
  %v965 = vpack.c.b16 %v685, %v680
  %v966 = vpack.c.b16 %v686, %v681
  %v967 = vpack.c.b16 %v687, %v682
  %v968 = vpack.c.b16 %v688, %v683
  %v969 = vpack.c.b16 %v689, %v684
  %v970 = vpack.c.b16 %v695, %v690
  %v971 = vpack.c.b16 %v696, %v691
  %v972 = vpack.c.b16 %v697, %v692
  %v973 = vpack.c.b16 %v698, %v693
  %v974 = vpack.c.b16 %v699, %v694
  %v975 = vpack.c.b16 %v705, %v700
  %v976 = vpack.c.b16 %v706, %v701
  %v977 = vpack.c.b16 %v707, %v702
  %v978 = vpack.c.b16 %v708, %v703
  %v979 = vpack.c.b16 %v709, %v704
  %v980 = vpack.c.b16 %v715, %v710
  %v981 = vpack.c.b16 %v716, %v711
  %v982 = vpack.c.b16 %v717, %v712
  %v983 = vpack.c.b16 %v718, %v713
  %v984 = vpack.c.b16 %v719, %v714
  %v985 = vpack.c.b16 %v725, %v720
  %v986 = vpack.c.b16 %v726, %v721
  %v987 = vpack.c.b16 %v727, %v722
  %v988 = vpack.c.b16 %v728, %v723
  %v989 = vpack.c.b16 %v729, %v724
  %v990 = vpack.c.b16 %v735, %v730
  %v991 = vpack.c.b16 %v736, %v731
  %v992 = vpack.c.b16 %v737, %v732
  %v993 = vpack.c.b16 %v738, %v733
  %v994 = vpack.c.b16 %v739, %v734
  %v995 = vpack.c.b16 %v745, %v740
  %v996 = vpack.c.b16 %v746, %v741
  %v997 = vpack.c.b16 %v747, %v742
  %v998 = vpack.c.b16 %v748, %v743
  %v999 = vpack.c.b16 %v749, %v744
  %v1000 = vpack.c.b16 %v755, %v750
  %v1001 = vpack.c.b16 %v756, %v751
  %v1002 = vpack.c.b16 %v757, %v752
  %v1003 = vpack.c.b16 %v758, %v753
  %v1004 = vpack.c.b16 %v759, %v754
  %v1005 = vpack.c.b16 %v765, %v760
  %v1006 = vpack.c.b16 %v766, %v761
  %v1007 = vpack.c.b16 %v767, %v762
  %v1008 = vpack.c.b16 %v768, %v763
  %v1009 = vpack.c.b16 %v769, %v764
  %v1010 = vpack.c.b16 %v775, %v770
  %v1011 = vpack.c.b16 %v776, %v771
  %v1012 = vpack.c.b16 %v777, %v772
  %v1013 = vpack.c.b16 %v778, %v773
  %v1014 = vpack.c.b16 %v779, %v774
  %v1015 = vpack.c.b16 %v785, %v780
  %v1016 = vpack.c.b16 %v786, %v781
  %v1017 = vpack.c.b16 %v787, %v782
  %v1018 = vpack.c.b16 %v788, %v783
  %v1019 = vpack.c.b16 %v789, %v784
  %v1020 = vpack.c.b16 %v795, %v790
  %v1021 = vpack.c.b16 %v796, %v791
  %v1022 = vpack.c.b16 %v797, %v792
  %v1023 = vpack.c.b16 %v798, %v793
  %v1024 = vpack.c.b16 %v799, %v794
  %v1025 = vpack.c.b16 %v805, %v800
  %v1026 = vpack.c.b16 %v806, %v801
  %v1027 = vpack.c.b16 %v807, %v802
  %v1028 = vpack.c.b16 %v808, %v803
  %v1029 = vpack.c.b16 %v809, %v804
  %v1030 = vpack.c.b16 %v815, %v810
  %v1031 = vpack.c.b16 %v816, %v811
  %v1032 = vpack.c.b16 %v817, %v812
  %v1033 = vpack.c.b16 %v818, %v813
  %v1034 = vpack.c.b16 %v819, %v814
  %v1035 = vpack.c.b16 %v825, %v820
  %v1036 = vpack.c.b16 %v826, %v821
  %v1037 = vpack.c.b16 %v827, %v822
  %v1038 = vpack.c.b16 %v828, %v823
  %v1039 = vpack.c.b16 %v829, %v824
  %v1040 = vpack.c.b16 %v835, %v830
  %v1041 = vpack.c.b16 %v836, %v831
  %v1042 = vpack.c.b16 %v837, %v832
  %v1043 = vpack.c.b16 %v838, %v833
  %v1044 = vpack.c.b16 %v839, %v834
  %v1045 = vpack.c.b16 %v845, %v840
  %v1046 = vpack.c.b16 %v846, %v841
  %v1047 = vpack.c.b16 %v847, %v842
  %v1048 = vpack.c.b16 %v848, %v843
  %v1049 = vpack.c.b16 %v849, %v844
  %v1050 = vpack.c.b16 %v855, %v850
  %v1051 = vpack.c.b16 %v856, %v851
  %v1052 = vpack.c.b16 %v857, %v852
  %v1053 = vpack.c.b16 %v858, %v853
  %v1054 = vpack.c.b16 %v859, %v854
  %v1055 = vpack.c.b16 %v865, %v860
  %v1056 = vpack.c.b16 %v866, %v861
  %v1057 = vpack.c.b16 %v867, %v862
  %v1058 = vpack.c.b16 %v868, %v863
  %v1059 = vpack.c.b16 %v869, %v864
  %v1060 = vpack.c.b16 %v875, %v870
  %v1061 = vpack.c.b16 %v876, %v871
  %v1062 = vpack.c.b16 %v877, %v872
  %v1063 = vpack.c.b16 %v878, %v873
  %v1064 = vpack.c.b16 %v879, %v874
  %v1065 = vpack.c.b16 %v885, %v880
  %v1066 = vpack.c.b16 %v886, %v881
  %v1067 = vpack.c.b16 %v887, %v882
  %v1068 = vpack.c.b16 %v888, %v883
  %v1069 = vpack.c.b16 %v889, %v884
  %v1070 = vpack.c.b16 %v895, %v890
  %v1071 = vpack.c.b16 %v896, %v891
  %v1072 = vpack.c.b16 %v897, %v892
  %v1073 = vpack.c.b16 %v898, %v893
  %v1074 = vpack.c.b16 %v899, %v894
  %v1075 = vpack.c.b16 %v905, %v900
  %v1076 = vpack.c.b16 %v906, %v901
  %v1077 = vpack.c.b16 %v907, %v902
  %v1078 = vpack.c.b16 %v908, %v903
  %v1079 = vpack.c.b16 %v909, %v904
  %v1080 = vpack.c.b16 %v915, %v910
  %v1081 = vpack.c.b16 %v916, %v911
  %v1082 = vpack.c.b16 %v917, %v912
  %v1083 = vpack.c.b16 %v918, %v913
  %v1084 = vpack.c.b16 %v919, %v914
  %v1085 = vpack.c.b16 %v925, %v920
  %v1086 = vpack.c.b16 %v926, %v921
  %v1087 = vpack.c.b16 %v927, %v922
  %v1088 = vpack.c.b16 %v928, %v923
  %v1089 = vpack.c.b16 %v929, %v924
  %v1330 = vunpack.c.l.b16 %v338
  %v1331 = vunpack.c.l.b16 %v339
  %v1332 = vunpack.c.l.b16 %v340
  %v1333 = vunpack.c.l.b16 %v341
  %v1334 = vunpack.c.l.b16 %v342
  %v1335 = vunpack.c.l.b16 %v343
  %v1336 = vunpack.c.l.b16 %v344
  %v1337 = vunpack.c.l.b16 %v345
  %v1338 = vunpack.c.l.b16 %v346
  %v1339 = vunpack.c.l.b16 %v347
  %v1340 = vunpack.c.l.b16 %v348
  %v1341 = vunpack.c.l.b16 %v349
  %v1342 = vunpack.c.l.b16 %v350
  %v1343 = vunpack.c.l.b16 %v351
  %v1344 = vunpack.c.l.b16 %v352
  %v1345 = vunpack.c.l.b16 %v353
  %v1346 = vunpack.c.l.b16 %v354
  %v1347 = vunpack.c.l.b16 %v355
  %v1348 = vunpack.c.l.b16 %v356
  %v1349 = vunpack.c.l.b16 %v357
  %v1350 = vunpack.c.l.b16 %v358
  %v1351 = vunpack.c.l.b16 %v359
  %v1352 = vunpack.c.l.b16 %v360
  %v1353 = vunpack.c.l.b16 %v361
  %v1354 = vunpack.c.l.b16 %v362
  %v1355 = vunpack.c.l.b16 %v363
  %v1356 = vunpack.c.l.b16 %v364
  %v1357 = vunpack.c.l.b16 %v365
  %v1358 = vunpack.c.l.b16 %v366
  %v1359 = vunpack.c.l.b16 %v367
  %v1360 = vunpack.c.l.b16 %v368
  %v1361 = vunpack.c.l.b16 %v369
  %v1362 = vunpack.c.l.b16 %v370
  %v1363 = vunpack.c.l.b16 %v371
  %v1364 = vunpack.c.l.b16 %v372
  %v1365 = vunpack.c.l.b16 %v373
  %v1366 = vunpack.c.l.b16 %v374
  %v1367 = vunpack.c.l.b16 %v375
  %v1368 = vunpack.c.l.b16 %v376
  %v1369 = vunpack.c.l.b16 %v377
  %v1370 = vunpack.c.l.b16 %v378
  %v1371 = vunpack.c.l.b16 %v379
  %v1372 = vunpack.c.l.b16 %v380
  %v1373 = vunpack.c.l.b16 %v381
  %v1374 = vunpack.c.l.b16 %v382
  %v1375 = vunpack.c.l.b16 %v383
  %v1376 = vunpack.c.l.b16 %v384
  %v1377 = vunpack.c.l.b16 %v385
  %v1378 = vunpack.c.l.b16 %v386
  %v1379 = vunpack.c.l.b16 %v387
  %v1380 = vunpack.c.l.b16 %v388
  %v1381 = vunpack.c.l.b16 %v389
  %v1382 = vunpack.c.l.b16 %v390
  %v1383 = vunpack.c.l.b16 %v391
  %v1384 = vunpack.c.l.b16 %v392
  %v1385 = vunpack.c.l.b16 %v393
  %v1386 = vunpack.c.l.b16 %v394
  %v1387 = vunpack.c.l.b16 %v395
  %v1388 = vunpack.c.l.b16 %v396
  %v1389 = vunpack.c.l.b16 %v397
  %v1390 = vunpack.c.l.b16 %v398
  %v1391 = vunpack.c.l.b16 %v399
  %v1392 = vunpack.c.l.b16 %v400
  %v1393 = vunpack.c.l.b16 %v401
  %v1394 = vunpack.c.l.b16 %v402
  %v1395 = vunpack.c.l.b16 %v403
  %v1396 = vunpack.c.l.b16 %v404
  %v1397 = vunpack.c.l.b16 %v405
  %v1398 = vunpack.c.l.b16 %v406
  %v1399 = vunpack.c.l.b16 %v407
  %v1400 = vunpack.c.l.b16 %v408
  %v1401 = vunpack.c.l.b16 %v409
  %v1402 = vunpack.c.l.b16 %v410
  %v1403 = vunpack.c.l.b16 %v411
  %v1404 = vunpack.c.l.b16 %v412
  %v1405 = vunpack.c.l.b16 %v413
  %v1406 = vunpack.c.l.b16 %v414
  %v1407 = vunpack.c.l.b16 %v415
  %v1408 = vunpack.c.l.b16 %v416
  %v1409 = vunpack.c.l.b16 %v417
  %v1410 = vpack.c.b16 %v1331, %v1330
  %v1411 = vpack.c.b16 %v1333, %v1332
  %v1412 = vpack.c.b16 %v1335, %v1334
  %v1413 = vpack.c.b16 %v1337, %v1336
  %v1414 = vpack.c.b16 %v1339, %v1338
  %v1415 = vpack.c.b16 %v1341, %v1340
  %v1416 = vpack.c.b16 %v1343, %v1342
  %v1417 = vpack.c.b16 %v1345, %v1344
  %v1418 = vpack.c.b16 %v1347, %v1346
  %v1419 = vpack.c.b16 %v1349, %v1348
  %v1420 = vpack.c.b16 %v1351, %v1350
  %v1421 = vpack.c.b16 %v1353, %v1352
  %v1422 = vpack.c.b16 %v1355, %v1354
  %v1423 = vpack.c.b16 %v1357, %v1356
  %v1424 = vpack.c.b16 %v1359, %v1358
  %v1425 = vpack.c.b16 %v1361, %v1360
  %v1426 = vpack.c.b16 %v1363, %v1362
  %v1427 = vpack.c.b16 %v1365, %v1364
  %v1428 = vpack.c.b16 %v1367, %v1366
  %v1429 = vpack.c.b16 %v1369, %v1368
  %v1430 = vpack.c.b16 %v1371, %v1370
  %v1431 = vpack.c.b16 %v1373, %v1372
  %v1432 = vpack.c.b16 %v1375, %v1374
  %v1433 = vpack.c.b16 %v1377, %v1376
  %v1434 = vpack.c.b16 %v1379, %v1378
  %v1435 = vpack.c.b16 %v1381, %v1380
  %v1436 = vpack.c.b16 %v1383, %v1382
  %v1437 = vpack.c.b16 %v1385, %v1384
  %v1438 = vpack.c.b16 %v1387, %v1386
  %v1439 = vpack.c.b16 %v1389, %v1388
  %v1440 = vpack.c.b16 %v1391, %v1390
  %v1441 = vpack.c.b16 %v1393, %v1392
  %v1442 = vpack.c.b16 %v1395, %v1394
  %v1443 = vpack.c.b16 %v1397, %v1396
  %v1444 = vpack.c.b16 %v1399, %v1398
  %v1445 = vpack.c.b16 %v1401, %v1400
  %v1446 = vpack.c.b16 %v1403, %v1402
  %v1447 = vpack.c.b16 %v1405, %v1404
  %v1448 = vpack.c.b16 %v1407, %v1406
  %v1449 = vpack.c.b16 %v1409, %v1408
  %1490 = vmatpush.bf16.msra.mxu0 %v1417
  %1491 = vmatpush.bf16.msra.mxu0 %v1416
  %1492 = vmatpush.bf16.msra.mxu0 %v1415
  %1493 = vmatpush.bf16.msra.mxu0 %v1414
  %1494 = vmatpush.bf16.msra.mxu0 %v1413
  %1495 = vmatpush.bf16.msra.mxu0 %v1412
  %1496 = vmatpush.bf16.msra.mxu0 %v1411
  %1497 = vmatpush.bf16.msra.mxu0 %v1410
  %1498 = vmatmul.bf16.gmra.mxu0 %v930
  %v1499 = vpop.f32.mrf.mxu0
  %v1500 = vadd.f32 0.0, %v1499
  %v1501 = vpop.f32.mrf.mxu0
  %v1502 = vadd.f32 0.0, %v1501
  %1503 = vmatmul.bf16.gmra.mxu0 %v935
  %v1504 = vpop.f32.mrf.mxu0
  %v1505 = vadd.f32 0.0, %v1504
  %v1506 = vpop.f32.mrf.mxu0
  %v1507 = vadd.f32 0.0, %v1506
  %1508 = vmatmul.bf16.gmra.mxu0 %v940
  %v1509 = vpop.f32.mrf.mxu0
  %v1510 = vadd.f32 0.0, %v1509
  %v1511 = vpop.f32.mrf.mxu0
  %v1512 = vadd.f32 0.0, %v1511
  %1513 = vmatmul.bf16.gmra.mxu0 %v945
  %v1514 = vpop.f32.mrf.mxu0
  %v1515 = vadd.f32 0.0, %v1514
  %v1516 = vpop.f32.mrf.mxu0
  %v1517 = vadd.f32 0.0, %v1516
  %1518 = vmatmul.bf16.gmra.mxu0 %v950
  %v1519 = vpop.f32.mrf.mxu0
  %v1520 = vadd.f32 0.0, %v1519
  %v1521 = vpop.f32.mrf.mxu0
  %v1522 = vadd.f32 0.0, %v1521
  %1523 = vmatmul.bf16.gmra.mxu0 %v955
  %v1524 = vpop.f32.mrf.mxu0
  %v1525 = vadd.f32 0.0, %v1524
  %v1526 = vpop.f32.mrf.mxu0
  %v1527 = vadd.f32 0.0, %v1526
  %1528 = vmatmul.bf16.gmra.mxu0 %v960
  %v1529 = vpop.f32.mrf.mxu0
  %v1530 = vadd.f32 0.0, %v1529
  %v1531 = vpop.f32.mrf.mxu0
  %v1532 = vadd.f32 0.0, %v1531
  %1533 = vmatmul.bf16.gmra.mxu0 %v965
  %v1534 = vpop.f32.mrf.mxu0
  %v1535 = vadd.f32 0.0, %v1534
  %v1536 = vpop.f32.mrf.mxu0
  %v1537 = vadd.f32 0.0, %v1536
  %1538 = vmatmul.bf16.gmra.mxu0 %v970
  %v1539 = vpop.f32.mrf.mxu0
  %v1540 = vadd.f32 0.0, %v1539
  %v1541 = vpop.f32.mrf.mxu0
  %v1542 = vadd.f32 0.0, %v1541
  %1543 = vmatmul.bf16.gmra.mxu0 %v975
  %v1544 = vpop.f32.mrf.mxu0
  %v1545 = vadd.f32 0.0, %v1544
  %v1546 = vpop.f32.mrf.mxu0
  %v1547 = vadd.f32 0.0, %v1546
  %1548 = vmatmul.bf16.gmra.mxu0 %v980
  %v1549 = vpop.f32.mrf.mxu0
  %v1550 = vadd.f32 0.0, %v1549
  %v1551 = vpop.f32.mrf.mxu0
  %v1552 = vadd.f32 0.0, %v1551
  %1553 = vmatmul.bf16.gmra.mxu0 %v985
  %v1554 = vpop.f32.mrf.mxu0
  %v1555 = vadd.f32 0.0, %v1554
  %v1556 = vpop.f32.mrf.mxu0
  %v1557 = vadd.f32 0.0, %v1556
  %1558 = vmatmul.bf16.gmra.mxu0 %v990
  %v1559 = vpop.f32.mrf.mxu0
  %v1560 = vadd.f32 0.0, %v1559
  %v1561 = vpop.f32.mrf.mxu0
  %v1562 = vadd.f32 0.0, %v1561
  %1563 = vmatmul.bf16.gmra.mxu0 %v995
  %v1564 = vpop.f32.mrf.mxu0
  %v1565 = vadd.f32 0.0, %v1564
  %v1566 = vpop.f32.mrf.mxu0
  %v1567 = vadd.f32 0.0, %v1566
  %1568 = vmatmul.bf16.gmra.mxu0 %v1000
  %v1569 = vpop.f32.mrf.mxu0
  %v1570 = vadd.f32 0.0, %v1569
  %v1571 = vpop.f32.mrf.mxu0
  %v1572 = vadd.f32 0.0, %v1571
  %1573 = vmatmul.bf16.gmra.mxu0 %v1005
  %v1574 = vpop.f32.mrf.mxu0
  %v1575 = vadd.f32 0.0, %v1574
  %v1576 = vpop.f32.mrf.mxu0
  %v1577 = vadd.f32 0.0, %v1576
  %1578 = vmatmul.bf16.gmra.mxu0 %v1010
  %v1579 = vpop.f32.mrf.mxu0
  %v1580 = vadd.f32 0.0, %v1579
  %v1581 = vpop.f32.mrf.mxu0
  %v1582 = vadd.f32 0.0, %v1581
  %1583 = vmatmul.bf16.gmra.mxu0 %v1015
  %v1584 = vpop.f32.mrf.mxu0
  %v1585 = vadd.f32 0.0, %v1584
  %v1586 = vpop.f32.mrf.mxu0
  %v1587 = vadd.f32 0.0, %v1586
  %1588 = vmatmul.bf16.gmra.mxu0 %v1020
  %v1589 = vpop.f32.mrf.mxu0
  %v1590 = vadd.f32 0.0, %v1589
  %v1591 = vpop.f32.mrf.mxu0
  %v1592 = vadd.f32 0.0, %v1591
  %1593 = vmatmul.bf16.gmra.mxu0 %v1025
  %v1594 = vpop.f32.mrf.mxu0
  %v1595 = vadd.f32 0.0, %v1594
  %v1596 = vpop.f32.mrf.mxu0
  %v1597 = vadd.f32 0.0, %v1596
  %1598 = vmatmul.bf16.gmra.mxu0 %v1030
  %v1599 = vpop.f32.mrf.mxu0
  %v1600 = vadd.f32 0.0, %v1599
  %v1601 = vpop.f32.mrf.mxu0
  %v1602 = vadd.f32 0.0, %v1601
  %1603 = vmatmul.bf16.gmra.mxu0 %v1035
  %v1604 = vpop.f32.mrf.mxu0
  %v1605 = vadd.f32 0.0, %v1604
  %v1606 = vpop.f32.mrf.mxu0
  %v1607 = vadd.f32 0.0, %v1606
  %1608 = vmatmul.bf16.gmra.mxu0 %v1040
  %v1609 = vpop.f32.mrf.mxu0
  %v1610 = vadd.f32 0.0, %v1609
  %v1611 = vpop.f32.mrf.mxu0
  %v1612 = vadd.f32 0.0, %v1611
  %1613 = vmatmul.bf16.gmra.mxu0 %v1045
  %v1614 = vpop.f32.mrf.mxu0
  %v1615 = vadd.f32 0.0, %v1614
  %v1616 = vpop.f32.mrf.mxu0
  %v1617 = vadd.f32 0.0, %v1616
  %1618 = vmatmul.bf16.gmra.mxu0 %v1050
  %v1619 = vpop.f32.mrf.mxu0
  %v1620 = vadd.f32 0.0, %v1619
  %v1621 = vpop.f32.mrf.mxu0
  %v1622 = vadd.f32 0.0, %v1621
  %1623 = vmatmul.bf16.gmra.mxu0 %v1055
  %v1624 = vpop.f32.mrf.mxu0
  %v1625 = vadd.f32 0.0, %v1624
  %v1626 = vpop.f32.mrf.mxu0
  %v1627 = vadd.f32 0.0, %v1626
  %1628 = vmatmul.bf16.gmra.mxu0 %v1060
  %v1629 = vpop.f32.mrf.mxu0
  %v1630 = vadd.f32 0.0, %v1629
  %v1631 = vpop.f32.mrf.mxu0
  %v1632 = vadd.f32 0.0, %v1631
  %1633 = vmatmul.bf16.gmra.mxu0 %v1065
  %v1634 = vpop.f32.mrf.mxu0
  %v1635 = vadd.f32 0.0, %v1634
  %v1636 = vpop.f32.mrf.mxu0
  %v1637 = vadd.f32 0.0, %v1636
  %1638 = vmatmul.bf16.gmra.mxu0 %v1070
  %v1639 = vpop.f32.mrf.mxu0
  %v1640 = vadd.f32 0.0, %v1639
  %v1641 = vpop.f32.mrf.mxu0
  %v1642 = vadd.f32 0.0, %v1641
  %1643 = vmatmul.bf16.gmra.mxu0 %v1075
  %v1644 = vpop.f32.mrf.mxu0
  %v1645 = vadd.f32 0.0, %v1644
  %v1646 = vpop.f32.mrf.mxu0
  %v1647 = vadd.f32 0.0, %v1646
  %1648 = vmatmul.bf16.gmra.mxu0 %v1080
  %v1649 = vpop.f32.mrf.mxu0
  %v1650 = vadd.f32 0.0, %v1649
  %v1651 = vpop.f32.mrf.mxu0
  %v1652 = vadd.f32 0.0, %v1651
  %1653 = vmatmul.bf16.gmra.mxu0 %v1085
  %v1654 = vpop.f32.mrf.mxu0
  %v1655 = vadd.f32 0.0, %v1654
  %v1656 = vpop.f32.mrf.mxu0
  %v1657 = vadd.f32 0.0, %v1656
  %1658 = vdwg.mxu0
  %1659 = vmatpush.bf16.msra.mxu0 %v1425
  %1660 = vmatpush.bf16.msra.mxu0 %v1424
  %1661 = vmatpush.bf16.msra.mxu0 %v1423
  %1662 = vmatpush.bf16.msra.mxu0 %v1422
  %1663 = vmatpush.bf16.msra.mxu0 %v1421
  %1664 = vmatpush.bf16.msra.mxu0 %v1420
  %1665 = vmatpush.bf16.msra.mxu0 %v1419
  %1666 = vmatpush.bf16.msra.mxu0 %v1418
  %1667 = vmatmul.bf16.gmra.mxu0 %v931
  %v1668 = vpop.f32.mrf.mxu0
  %v1669 = vadd.f32 %v1500, %v1668
  %v1670 = vpop.f32.mrf.mxu0
  %v1671 = vadd.f32 %v1502, %v1670
  %1672 = vmatmul.bf16.gmra.mxu0 %v936
  %v1673 = vpop.f32.mrf.mxu0
  %v1674 = vadd.f32 %v1505, %v1673
  %v1675 = vpop.f32.mrf.mxu0
  %v1676 = vadd.f32 %v1507, %v1675
  %1677 = vmatmul.bf16.gmra.mxu0 %v941
  %v1678 = vpop.f32.mrf.mxu0
  %v1679 = vadd.f32 %v1510, %v1678
  %v1680 = vpop.f32.mrf.mxu0
  %v1681 = vadd.f32 %v1512, %v1680
  %1682 = vmatmul.bf16.gmra.mxu0 %v946
  %v1683 = vpop.f32.mrf.mxu0
  %v1684 = vadd.f32 %v1515, %v1683
  %v1685 = vpop.f32.mrf.mxu0
  %v1686 = vadd.f32 %v1517, %v1685
  %1687 = vmatmul.bf16.gmra.mxu0 %v951
  %v1688 = vpop.f32.mrf.mxu0
  %v1689 = vadd.f32 %v1520, %v1688
  %v1690 = vpop.f32.mrf.mxu0
  %v1691 = vadd.f32 %v1522, %v1690
  %1692 = vmatmul.bf16.gmra.mxu0 %v956
  %v1693 = vpop.f32.mrf.mxu0
  %v1694 = vadd.f32 %v1525, %v1693
  %v1695 = vpop.f32.mrf.mxu0
  %v1696 = vadd.f32 %v1527, %v1695
  %1697 = vmatmul.bf16.gmra.mxu0 %v961
  %v1698 = vpop.f32.mrf.mxu0
  %v1699 = vadd.f32 %v1530, %v1698
  %v1700 = vpop.f32.mrf.mxu0
  %v1701 = vadd.f32 %v1532, %v1700
  %1702 = vmatmul.bf16.gmra.mxu0 %v966
  %v1703 = vpop.f32.mrf.mxu0
  %v1704 = vadd.f32 %v1535, %v1703
  %v1705 = vpop.f32.mrf.mxu0
  %v1706 = vadd.f32 %v1537, %v1705
  %1707 = vmatmul.bf16.gmra.mxu0 %v971
  %v1708 = vpop.f32.mrf.mxu0
  %v1709 = vadd.f32 %v1540, %v1708
  %v1710 = vpop.f32.mrf.mxu0
  %v1711 = vadd.f32 %v1542, %v1710
  %1712 = vmatmul.bf16.gmra.mxu0 %v976
  %v1713 = vpop.f32.mrf.mxu0
  %v1714 = vadd.f32 %v1545, %v1713
  %v1715 = vpop.f32.mrf.mxu0
  %v1716 = vadd.f32 %v1547, %v1715
  %1717 = vmatmul.bf16.gmra.mxu0 %v981
  %v1718 = vpop.f32.mrf.mxu0
  %v1719 = vadd.f32 %v1550, %v1718
  %v1720 = vpop.f32.mrf.mxu0
  %v1721 = vadd.f32 %v1552, %v1720
  %1722 = vmatmul.bf16.gmra.mxu0 %v986
  %v1723 = vpop.f32.mrf.mxu0
  %v1724 = vadd.f32 %v1555, %v1723
  %v1725 = vpop.f32.mrf.mxu0
  %v1726 = vadd.f32 %v1557, %v1725
  %1727 = vmatmul.bf16.gmra.mxu0 %v991
  %v1728 = vpop.f32.mrf.mxu0
  %v1729 = vadd.f32 %v1560, %v1728
  %v1730 = vpop.f32.mrf.mxu0
  %v1731 = vadd.f32 %v1562, %v1730
  %1732 = vmatmul.bf16.gmra.mxu0 %v996
  %v1733 = vpop.f32.mrf.mxu0
  %v1734 = vadd.f32 %v1565, %v1733
  %v1735 = vpop.f32.mrf.mxu0
  %v1736 = vadd.f32 %v1567, %v1735
  %1737 = vmatmul.bf16.gmra.mxu0 %v1001
  %v1738 = vpop.f32.mrf.mxu0
  %v1739 = vadd.f32 %v1570, %v1738
  %v1740 = vpop.f32.mrf.mxu0
  %v1741 = vadd.f32 %v1572, %v1740
  %1742 = vmatmul.bf16.gmra.mxu0 %v1006
  %v1743 = vpop.f32.mrf.mxu0
  %v1744 = vadd.f32 %v1575, %v1743
  %v1745 = vpop.f32.mrf.mxu0
  %v1746 = vadd.f32 %v1577, %v1745
  %1747 = vmatmul.bf16.gmra.mxu0 %v1011
  %v1748 = vpop.f32.mrf.mxu0
  %v1749 = vadd.f32 %v1580, %v1748
  %v1750 = vpop.f32.mrf.mxu0
  %v1751 = vadd.f32 %v1582, %v1750
  %1752 = vmatmul.bf16.gmra.mxu0 %v1016
  %v1753 = vpop.f32.mrf.mxu0
  %v1754 = vadd.f32 %v1585, %v1753
  %v1755 = vpop.f32.mrf.mxu0
  %v1756 = vadd.f32 %v1587, %v1755
  %1757 = vmatmul.bf16.gmra.mxu0 %v1021
  %v1758 = vpop.f32.mrf.mxu0
  %v1759 = vadd.f32 %v1590, %v1758
  %v1760 = vpop.f32.mrf.mxu0
  %v1761 = vadd.f32 %v1592, %v1760
  %1762 = vmatmul.bf16.gmra.mxu0 %v1026
  %v1763 = vpop.f32.mrf.mxu0
  %v1764 = vadd.f32 %v1595, %v1763
  %v1765 = vpop.f32.mrf.mxu0
  %v1766 = vadd.f32 %v1597, %v1765
  %1767 = vmatmul.bf16.gmra.mxu0 %v1031
  %v1768 = vpop.f32.mrf.mxu0
  %v1769 = vadd.f32 %v1600, %v1768
  %v1770 = vpop.f32.mrf.mxu0
  %v1771 = vadd.f32 %v1602, %v1770
  %1772 = vmatmul.bf16.gmra.mxu0 %v1036
  %v1773 = vpop.f32.mrf.mxu0
  %v1774 = vadd.f32 %v1605, %v1773
  %v1775 = vpop.f32.mrf.mxu0
  %v1776 = vadd.f32 %v1607, %v1775
  %1777 = vmatmul.bf16.gmra.mxu0 %v1041
  %v1778 = vpop.f32.mrf.mxu0
  %v1779 = vadd.f32 %v1610, %v1778
  %v1780 = vpop.f32.mrf.mxu0
  %v1781 = vadd.f32 %v1612, %v1780
  %1782 = vmatmul.bf16.gmra.mxu0 %v1046
  %v1783 = vpop.f32.mrf.mxu0
  %v1784 = vadd.f32 %v1615, %v1783
  %v1785 = vpop.f32.mrf.mxu0
  %v1786 = vadd.f32 %v1617, %v1785
  %1787 = vmatmul.bf16.gmra.mxu0 %v1051
  %v1788 = vpop.f32.mrf.mxu0
  %v1789 = vadd.f32 %v1620, %v1788
  %v1790 = vpop.f32.mrf.mxu0
  %v1791 = vadd.f32 %v1622, %v1790
  %1792 = vmatmul.bf16.gmra.mxu0 %v1056
  %v1793 = vpop.f32.mrf.mxu0
  %v1794 = vadd.f32 %v1625, %v1793
  %v1795 = vpop.f32.mrf.mxu0
  %v1796 = vadd.f32 %v1627, %v1795
  %1797 = vmatmul.bf16.gmra.mxu0 %v1061
  %v1798 = vpop.f32.mrf.mxu0
  %v1799 = vadd.f32 %v1630, %v1798
  %v1800 = vpop.f32.mrf.mxu0
  %v1801 = vadd.f32 %v1632, %v1800
  %1802 = vmatmul.bf16.gmra.mxu0 %v1066
  %v1803 = vpop.f32.mrf.mxu0
  %v1804 = vadd.f32 %v1635, %v1803
  %v1805 = vpop.f32.mrf.mxu0
  %v1806 = vadd.f32 %v1637, %v1805
  %1807 = vmatmul.bf16.gmra.mxu0 %v1071
  %v1808 = vpop.f32.mrf.mxu0
  %v1809 = vadd.f32 %v1640, %v1808
  %v1810 = vpop.f32.mrf.mxu0
  %v1811 = vadd.f32 %v1642, %v1810
  %1812 = vmatmul.bf16.gmra.mxu0 %v1076
  %v1813 = vpop.f32.mrf.mxu0
  %v1814 = vadd.f32 %v1645, %v1813
  %v1815 = vpop.f32.mrf.mxu0
  %v1816 = vadd.f32 %v1647, %v1815
  %1817 = vmatmul.bf16.gmra.mxu0 %v1081
  %v1818 = vpop.f32.mrf.mxu0
  %v1819 = vadd.f32 %v1650, %v1818
  %v1820 = vpop.f32.mrf.mxu0
  %v1821 = vadd.f32 %v1652, %v1820
  %1822 = vmatmul.bf16.gmra.mxu0 %v1086
  %v1823 = vpop.f32.mrf.mxu0
  %v1824 = vadd.f32 %v1655, %v1823
  %v1825 = vpop.f32.mrf.mxu0
  %v1826 = vadd.f32 %v1657, %v1825
  %1827 = vdwg.mxu0
  %1828 = vmatpush.bf16.msra.mxu0 %v1433
  %1829 = vmatpush.bf16.msra.mxu0 %v1432
  %1830 = vmatpush.bf16.msra.mxu0 %v1431
  %1831 = vmatpush.bf16.msra.mxu0 %v1430
  %1832 = vmatpush.bf16.msra.mxu0 %v1429
  %1833 = vmatpush.bf16.msra.mxu0 %v1428
  %1834 = vmatpush.bf16.msra.mxu0 %v1427
  %1835 = vmatpush.bf16.msra.mxu0 %v1426
  %1836 = vmatmul.bf16.gmra.mxu0 %v932
  %v1837 = vpop.f32.mrf.mxu0
  %v1838 = vadd.f32 %v1669, %v1837
  %v1839 = vpop.f32.mrf.mxu0
  %v1840 = vadd.f32 %v1671, %v1839
  %1841 = vmatmul.bf16.gmra.mxu0 %v937
  %v1842 = vpop.f32.mrf.mxu0
  %v1843 = vadd.f32 %v1674, %v1842
  %v1844 = vpop.f32.mrf.mxu0
  %v1845 = vadd.f32 %v1676, %v1844
  %1846 = vmatmul.bf16.gmra.mxu0 %v942
  %v1847 = vpop.f32.mrf.mxu0
  %v1848 = vadd.f32 %v1679, %v1847
  %v1849 = vpop.f32.mrf.mxu0
  %v1850 = vadd.f32 %v1681, %v1849
  %1851 = vmatmul.bf16.gmra.mxu0 %v947
  %v1852 = vpop.f32.mrf.mxu0
  %v1853 = vadd.f32 %v1684, %v1852
  %v1854 = vpop.f32.mrf.mxu0
  %v1855 = vadd.f32 %v1686, %v1854
  %1856 = vmatmul.bf16.gmra.mxu0 %v952
  %v1857 = vpop.f32.mrf.mxu0
  %v1858 = vadd.f32 %v1689, %v1857
  %v1859 = vpop.f32.mrf.mxu0
  %v1860 = vadd.f32 %v1691, %v1859
  %1861 = vmatmul.bf16.gmra.mxu0 %v957
  %v1862 = vpop.f32.mrf.mxu0
  %v1863 = vadd.f32 %v1694, %v1862
  %v1864 = vpop.f32.mrf.mxu0
  %v1865 = vadd.f32 %v1696, %v1864
  %1866 = vmatmul.bf16.gmra.mxu0 %v962
  %v1867 = vpop.f32.mrf.mxu0
  %v1868 = vadd.f32 %v1699, %v1867
  %v1869 = vpop.f32.mrf.mxu0
  %v1870 = vadd.f32 %v1701, %v1869
  %1871 = vmatmul.bf16.gmra.mxu0 %v967
  %v1872 = vpop.f32.mrf.mxu0
  %v1873 = vadd.f32 %v1704, %v1872
  %v1874 = vpop.f32.mrf.mxu0
  %v1875 = vadd.f32 %v1706, %v1874
  %1876 = vmatmul.bf16.gmra.mxu0 %v972
  %v1877 = vpop.f32.mrf.mxu0
  %v1878 = vadd.f32 %v1709, %v1877
  %v1879 = vpop.f32.mrf.mxu0
  %v1880 = vadd.f32 %v1711, %v1879
  %1881 = vmatmul.bf16.gmra.mxu0 %v977
  %v1882 = vpop.f32.mrf.mxu0
  %v1883 = vadd.f32 %v1714, %v1882
  %v1884 = vpop.f32.mrf.mxu0
  %v1885 = vadd.f32 %v1716, %v1884
  %1886 = vmatmul.bf16.gmra.mxu0 %v982
  %v1887 = vpop.f32.mrf.mxu0
  %v1888 = vadd.f32 %v1719, %v1887
  %v1889 = vpop.f32.mrf.mxu0
  %v1890 = vadd.f32 %v1721, %v1889
  %1891 = vmatmul.bf16.gmra.mxu0 %v987
  %v1892 = vpop.f32.mrf.mxu0
  %v1893 = vadd.f32 %v1724, %v1892
  %v1894 = vpop.f32.mrf.mxu0
  %v1895 = vadd.f32 %v1726, %v1894
  %1896 = vmatmul.bf16.gmra.mxu0 %v992
  %v1897 = vpop.f32.mrf.mxu0
  %v1898 = vadd.f32 %v1729, %v1897
  %v1899 = vpop.f32.mrf.mxu0
  %v1900 = vadd.f32 %v1731, %v1899
  %1901 = vmatmul.bf16.gmra.mxu0 %v997
  %v1902 = vpop.f32.mrf.mxu0
  %v1903 = vadd.f32 %v1734, %v1902
  %v1904 = vpop.f32.mrf.mxu0
  %v1905 = vadd.f32 %v1736, %v1904
  %1906 = vmatmul.bf16.gmra.mxu0 %v1002
  %v1907 = vpop.f32.mrf.mxu0
  %v1908 = vadd.f32 %v1739, %v1907
  %v1909 = vpop.f32.mrf.mxu0
  %v1910 = vadd.f32 %v1741, %v1909
  %1911 = vmatmul.bf16.gmra.mxu0 %v1007
  %v1912 = vpop.f32.mrf.mxu0
  %v1913 = vadd.f32 %v1744, %v1912
  %v1914 = vpop.f32.mrf.mxu0
  %v1915 = vadd.f32 %v1746, %v1914
  %1916 = vmatmul.bf16.gmra.mxu0 %v1012
  %v1917 = vpop.f32.mrf.mxu0
  %v1918 = vadd.f32 %v1749, %v1917
  %v1919 = vpop.f32.mrf.mxu0
  %v1920 = vadd.f32 %v1751, %v1919
  %1921 = vmatmul.bf16.gmra.mxu0 %v1017
  %v1922 = vpop.f32.mrf.mxu0
  %v1923 = vadd.f32 %v1754, %v1922
  %v1924 = vpop.f32.mrf.mxu0
  %v1925 = vadd.f32 %v1756, %v1924
  %1926 = vmatmul.bf16.gmra.mxu0 %v1022
  %v1927 = vpop.f32.mrf.mxu0
  %v1928 = vadd.f32 %v1759, %v1927
  %v1929 = vpop.f32.mrf.mxu0
  %v1930 = vadd.f32 %v1761, %v1929
  %1931 = vmatmul.bf16.gmra.mxu0 %v1027
  %v1932 = vpop.f32.mrf.mxu0
  %v1933 = vadd.f32 %v1764, %v1932
  %v1934 = vpop.f32.mrf.mxu0
  %v1935 = vadd.f32 %v1766, %v1934
  %1936 = vmatmul.bf16.gmra.mxu0 %v1032
  %v1937 = vpop.f32.mrf.mxu0
  %v1938 = vadd.f32 %v1769, %v1937
  %v1939 = vpop.f32.mrf.mxu0
  %v1940 = vadd.f32 %v1771, %v1939
  %1941 = vmatmul.bf16.gmra.mxu0 %v1037
  %v1942 = vpop.f32.mrf.mxu0
  %v1943 = vadd.f32 %v1774, %v1942
  %v1944 = vpop.f32.mrf.mxu0
  %v1945 = vadd.f32 %v1776, %v1944
  %1946 = vmatmul.bf16.gmra.mxu0 %v1042
  %v1947 = vpop.f32.mrf.mxu0
  %v1948 = vadd.f32 %v1779, %v1947
  %v1949 = vpop.f32.mrf.mxu0
  %v1950 = vadd.f32 %v1781, %v1949
  %1951 = vmatmul.bf16.gmra.mxu0 %v1047
  %v1952 = vpop.f32.mrf.mxu0
  %v1953 = vadd.f32 %v1784, %v1952
  %v1954 = vpop.f32.mrf.mxu0
  %v1955 = vadd.f32 %v1786, %v1954
  %1956 = vmatmul.bf16.gmra.mxu0 %v1052
  %v1957 = vpop.f32.mrf.mxu0
  %v1958 = vadd.f32 %v1789, %v1957
  %v1959 = vpop.f32.mrf.mxu0
  %v1960 = vadd.f32 %v1791, %v1959
  %1961 = vmatmul.bf16.gmra.mxu0 %v1057
  %v1962 = vpop.f32.mrf.mxu0
  %v1963 = vadd.f32 %v1794, %v1962
  %v1964 = vpop.f32.mrf.mxu0
  %v1965 = vadd.f32 %v1796, %v1964
  %1966 = vmatmul.bf16.gmra.mxu0 %v1062
  %v1967 = vpop.f32.mrf.mxu0
  %v1968 = vadd.f32 %v1799, %v1967
  %v1969 = vpop.f32.mrf.mxu0
  %v1970 = vadd.f32 %v1801, %v1969
  %1971 = vmatmul.bf16.gmra.mxu0 %v1067
  %v1972 = vpop.f32.mrf.mxu0
  %v1973 = vadd.f32 %v1804, %v1972
  %v1974 = vpop.f32.mrf.mxu0
  %v1975 = vadd.f32 %v1806, %v1974
  %1976 = vmatmul.bf16.gmra.mxu0 %v1072
  %v1977 = vpop.f32.mrf.mxu0
  %v1978 = vadd.f32 %v1809, %v1977
  %v1979 = vpop.f32.mrf.mxu0
  %v1980 = vadd.f32 %v1811, %v1979
  %1981 = vmatmul.bf16.gmra.mxu0 %v1077
  %v1982 = vpop.f32.mrf.mxu0
  %v1983 = vadd.f32 %v1814, %v1982
  %v1984 = vpop.f32.mrf.mxu0
  %v1985 = vadd.f32 %v1816, %v1984
  %1986 = vmatmul.bf16.gmra.mxu0 %v1082
  %v1987 = vpop.f32.mrf.mxu0
  %v1988 = vadd.f32 %v1819, %v1987
  %v1989 = vpop.f32.mrf.mxu0
  %v1990 = vadd.f32 %v1821, %v1989
  %1991 = vmatmul.bf16.gmra.mxu0 %v1087
  %v1992 = vpop.f32.mrf.mxu0
  %v1993 = vadd.f32 %v1824, %v1992
  %v1994 = vpop.f32.mrf.mxu0
  %v1995 = vadd.f32 %v1826, %v1994
  %1996 = vdwg.mxu0
  %1997 = vmatpush.bf16.msra.mxu0 %v1441
  %1998 = vmatpush.bf16.msra.mxu0 %v1440
  %1999 = vmatpush.bf16.msra.mxu0 %v1439
  %2000 = vmatpush.bf16.msra.mxu0 %v1438
  %2001 = vmatpush.bf16.msra.mxu0 %v1437
  %2002 = vmatpush.bf16.msra.mxu0 %v1436
  %2003 = vmatpush.bf16.msra.mxu0 %v1435
  %2004 = vmatpush.bf16.msra.mxu0 %v1434
  %2005 = vmatmul.bf16.gmra.mxu0 %v933
  %v2006 = vpop.f32.mrf.mxu0
  %v2007 = vadd.f32 %v1838, %v2006
  %v2008 = vpop.f32.mrf.mxu0
  %v2009 = vadd.f32 %v1840, %v2008
  %2010 = vmatmul.bf16.gmra.mxu0 %v938
  %v2011 = vpop.f32.mrf.mxu0
  %v2012 = vadd.f32 %v1843, %v2011
  %v2013 = vpop.f32.mrf.mxu0
  %v2014 = vadd.f32 %v1845, %v2013
  %2015 = vmatmul.bf16.gmra.mxu0 %v943
  %v2016 = vpop.f32.mrf.mxu0
  %v2017 = vadd.f32 %v1848, %v2016
  %v2018 = vpop.f32.mrf.mxu0
  %v2019 = vadd.f32 %v1850, %v2018
  %2020 = vmatmul.bf16.gmra.mxu0 %v948
  %v2021 = vpop.f32.mrf.mxu0
  %v2022 = vadd.f32 %v1853, %v2021
  %v2023 = vpop.f32.mrf.mxu0
  %v2024 = vadd.f32 %v1855, %v2023
  %2025 = vmatmul.bf16.gmra.mxu0 %v953
  %v2026 = vpop.f32.mrf.mxu0
  %v2027 = vadd.f32 %v1858, %v2026
  %v2028 = vpop.f32.mrf.mxu0
  %v2029 = vadd.f32 %v1860, %v2028
  %2030 = vmatmul.bf16.gmra.mxu0 %v958
  %v2031 = vpop.f32.mrf.mxu0
  %v2032 = vadd.f32 %v1863, %v2031
  %v2033 = vpop.f32.mrf.mxu0
  %v2034 = vadd.f32 %v1865, %v2033
  %2035 = vmatmul.bf16.gmra.mxu0 %v963
  %v2036 = vpop.f32.mrf.mxu0
  %v2037 = vadd.f32 %v1868, %v2036
  %v2038 = vpop.f32.mrf.mxu0
  %v2039 = vadd.f32 %v1870, %v2038
  %2040 = vmatmul.bf16.gmra.mxu0 %v968
  %v2041 = vpop.f32.mrf.mxu0
  %v2042 = vadd.f32 %v1873, %v2041
  %v2043 = vpop.f32.mrf.mxu0
  %v2044 = vadd.f32 %v1875, %v2043
  %2045 = vmatmul.bf16.gmra.mxu0 %v973
  %v2046 = vpop.f32.mrf.mxu0
  %v2047 = vadd.f32 %v1878, %v2046
  %v2048 = vpop.f32.mrf.mxu0
  %v2049 = vadd.f32 %v1880, %v2048
  %2050 = vmatmul.bf16.gmra.mxu0 %v978
  %v2051 = vpop.f32.mrf.mxu0
  %v2052 = vadd.f32 %v1883, %v2051
  %v2053 = vpop.f32.mrf.mxu0
  %v2054 = vadd.f32 %v1885, %v2053
  %2055 = vmatmul.bf16.gmra.mxu0 %v983
  %v2056 = vpop.f32.mrf.mxu0
  %v2057 = vadd.f32 %v1888, %v2056
  %v2058 = vpop.f32.mrf.mxu0
  %v2059 = vadd.f32 %v1890, %v2058
  %2060 = vmatmul.bf16.gmra.mxu0 %v988
  %v2061 = vpop.f32.mrf.mxu0
  %v2062 = vadd.f32 %v1893, %v2061
  %v2063 = vpop.f32.mrf.mxu0
  %v2064 = vadd.f32 %v1895, %v2063
  %2065 = vmatmul.bf16.gmra.mxu0 %v993
  %v2066 = vpop.f32.mrf.mxu0
  %v2067 = vadd.f32 %v1898, %v2066
  %v2068 = vpop.f32.mrf.mxu0
  %v2069 = vadd.f32 %v1900, %v2068
  %2070 = vmatmul.bf16.gmra.mxu0 %v998
  %v2071 = vpop.f32.mrf.mxu0
  %v2072 = vadd.f32 %v1903, %v2071
  %v2073 = vpop.f32.mrf.mxu0
  %v2074 = vadd.f32 %v1905, %v2073
  %2075 = vmatmul.bf16.gmra.mxu0 %v1003
  %v2076 = vpop.f32.mrf.mxu0
  %v2077 = vadd.f32 %v1908, %v2076
  %v2078 = vpop.f32.mrf.mxu0
  %v2079 = vadd.f32 %v1910, %v2078
  %2080 = vmatmul.bf16.gmra.mxu0 %v1008
  %v2081 = vpop.f32.mrf.mxu0
  %v2082 = vadd.f32 %v1913, %v2081
  %v2083 = vpop.f32.mrf.mxu0
  %v2084 = vadd.f32 %v1915, %v2083
  %2085 = vmatmul.bf16.gmra.mxu0 %v1013
  %v2086 = vpop.f32.mrf.mxu0
  %v2087 = vadd.f32 %v1918, %v2086
  %v2088 = vpop.f32.mrf.mxu0
  %v2089 = vadd.f32 %v1920, %v2088
  %2090 = vmatmul.bf16.gmra.mxu0 %v1018
  %v2091 = vpop.f32.mrf.mxu0
  %v2092 = vadd.f32 %v1923, %v2091
  %v2093 = vpop.f32.mrf.mxu0
  %v2094 = vadd.f32 %v1925, %v2093
  %2095 = vmatmul.bf16.gmra.mxu0 %v1023
  %v2096 = vpop.f32.mrf.mxu0
  %v2097 = vadd.f32 %v1928, %v2096
  %v2098 = vpop.f32.mrf.mxu0
  %v2099 = vadd.f32 %v1930, %v2098
  %2100 = vmatmul.bf16.gmra.mxu0 %v1028
  %v2101 = vpop.f32.mrf.mxu0
  %v2102 = vadd.f32 %v1933, %v2101
  %v2103 = vpop.f32.mrf.mxu0
  %v2104 = vadd.f32 %v1935, %v2103
  %2105 = vmatmul.bf16.gmra.mxu0 %v1033
  %v2106 = vpop.f32.mrf.mxu0
  %v2107 = vadd.f32 %v1938, %v2106
  %v2108 = vpop.f32.mrf.mxu0
  %v2109 = vadd.f32 %v1940, %v2108
  %2110 = vmatmul.bf16.gmra.mxu0 %v1038
  %v2111 = vpop.f32.mrf.mxu0
  %v2112 = vadd.f32 %v1943, %v2111
  %v2113 = vpop.f32.mrf.mxu0
  %v2114 = vadd.f32 %v1945, %v2113
  %2115 = vmatmul.bf16.gmra.mxu0 %v1043
  %v2116 = vpop.f32.mrf.mxu0
  %v2117 = vadd.f32 %v1948, %v2116
  %v2118 = vpop.f32.mrf.mxu0
  %v2119 = vadd.f32 %v1950, %v2118
  %2120 = vmatmul.bf16.gmra.mxu0 %v1048
  %v2121 = vpop.f32.mrf.mxu0
  %v2122 = vadd.f32 %v1953, %v2121
  %v2123 = vpop.f32.mrf.mxu0
  %v2124 = vadd.f32 %v1955, %v2123
  %2125 = vmatmul.bf16.gmra.mxu0 %v1053
  %v2126 = vpop.f32.mrf.mxu0
  %v2127 = vadd.f32 %v1958, %v2126
  %v2128 = vpop.f32.mrf.mxu0
  %v2129 = vadd.f32 %v1960, %v2128
  %2130 = vmatmul.bf16.gmra.mxu0 %v1058
  %v2131 = vpop.f32.mrf.mxu0
  %v2132 = vadd.f32 %v1963, %v2131
  %v2133 = vpop.f32.mrf.mxu0
  %v2134 = vadd.f32 %v1965, %v2133
  %2135 = vmatmul.bf16.gmra.mxu0 %v1063
  %v2136 = vpop.f32.mrf.mxu0
  %v2137 = vadd.f32 %v1968, %v2136
  %v2138 = vpop.f32.mrf.mxu0
  %v2139 = vadd.f32 %v1970, %v2138
  %2140 = vmatmul.bf16.gmra.mxu0 %v1068
  %v2141 = vpop.f32.mrf.mxu0
  %v2142 = vadd.f32 %v1973, %v2141
  %v2143 = vpop.f32.mrf.mxu0
  %v2144 = vadd.f32 %v1975, %v2143
  %2145 = vmatmul.bf16.gmra.mxu0 %v1073
  %v2146 = vpop.f32.mrf.mxu0
  %v2147 = vadd.f32 %v1978, %v2146
  %v2148 = vpop.f32.mrf.mxu0
  %v2149 = vadd.f32 %v1980, %v2148
  %2150 = vmatmul.bf16.gmra.mxu0 %v1078
  %v2151 = vpop.f32.mrf.mxu0
  %v2152 = vadd.f32 %v1983, %v2151
  %v2153 = vpop.f32.mrf.mxu0
  %v2154 = vadd.f32 %v1985, %v2153
  %2155 = vmatmul.bf16.gmra.mxu0 %v1083
  %v2156 = vpop.f32.mrf.mxu0
  %v2157 = vadd.f32 %v1988, %v2156
  %v2158 = vpop.f32.mrf.mxu0
  %v2159 = vadd.f32 %v1990, %v2158
  %2160 = vmatmul.bf16.gmra.mxu0 %v1088
  %v2161 = vpop.f32.mrf.mxu0
  %v2162 = vadd.f32 %v1993, %v2161
  %v2163 = vpop.f32.mrf.mxu0
  %v2164 = vadd.f32 %v1995, %v2163
  %2165 = vdwg.mxu0
  %2166 = vmatpush.bf16.msra.mxu0 %v1449
  %2167 = vmatpush.bf16.msra.mxu0 %v1448
  %2168 = vmatpush.bf16.msra.mxu0 %v1447
  %2169 = vmatpush.bf16.msra.mxu0 %v1446
  %2170 = vmatpush.bf16.msra.mxu0 %v1445
  %2171 = vmatpush.bf16.msra.mxu0 %v1444
  %2172 = vmatpush.bf16.msra.mxu0 %v1443
  %2173 = vmatpush.bf16.msra.mxu0 %v1442
  %2174 = vmatmul.bf16.gmra.mxu0 %v934
  %v2175 = vpop.f32.mrf.mxu0
  %v2176 = vadd.f32 %v2007, %v2175
  %v2177 = vpop.f32.mrf.mxu0
  %v2178 = vadd.f32 %v2009, %v2177
  %2179 = vmatmul.bf16.gmra.mxu0 %v939
  %v2180 = vpop.f32.mrf.mxu0
  %v2181 = vadd.f32 %v2012, %v2180
  %v2182 = vpop.f32.mrf.mxu0
  %v2183 = vadd.f32 %v2014, %v2182
  %2184 = vmatmul.bf16.gmra.mxu0 %v944
  %v2185 = vpop.f32.mrf.mxu0
  %v2186 = vadd.f32 %v2017, %v2185
  %v2187 = vpop.f32.mrf.mxu0
  %v2188 = vadd.f32 %v2019, %v2187
  %2189 = vmatmul.bf16.gmra.mxu0 %v949
  %v2190 = vpop.f32.mrf.mxu0
  %v2191 = vadd.f32 %v2022, %v2190
  %v2192 = vpop.f32.mrf.mxu0
  %v2193 = vadd.f32 %v2024, %v2192
  %2194 = vmatmul.bf16.gmra.mxu0 %v954
  %v2195 = vpop.f32.mrf.mxu0
  %v2196 = vadd.f32 %v2027, %v2195
  %v2197 = vpop.f32.mrf.mxu0
  %v2198 = vadd.f32 %v2029, %v2197
  %2199 = vmatmul.bf16.gmra.mxu0 %v959
  %v2200 = vpop.f32.mrf.mxu0
  %v2201 = vadd.f32 %v2032, %v2200
  %v2202 = vpop.f32.mrf.mxu0
  %v2203 = vadd.f32 %v2034, %v2202
  %2204 = vmatmul.bf16.gmra.mxu0 %v964
  %v2205 = vpop.f32.mrf.mxu0
  %v2206 = vadd.f32 %v2037, %v2205
  %v2207 = vpop.f32.mrf.mxu0
  %v2208 = vadd.f32 %v2039, %v2207
  %2209 = vmatmul.bf16.gmra.mxu0 %v969
  %v2210 = vpop.f32.mrf.mxu0
  %v2211 = vadd.f32 %v2042, %v2210
  %v2212 = vpop.f32.mrf.mxu0
  %v2213 = vadd.f32 %v2044, %v2212
  %2214 = vmatmul.bf16.gmra.mxu0 %v974
  %v2215 = vpop.f32.mrf.mxu0
  %v2216 = vadd.f32 %v2047, %v2215
  %v2217 = vpop.f32.mrf.mxu0
  %v2218 = vadd.f32 %v2049, %v2217
  %2219 = vmatmul.bf16.gmra.mxu0 %v979
  %v2220 = vpop.f32.mrf.mxu0
  %v2221 = vadd.f32 %v2052, %v2220
  %v2222 = vpop.f32.mrf.mxu0
  %v2223 = vadd.f32 %v2054, %v2222
  %2224 = vmatmul.bf16.gmra.mxu0 %v984
  %v2225 = vpop.f32.mrf.mxu0
  %v2226 = vadd.f32 %v2057, %v2225
  %v2227 = vpop.f32.mrf.mxu0
  %v2228 = vadd.f32 %v2059, %v2227
  %2229 = vmatmul.bf16.gmra.mxu0 %v989
  %v2230 = vpop.f32.mrf.mxu0
  %v2231 = vadd.f32 %v2062, %v2230
  %v2232 = vpop.f32.mrf.mxu0
  %v2233 = vadd.f32 %v2064, %v2232
  %2234 = vmatmul.bf16.gmra.mxu0 %v994
  %v2235 = vpop.f32.mrf.mxu0
  %v2236 = vadd.f32 %v2067, %v2235
  %v2237 = vpop.f32.mrf.mxu0
  %v2238 = vadd.f32 %v2069, %v2237
  %2239 = vmatmul.bf16.gmra.mxu0 %v999
  %v2240 = vpop.f32.mrf.mxu0
  %v2241 = vadd.f32 %v2072, %v2240
  %v2242 = vpop.f32.mrf.mxu0
  %v2243 = vadd.f32 %v2074, %v2242
  %2244 = vmatmul.bf16.gmra.mxu0 %v1004
  %v2245 = vpop.f32.mrf.mxu0
  %v2246 = vadd.f32 %v2077, %v2245
  %v2247 = vpop.f32.mrf.mxu0
  %v2248 = vadd.f32 %v2079, %v2247
  %2249 = vmatmul.bf16.gmra.mxu0 %v1009
  %v2250 = vpop.f32.mrf.mxu0
  %v2251 = vadd.f32 %v2082, %v2250
  %v2252 = vpop.f32.mrf.mxu0
  %v2253 = vadd.f32 %v2084, %v2252
  %2254 = vmatmul.bf16.gmra.mxu0 %v1014
  %v2255 = vpop.f32.mrf.mxu0
  %v2256 = vadd.f32 %v2087, %v2255
  %v2257 = vpop.f32.mrf.mxu0
  %v2258 = vadd.f32 %v2089, %v2257
  %2259 = vmatmul.bf16.gmra.mxu0 %v1019
  %v2260 = vpop.f32.mrf.mxu0
  %v2261 = vadd.f32 %v2092, %v2260
  %v2262 = vpop.f32.mrf.mxu0
  %v2263 = vadd.f32 %v2094, %v2262
  %2264 = vmatmul.bf16.gmra.mxu0 %v1024
  %v2265 = vpop.f32.mrf.mxu0
  %v2266 = vadd.f32 %v2097, %v2265
  %v2267 = vpop.f32.mrf.mxu0
  %v2268 = vadd.f32 %v2099, %v2267
  %2269 = vmatmul.bf16.gmra.mxu0 %v1029
  %v2270 = vpop.f32.mrf.mxu0
  %v2271 = vadd.f32 %v2102, %v2270
  %v2272 = vpop.f32.mrf.mxu0
  %v2273 = vadd.f32 %v2104, %v2272
  %2274 = vmatmul.bf16.gmra.mxu0 %v1034
  %v2275 = vpop.f32.mrf.mxu0
  %v2276 = vadd.f32 %v2107, %v2275
  %v2277 = vpop.f32.mrf.mxu0
  %v2278 = vadd.f32 %v2109, %v2277
  %2279 = vmatmul.bf16.gmra.mxu0 %v1039
  %v2280 = vpop.f32.mrf.mxu0
  %v2281 = vadd.f32 %v2112, %v2280
  %v2282 = vpop.f32.mrf.mxu0
  %v2283 = vadd.f32 %v2114, %v2282
  %2284 = vmatmul.bf16.gmra.mxu0 %v1044
  %v2285 = vpop.f32.mrf.mxu0
  %v2286 = vadd.f32 %v2117, %v2285
  %v2287 = vpop.f32.mrf.mxu0
  %v2288 = vadd.f32 %v2119, %v2287
  %2289 = vmatmul.bf16.gmra.mxu0 %v1049
  %v2290 = vpop.f32.mrf.mxu0
  %v2291 = vadd.f32 %v2122, %v2290
  %v2292 = vpop.f32.mrf.mxu0
  %v2293 = vadd.f32 %v2124, %v2292
  %2294 = vmatmul.bf16.gmra.mxu0 %v1054
  %v2295 = vpop.f32.mrf.mxu0
  %v2296 = vadd.f32 %v2127, %v2295
  %v2297 = vpop.f32.mrf.mxu0
  %v2298 = vadd.f32 %v2129, %v2297
  %2299 = vmatmul.bf16.gmra.mxu0 %v1059
  %v2300 = vpop.f32.mrf.mxu0
  %v2301 = vadd.f32 %v2132, %v2300
  %v2302 = vpop.f32.mrf.mxu0
  %v2303 = vadd.f32 %v2134, %v2302
  %2304 = vmatmul.bf16.gmra.mxu0 %v1064
  %v2305 = vpop.f32.mrf.mxu0
  %v2306 = vadd.f32 %v2137, %v2305
  %v2307 = vpop.f32.mrf.mxu0
  %v2308 = vadd.f32 %v2139, %v2307
  %2309 = vmatmul.bf16.gmra.mxu0 %v1069
  %v2310 = vpop.f32.mrf.mxu0
  %v2311 = vadd.f32 %v2142, %v2310
  %v2312 = vpop.f32.mrf.mxu0
  %v2313 = vadd.f32 %v2144, %v2312
  %2314 = vmatmul.bf16.gmra.mxu0 %v1074
  %v2315 = vpop.f32.mrf.mxu0
  %v2316 = vadd.f32 %v2147, %v2315
  %v2317 = vpop.f32.mrf.mxu0
  %v2318 = vadd.f32 %v2149, %v2317
  %2319 = vmatmul.bf16.gmra.mxu0 %v1079
  %v2320 = vpop.f32.mrf.mxu0
  %v2321 = vadd.f32 %v2152, %v2320
  %v2322 = vpop.f32.mrf.mxu0
  %v2323 = vadd.f32 %v2154, %v2322
  %2324 = vmatmul.bf16.gmra.mxu0 %v1084
  %v2325 = vpop.f32.mrf.mxu0
  %v2326 = vadd.f32 %v2157, %v2325
  %v2327 = vpop.f32.mrf.mxu0
  %v2328 = vadd.f32 %v2159, %v2327
  %2329 = vmatmul.bf16.gmra.mxu0 %v1089
  %v2330 = vpop.f32.mrf.mxu0
  %v2331 = vadd.f32 %v2162, %v2330
  %v2332 = vpop.f32.mrf.mxu0
  %v2333 = vadd.f32 %v2164, %v2332
  %2334 = vdwg.mxu0
  %v2335 = vadd.f32 %v82, %v2176
  %v2336 = vadd.f32 %v83, %v2178
  %v2337 = vadd.f32 %v84, %v2181
  %v2338 = vadd.f32 %v85, %v2183
  %v2339 = vadd.f32 %v86, %v2186
  %v2340 = vadd.f32 %v87, %v2188
  %v2341 = vadd.f32 %v88, %v2191
  %v2342 = vadd.f32 %v89, %v2193
  %v2343 = vadd.f32 %v90, %v2196
  %v2344 = vadd.f32 %v91, %v2198
  %v2345 = vadd.f32 %v92, %v2201
  %v2346 = vadd.f32 %v93, %v2203
  %v2347 = vadd.f32 %v94, %v2206
  %v2348 = vadd.f32 %v95, %v2208
  %v2349 = vadd.f32 %v96, %v2211
  %v2350 = vadd.f32 %v97, %v2213
  %v2351 = vadd.f32 %v98, %v2216
  %v2352 = vadd.f32 %v99, %v2218
  %v2353 = vadd.f32 %v100, %v2221
  %v2354 = vadd.f32 %v101, %v2223
  %v2355 = vadd.f32 %v102, %v2226
  %v2356 = vadd.f32 %v103, %v2228
  %v2357 = vadd.f32 %v104, %v2231
  %v2358 = vadd.f32 %v105, %v2233
  %v2359 = vadd.f32 %v106, %v2236
  %v2360 = vadd.f32 %v107, %v2238
  %v2361 = vadd.f32 %v108, %v2241
  %v2362 = vadd.f32 %v109, %v2243
  %v2363 = vadd.f32 %v110, %v2246
  %v2364 = vadd.f32 %v111, %v2248
  %v2365 = vadd.f32 %v112, %v2251
  %v2366 = vadd.f32 %v113, %v2253
  %v2367 = vadd.f32 %v114, %v2256
  %v2368 = vadd.f32 %v115, %v2258
  %v2369 = vadd.f32 %v116, %v2261
  %v2370 = vadd.f32 %v117, %v2263
  %v2371 = vadd.f32 %v118, %v2266
  %v2372 = vadd.f32 %v119, %v2268
  %v2373 = vadd.f32 %v120, %v2271
  %v2374 = vadd.f32 %v121, %v2273
  %v2375 = vadd.f32 %v122, %v2276
  %v2376 = vadd.f32 %v123, %v2278
  %v2377 = vadd.f32 %v124, %v2281
  %v2378 = vadd.f32 %v125, %v2283
  %v2379 = vadd.f32 %v126, %v2286
  %v2380 = vadd.f32 %v127, %v2288
  %v2381 = vadd.f32 %v128, %v2291
  %v2382 = vadd.f32 %v129, %v2293
  %v2383 = vadd.f32 %v130, %v2296
  %v2384 = vadd.f32 %v131, %v2298
  %v2385 = vadd.f32 %v132, %v2301
  %v2386 = vadd.f32 %v133, %v2303
  %v2387 = vadd.f32 %v134, %v2306
  %v2388 = vadd.f32 %v135, %v2308
  %v2389 = vadd.f32 %v136, %v2311
  %v2390 = vadd.f32 %v137, %v2313
  %v2391 = vadd.f32 %v138, %v2316
  %v2392 = vadd.f32 %v139, %v2318
  %v2393 = vadd.f32 %v140, %v2321
  %v2394 = vadd.f32 %v141, %v2323
  %v2395 = vadd.f32 %v142, %v2326
  %v2396 = vadd.f32 %v143, %v2328
  %v2397 = vadd.f32 %v144, %v2331
  %v2398 = vadd.f32 %v145, %v2333
  %2399 = vst [vmem:[#allocation2] sm:$0xff] %v2335
  %2400 = vst [vmem:[#allocation2 + $0x8] sm:$0xff] %v2336
  %2401 = vst [vmem:[#allocation2 + $0x10] sm:$0xff] %v2337
  %2402 = vst [vmem:[#allocation2 + $0x18] sm:$0xff] %v2338
  %2403 = vst [vmem:[#allocation2 + $0x20] sm:$0xff] %v2339
  %2404 = vst [vmem:[#allocation2 + $0x28] sm:$0xff] %v2340
  %2405 = vst [vmem:[#allocation2 + $0x30] sm:$0xff] %v2341
  %2406 = vst [vmem:[#allocation2 + $0x38] sm:$0xff] %v2342
  %2407 = vst [vmem:[#allocation2 + $0x40] sm:$0xff] %v2343
  %2408 = vst [vmem:[#allocation2 + $0x48] sm:$0xff] %v2344
  %2409 = vst [vmem:[#allocation2 + $0x50] sm:$0xff] %v2345
  %2410 = vst [vmem:[#allocation2 + $0x58] sm:$0xff] %v2346
  %2411 = vst [vmem:[#allocation2 + $0x60] sm:$0xff] %v2347
  %2412 = vst [vmem:[#allocation2 + $0x68] sm:$0xff] %v2348
  %2413 = vst [vmem:[#allocation2 + $0x70] sm:$0xff] %v2349
  %2414 = vst [vmem:[#allocation2 + $0x78] sm:$0xff] %v2350
  %2415 = vst [vmem:[#allocation2 + $0x80] sm:$0xff] %v2351
  %2416 = vst [vmem:[#allocation2 + $0x88] sm:$0xff] %v2352
  %2417 = vst [vmem:[#allocation2 + $0x90] sm:$0xff] %v2353
  %2418 = vst [vmem:[#allocation2 + $0x98] sm:$0xff] %v2354
  %2419 = vst [vmem:[#allocation2 + $0xa0] sm:$0xff] %v2355
  %2420 = vst [vmem:[#allocation2 + $0xa8] sm:$0xff] %v2356
  %2421 = vst [vmem:[#allocation2 + $0xb0] sm:$0xff] %v2357
  %2422 = vst [vmem:[#allocation2 + $0xb8] sm:$0xff] %v2358
  %2423 = vst [vmem:[#allocation2 + $0xc0] sm:$0xff] %v2359
  %2424 = vst [vmem:[#allocation2 + $0xc8] sm:$0xff] %v2360
  %2425 = vst [vmem:[#allocation2 + $0xd0] sm:$0xff] %v2361
  %2426 = vst [vmem:[#allocation2 + $0xd8] sm:$0xff] %v2362
  %2427 = vst [vmem:[#allocation2 + $0xe0] sm:$0xff] %v2363
  %2428 = vst [vmem:[#allocation2 + $0xe8] sm:$0xff] %v2364
  %2429 = vst [vmem:[#allocation2 + $0xf0] sm:$0xff] %v2365
  %2430 = vst [vmem:[#allocation2 + $0xf8] sm:$0xff] %v2366
  %2431 = vst [vmem:[#allocation2 + $0x100] sm:$0xff] %v2367
  %2432 = vst [vmem:[#allocation2 + $0x108] sm:$0xff] %v2368
  %2433 = vst [vmem:[#allocation2 + $0x110] sm:$0xff] %v2369
  %2434 = vst [vmem:[#allocation2 + $0x118] sm:$0xff] %v2370
  %2435 = vst [vmem:[#allocation2 + $0x120] sm:$0xff] %v2371
  %2436 = vst [vmem:[#allocation2 + $0x128] sm:$0xff] %v2372
  %2437 = vst [vmem:[#allocation2 + $0x130] sm:$0xff] %v2373
  %2438 = vst [vmem:[#allocation2 + $0x138] sm:$0xff] %v2374
  %2439 = vst [vmem:[#allocation2 + $0x140] sm:$0xff] %v2375
  %2440 = vst [vmem:[#allocation2 + $0x148] sm:$0xff] %v2376
  %2441 = vst [vmem:[#allocation2 + $0x150] sm:$0xff] %v2377
  %2442 = vst [vmem:[#allocation2 + $0x158] sm:$0xff] %v2378
  %2443 = vst [vmem:[#allocation2 + $0x160] sm:$0xff] %v2379
  %2444 = vst [vmem:[#allocation2 + $0x168] sm:$0xff] %v2380
  %2445 = vst [vmem:[#allocation2 + $0x170] sm:$0xff] %v2381
  %2446 = vst [vmem:[#allocation2 + $0x178] sm:$0xff] %v2382
  %2447 = vst [vmem:[#allocation2 + $0x180] sm:$0xff] %v2383
  %2448 = vst [vmem:[#allocation2 + $0x188] sm:$0xff] %v2384
  %2449 = vst [vmem:[#allocation2 + $0x190] sm:$0xff] %v2385
  %2450 = vst [vmem:[#allocation2 + $0x198] sm:$0xff] %v2386
  %2451 = vst [vmem:[#allocation2 + $0x1a0] sm:$0xff] %v2387
  %2452 = vst [vmem:[#allocation2 + $0x1a8] sm:$0xff] %v2388
  %2453 = vst [vmem:[#allocation2 + $0x1b0] sm:$0xff] %v2389
  %2454 = vst [vmem:[#allocation2 + $0x1b8] sm:$0xff] %v2390
  %2455 = vst [vmem:[#allocation2 + $0x1c0] sm:$0xff] %v2391
  %2456 = vst [vmem:[#allocation2 + $0x1c8] sm:$0xff] %v2392
  %2457 = vst [vmem:[#allocation2 + $0x1d0] sm:$0xff] %v2393
  %2458 = vst [vmem:[#allocation2 + $0x1d8] sm:$0xff] %v2394
  %2459 = vst [vmem:[#allocation2 + $0x1e0] sm:$0xff] %v2395
  %2460 = vst [vmem:[#allocation2 + $0x1e8] sm:$0xff] %v2396
  %2461 = vst [vmem:[#allocation2 + $0x1f0] sm:$0xff] %v2397
  %2462 = vst [vmem:[#allocation2 + $0x1f8] sm:$0xff] %v2398
  // Predicated region
  $region18: #{inception_b.7} parent=0 // pred_check
    %p2463 = pneg %p14
  $region19: #{inception_b.7} parent=0 // pred_check_branch
    %2465 = sbr.rel (%p2463) target = $region21
  $region20: #{inception_b.7} parent=0 // pred_region
    %v2466 = vld [vmem:[#allocation2] sm:$0xff]
    %v2467 = vld [vmem:[#allocation2 + $0x8] sm:$0xff]
    %v2468 = vld [vmem:[#allocation2 + $0x10] sm:$0xff]
    %v2469 = vld [vmem:[#allocation2 + $0x18] sm:$0xff]
    %v2470 = vld [vmem:[#allocation2 + $0x20] sm:$0xff]
    %v2471 = vld [vmem:[#allocation2 + $0x28] sm:$0xff]
    %v2472 = vld [vmem:[#allocation2 + $0x30] sm:$0xff]
    %v2473 = vld [vmem:[#allocation2 + $0x38] sm:$0xff]
    %v2474 = vld [vmem:[#allocation2 + $0x40] sm:$0xff]
    %v2475 = vld [vmem:[#allocation2 + $0x48] sm:$0xff]
    %v2476 = vld [vmem:[#allocation2 + $0x50] sm:$0xff]
    %v2477 = vld [vmem:[#allocation2 + $0x58] sm:$0xff]
    %v2478 = vld [vmem:[#allocation2 + $0x60] sm:$0xff]
    %v2479 = vld [vmem:[#allocation2 + $0x68] sm:$0xff]
    %v2480 = vld [vmem:[#allocation2 + $0x70] sm:$0xff]
    %v2481 = vld [vmem:[#allocation2 + $0x78] sm:$0xff]
    %v2482 = vld [vmem:[#allocation2 + $0x80] sm:$0xff]
    %v2483 = vld [vmem:[#allocation2 + $0x88] sm:$0xff]
    %v2484 = vld [vmem:[#allocation2 + $0x90] sm:$0xff]
    %v2485 = vld [vmem:[#allocation2 + $0x98] sm:$0xff]
    %v2486 = vld [vmem:[#allocation2 + $0xa0] sm:$0xff]
    %v2487 = vld [vmem:[#allocation2 + $0xa8] sm:$0xff]
    %v2488 = vld [vmem:[#allocation2 + $0xb0] sm:$0xff]
    %v2489 = vld [vmem:[#allocation2 + $0xb8] sm:$0xff]
    %v2490 = vld [vmem:[#allocation2 + $0xc0] sm:$0xff]
    %v2491 = vld [vmem:[#allocation2 + $0xc8] sm:$0xff]
    %v2492 = vld [vmem:[#allocation2 + $0xd0] sm:$0xff]
    %v2493 = vld [vmem:[#allocation2 + $0xd8] sm:$0xff]
    %v2494 = vld [vmem:[#allocation2 + $0xe0] sm:$0xff]
    %v2495 = vld [vmem:[#allocation2 + $0xe8] sm:$0xff]
    %v2496 = vld [vmem:[#allocation2 + $0xf0] sm:$0xff]
    %v2497 = vld [vmem:[#allocation2 + $0xf8] sm:$0xff]
    %v2498 = vld [vmem:[#allocation2 + $0x100] sm:$0xff]
    %v2499 = vld [vmem:[#allocation2 + $0x108] sm:$0xff]
    %v2500 = vld [vmem:[#allocation2 + $0x110] sm:$0xff]
    %v2501 = vld [vmem:[#allocation2 + $0x118] sm:$0xff]
    %v2502 = vld [vmem:[#allocation2 + $0x120] sm:$0xff]
    %v2503 = vld [vmem:[#allocation2 + $0x128] sm:$0xff]
    %v2504 = vld [vmem:[#allocation2 + $0x130] sm:$0xff]
    %v2505 = vld [vmem:[#allocation2 + $0x138] sm:$0xff]
    %v2506 = vld [vmem:[#allocation2 + $0x140] sm:$0xff]
    %v2507 = vld [vmem:[#allocation2 + $0x148] sm:$0xff]
    %v2508 = vld [vmem:[#allocation2 + $0x150] sm:$0xff]
    %v2509 = vld [vmem:[#allocation2 + $0x158] sm:$0xff]
    %v2510 = vld [vmem:[#allocation2 + $0x160] sm:$0xff]
    %v2511 = vld [vmem:[#allocation2 + $0x168] sm:$0xff]
    %v2512 = vld [vmem:[#allocation2 + $0x170] sm:$0xff]
    %v2513 = vld [vmem:[#allocation2 + $0x178] sm:$0xff]
    %v2514 = vld [vmem:[#allocation2 + $0x180] sm:$0xff]
    %v2515 = vld [vmem:[#allocation2 + $0x188] sm:$0xff]
    %v2516 = vld [vmem:[#allocation2 + $0x190] sm:$0xff]
    %v2517 = vld [vmem:[#allocation2 + $0x198] sm:$0xff]
    %v2518 = vld [vmem:[#allocation2 + $0x1a0] sm:$0xff]
    %v2519 = vld [vmem:[#allocation2 + $0x1a8] sm:$0xff]
    %v2520 = vld [vmem:[#allocation2 + $0x1b0] sm:$0xff]
    %v2521 = vld [vmem:[#allocation2 + $0x1b8] sm:$0xff]
    %v2522 = vld [vmem:[#allocation2 + $0x1c0] sm:$0xff]
    %v2523 = vld [vmem:[#allocation2 + $0x1c8] sm:$0xff]
    %v2524 = vld [vmem:[#allocation2 + $0x1d0] sm:$0xff]
    %v2525 = vld [vmem:[#allocation2 + $0x1d8] sm:$0xff]
    %v2526 = vld [vmem:[#allocation2 + $0x1e0] sm:$0xff]
    %v2527 = vld [vmem:[#allocation2 + $0x1e8] sm:$0xff]
    %v2528 = vld [vmem:[#allocation2 + $0x1f0] sm:$0xff]
    %v2529 = vld [vmem:[#allocation2 + $0x1f8] sm:$0xff]
    %v2530 = vld [vmem:[%s2] sm:$0x1]
    %v2532 = vperm.slane %v2530, 0
    %v2534 = vadd.f32 %v2466, %v2532
    %v2535 = vadd.f32 %v2467, %v2532
    %v2536 = vadd.f32 %v2468, %v2532
    %v2537 = vadd.f32 %v2469, %v2532
    %v2538 = vadd.f32 %v2470, %v2532
    %v2539 = vadd.f32 %v2471, %v2532
    %v2540 = vadd.f32 %v2472, %v2532
    %v2541 = vadd.f32 %v2473, %v2532
    %v2542 = vadd.f32 %v2474, %v2532
    %v2543 = vadd.f32 %v2475, %v2532
    %v2544 = vadd.f32 %v2476, %v2532
    %v2545 = vadd.f32 %v2477, %v2532
    %v2546 = vadd.f32 %v2478, %v2532
    %v2547 = vadd.f32 %v2479, %v2532
    %v2548 = vadd.f32 %v2480, %v2532
    %v2549 = vadd.f32 %v2481, %v2532
    %v2550 = vadd.f32 %v2482, %v2532
    %v2551 = vadd.f32 %v2483, %v2532
    %v2552 = vadd.f32 %v2484, %v2532
    %v2553 = vadd.f32 %v2485, %v2532
    %v2554 = vadd.f32 %v2486, %v2532
    %v2555 = vadd.f32 %v2487, %v2532
    %v2556 = vadd.f32 %v2488, %v2532
    %v2557 = vadd.f32 %v2489, %v2532
    %v2558 = vadd.f32 %v2490, %v2532
    %v2559 = vadd.f32 %v2491, %v2532
    %v2560 = vadd.f32 %v2492, %v2532
    %v2561 = vadd.f32 %v2493, %v2532
    %v2562 = vadd.f32 %v2494, %v2532
    %v2563 = vadd.f32 %v2495, %v2532
    %v2564 = vadd.f32 %v2496, %v2532
    %v2565 = vadd.f32 %v2497, %v2532
    %v2566 = vadd.f32 %v2498, %v2532
    %v2567 = vadd.f32 %v2499, %v2532
    %v2568 = vadd.f32 %v2500, %v2532
    %v2569 = vadd.f32 %v2501, %v2532
    %v2570 = vadd.f32 %v2502, %v2532
    %v2571 = vadd.f32 %v2503, %v2532
    %v2572 = vadd.f32 %v2504, %v2532
    %v2573 = vadd.f32 %v2505, %v2532
    %v2574 = vadd.f32 %v2506, %v2532
    %v2575 = vadd.f32 %v2507, %v2532
    %v2576 = vadd.f32 %v2508, %v2532
    %v2577 = vadd.f32 %v2509, %v2532
    %v2578 = vadd.f32 %v2510, %v2532
    %v2579 = vadd.f32 %v2511, %v2532
    %v2580 = vadd.f32 %v2512, %v2532
    %v2581 = vadd.f32 %v2513, %v2532
    %v2582 = vadd.f32 %v2514, %v2532
    %v2583 = vadd.f32 %v2515, %v2532
    %v2584 = vadd.f32 %v2516, %v2532
    %v2585 = vadd.f32 %v2517, %v2532
    %v2586 = vadd.f32 %v2518, %v2532
    %v2587 = vadd.f32 %v2519, %v2532
    %v2588 = vadd.f32 %v2520, %v2532
    %v2589 = vadd.f32 %v2521, %v2532
    %v2590 = vadd.f32 %v2522, %v2532
    %v2591 = vadd.f32 %v2523, %v2532
    %v2592 = vadd.f32 %v2524, %v2532
    %v2593 = vadd.f32 %v2525, %v2532
    %v2594 = vadd.f32 %v2526, %v2532
    %v2595 = vadd.f32 %v2527, %v2532
    %v2596 = vadd.f32 %v2528, %v2532
    %v2597 = vadd.f32 %v2529, %v2532
    %v2598 = vmax.f32 %v2534, 0.0
    %v2599 = vmax.f32 %v2535, 0.0
    %v2600 = vmax.f32 %v2536, 0.0
    %v2601 = vmax.f32 %v2537, 0.0
    %v2602 = vmax.f32 %v2538, 0.0
    %v2603 = vmax.f32 %v2539, 0.0
    %v2604 = vmax.f32 %v2540, 0.0
    %v2605 = vmax.f32 %v2541, 0.0
    %v2606 = vmax.f32 %v2542, 0.0
    %v2607 = vmax.f32 %v2543, 0.0
    %v2608 = vmax.f32 %v2544, 0.0
    %v2609 = vmax.f32 %v2545, 0.0
    %v2610 = vmax.f32 %v2546, 0.0
    %v2611 = vmax.f32 %v2547, 0.0
    %v2612 = vmax.f32 %v2548, 0.0
    %v2613 = vmax.f32 %v2549, 0.0
    %v2614 = vmax.f32 %v2550, 0.0
    %v2615 = vmax.f32 %v2551, 0.0
    %v2616 = vmax.f32 %v2552, 0.0
    %v2617 = vmax.f32 %v2553, 0.0
    %v2618 = vmax.f32 %v2554, 0.0
    %v2619 = vmax.f32 %v2555, 0.0
    %v2620 = vmax.f32 %v2556, 0.0
    %v2621 = vmax.f32 %v2557, 0.0
    %v2622 = vmax.f32 %v2558, 0.0
    %v2623 = vmax.f32 %v2559, 0.0
    %v2624 = vmax.f32 %v2560, 0.0
    %v2625 = vmax.f32 %v2561, 0.0
    %v2626 = vmax.f32 %v2562, 0.0
    %v2627 = vmax.f32 %v2563, 0.0
    %v2628 = vmax.f32 %v2564, 0.0
    %v2629 = vmax.f32 %v2565, 0.0
    %v2630 = vmax.f32 %v2566, 0.0
    %v2631 = vmax.f32 %v2567, 0.0
    %v2632 = vmax.f32 %v2568, 0.0
    %v2633 = vmax.f32 %v2569, 0.0
    %v2634 = vmax.f32 %v2570, 0.0
    %v2635 = vmax.f32 %v2571, 0.0
    %v2636 = vmax.f32 %v2572, 0.0
    %v2637 = vmax.f32 %v2573, 0.0
    %v2638 = vmax.f32 %v2574, 0.0
    %v2639 = vmax.f32 %v2575, 0.0
    %v2640 = vmax.f32 %v2576, 0.0
    %v2641 = vmax.f32 %v2577, 0.0
    %v2642 = vmax.f32 %v2578, 0.0
    %v2643 = vmax.f32 %v2579, 0.0
    %v2644 = vmax.f32 %v2580, 0.0
    %v2645 = vmax.f32 %v2581, 0.0
    %v2646 = vmax.f32 %v2582, 0.0
    %v2647 = vmax.f32 %v2583, 0.0
    %v2648 = vmax.f32 %v2584, 0.0
    %v2649 = vmax.f32 %v2585, 0.0
    %v2650 = vmax.f32 %v2586, 0.0
    %v2651 = vmax.f32 %v2587, 0.0
    %v2652 = vmax.f32 %v2588, 0.0
    %v2653 = vmax.f32 %v2589, 0.0
    %v2654 = vmax.f32 %v2590, 0.0
    %v2655 = vmax.f32 %v2591, 0.0
    %v2656 = vmax.f32 %v2592, 0.0
    %v2657 = vmax.f32 %v2593, 0.0
    %v2658 = vmax.f32 %v2594, 0.0
    %v2659 = vmax.f32 %v2595, 0.0
    %v2660 = vmax.f32 %v2596, 0.0
    %v2661 = vmax.f32 %v2597, 0.0
    %2662 = vst [vmem:[%s3] sm:$0xff] %v2598
    %2663 = vst [vmem:[%s3 + $0x8] sm:$0xff] %v2599
    %2664 = vst [vmem:[%s3 + $0x10] sm:$0xff] %v2600
    %2665 = vst [vmem:[%s3 + $0x18] sm:$0xff] %v2601
    %2666 = vst [vmem:[%s3 + $0x20] sm:$0xff] %v2602
    %2667 = vst [vmem:[%s3 + $0x28] sm:$0xff] %v2603
    %2668 = vst [vmem:[%s3 + $0x30] sm:$0xff] %v2604
    %2669 = vst [vmem:[%s3 + $0x38] sm:$0xff] %v2605
    %2670 = vst [vmem:[%s3 + $0x40] sm:$0xff] %v2606
    %2671 = vst [vmem:[%s3 + $0x48] sm:$0xff] %v2607
    %2672 = vst [vmem:[%s3 + $0x50] sm:$0xff] %v2608
    %2673 = vst [vmem:[%s3 + $0x58] sm:$0xff] %v2609
    %2674 = vst [vmem:[%s3 + $0x60] sm:$0xff] %v2610
    %2675 = vst [vmem:[%s3 + $0x68] sm:$0xff] %v2611
    %2676 = vst [vmem:[%s3 + $0x70] sm:$0xff] %v2612
    %2677 = vst [vmem:[%s3 + $0x78] sm:$0xff] %v2613
    %2678 = vst [vmem:[%s3 + $0x80] sm:$0xff] %v2614
    %2679 = vst [vmem:[%s3 + $0x88] sm:$0xff] %v2615
    %2680 = vst [vmem:[%s3 + $0x90] sm:$0xff] %v2616
    %2681 = vst [vmem:[%s3 + $0x98] sm:$0xff] %v2617
    %2682 = vst [vmem:[%s3 + $0xa0] sm:$0xff] %v2618
    %2683 = vst [vmem:[%s3 + $0xa8] sm:$0xff] %v2619
    %2684 = vst [vmem:[%s3 + $0xb0] sm:$0xff] %v2620
    %2685 = vst [vmem:[%s3 + $0xb8] sm:$0xff] %v2621
    %2686 = vst [vmem:[%s3 + $0xc0] sm:$0xff] %v2622
    %2687 = vst [vmem:[%s3 + $0xc8] sm:$0xff] %v2623
    %2688 = vst [vmem:[%s3 + $0xd0] sm:$0xff] %v2624
    %2689 = vst [vmem:[%s3 + $0xd8] sm:$0xff] %v2625
    %2690 = vst [vmem:[%s3 + $0xe0] sm:$0xff] %v2626
    %2691 = vst [vmem:[%s3 + $0xe8] sm:$0xff] %v2627
    %2692 = vst [vmem:[%s3 + $0xf0] sm:$0xff] %v2628
    %2693 = vst [vmem:[%s3 + $0xf8] sm:$0xff] %v2629
    %2694 = vst [vmem:[%s3 + $0x100] sm:$0xff] %v2630
    %2695 = vst [vmem:[%s3 + $0x108] sm:$0xff] %v2631
    %2696 = vst [vmem:[%s3 + $0x110] sm:$0xff] %v2632
    %2697 = vst [vmem:[%s3 + $0x118] sm:$0xff] %v2633
    %2698 = vst [vmem:[%s3 + $0x120] sm:$0xff] %v2634
    %2699 = vst [vmem:[%s3 + $0x128] sm:$0xff] %v2635
    %2700 = vst [vmem:[%s3 + $0x130] sm:$0xff] %v2636
    %2701 = vst [vmem:[%s3 + $0x138] sm:$0xff] %v2637
    %2702 = vst [vmem:[%s3 + $0x140] sm:$0xff] %v2638
    %2703 = vst [vmem:[%s3 + $0x148] sm:$0xff] %v2639
    %2704 = vst [vmem:[%s3 + $0x150] sm:$0xff] %v2640
    %2705 = vst [vmem:[%s3 + $0x158] sm:$0xff] %v2641
    %2706 = vst [vmem:[%s3 + $0x160] sm:$0xff] %v2642
    %2707 = vst [vmem:[%s3 + $0x168] sm:$0xff] %v2643
    %2708 = vst [vmem:[%s3 + $0x170] sm:$0xff] %v2644
    %2709 = vst [vmem:[%s3 + $0x178] sm:$0xff] %v2645
    %2710 = vst [vmem:[%s3 + $0x180] sm:$0xff] %v2646
    %2711 = vst [vmem:[%s3 + $0x188] sm:$0xff] %v2647
    %2712 = vst [vmem:[%s3 + $0x190] sm:$0xff] %v2648
    %2713 = vst [vmem:[%s3 + $0x198] sm:$0xff] %v2649
    %2714 = vst [vmem:[%s3 + $0x1a0] sm:$0xff] %v2650
    %2715 = vst [vmem:[%s3 + $0x1a8] sm:$0xff] %v2651
    %2716 = vst [vmem:[%s3 + $0x1b0] sm:$0xff] %v2652
    %2717 = vst [vmem:[%s3 + $0x1b8] sm:$0xff] %v2653
    %2718 = vst [vmem:[%s3 + $0x1c0] sm:$0xff] %v2654
    %2719 = vst [vmem:[%s3 + $0x1c8] sm:$0xff] %v2655
    %2720 = vst [vmem:[%s3 + $0x1d0] sm:$0xff] %v2656
    %2721 = vst [vmem:[%s3 + $0x1d8] sm:$0xff] %v2657
    %2722 = vst [vmem:[%s3 + $0x1e0] sm:$0xff] %v2658
    %2723 = vst [vmem:[%s3 + $0x1e8] sm:$0xff] %v2659
    %2724 = vst [vmem:[%s3 + $0x1f0] sm:$0xff] %v2660
    %2725 = vst [vmem:[%s3 + $0x1f8] sm:$0xff] %v2661
  $region21: #{inception_b.7} parent=0 // pred_fallthru
    _
  // Predicated region
  $region22: #{inception_b.7} parent=0 // pred_check
    _
  $region23: #{inception_b.7} parent=0 // pred_check_branch
    %2727 = sbr.rel (0) target = $region25
  $region24: #{inception_b.7} parent=0 // pred_region
    _
  $region25: #{inception_b.7} parent=0 // pred_fallthru
    _
  // Predicated region
  $region26: #{inception_b.7} parent=0 // pred_check
    _
  $region27: #{inception_b.7} parent=0 // pred_check_branch
    %2729 = sbr.rel (0) target = $region29
  $region28: #{inception_b.7} parent=0 // pred_region
    _
  $region29: #{inception_b.7} parent=0 // pred_fallthru
    _

// kernel: inception_b.8
$region0: #{inception_b.8}
  #allocation0 [shape = 'u32[]', space=smem, size = 0x4, offset = 0x4, fixed_abs, tag = 'smem constant byte address 0x4 - core index']
  #allocation1 [shape = 'u32[72,128]{1,0:T(1,128)}', space=vmem, size = 0x9000, scoped, tag = 'internal scratch']
  #allocation2 [shape = 'f32[112,128]{1,0:T(8,128)}', space=vmem, size = 0xe000, scoped, tag = 'scratch operand']
  %s0 = inlined_call_operand.vmem [shape: bf16[112,896], index: 0, kind: input, shape index: {}]
  %s1 = inlined_call_operand.vmem [shape: bf16[896,128], index: 1, kind: input, shape index: {}]
  %s2 = inlined_call_operand.vmem [shape: f32[1,128], index: 2, kind: input, shape index: {}]
  %s3 = inlined_call_operand.vmem [shape: f32[112,128], index: 3, kind: output, shape index: {}]
  %s4 = sld [smem:[#allocation0]]
  $region30: #{inception_b.8} parent=0
    _
  %s6 = ssub.s32 1, %s4
  %s7 = scalar_select 0, %s6, %s4
  // Predicated region
  $region2: #{inception_b.8} parent=0 // pred_check
    _
  $region3: #{inception_b.8} parent=0 // pred_check_branch
    %9 = sbr.rel (0) target = $region5
  $region4: #{inception_b.8} parent=0 // pred_region
    _
  $region5: #{inception_b.8} parent=0 // pred_fallthru
    _
  // Predicated region
  $region6: #{inception_b.8} parent=0 // pred_check
    _
  $region7: #{inception_b.8} parent=0 // pred_check_branch
    %11 = sbr.rel (0) target = $region9
  $region8: #{inception_b.8} parent=0 // pred_region
    _
  $region9: #{inception_b.8} parent=0 // pred_fallthru
    _
  // Predicated region
  $region10: #{inception_b.8} parent=0 // pred_check
    _
  $region11: #{inception_b.8} parent=0 // pred_check_branch
    %13 = sbr.rel (0) target = $region13
  $region12: #{inception_b.8} parent=0 // pred_region
    _
  $region13: #{inception_b.8} parent=0 // pred_fallthru
    _
  %p14 = scmp.eq.s32.totalorder 0, 0
  // Predicated region
  $region14: #{inception_b.8} parent=0 // pred_check
    %p15 = pneg %p14
  $region15: #{inception_b.8} parent=0 // pred_check_branch
    %17 = sbr.rel (%p15) target = $region17
  $region16: #{inception_b.8} parent=0 // pred_region
    %18 = vst [vmem:[#allocation2] sm:$0xff] 0.0
    %19 = vst [vmem:[#allocation2 + $0x8] sm:$0xff] 0.0
    %20 = vst [vmem:[#allocation2 + $0x10] sm:$0xff] 0.0
    %21 = vst [vmem:[#allocation2 + $0x18] sm:$0xff] 0.0
    %22 = vst [vmem:[#allocation2 + $0x20] sm:$0xff] 0.0
    %23 = vst [vmem:[#allocation2 + $0x28] sm:$0xff] 0.0
    %24 = vst [vmem:[#allocation2 + $0x30] sm:$0xff] 0.0
    %25 = vst [vmem:[#allocation2 + $0x38] sm:$0xff] 0.0
    %26 = vst [vmem:[#allocation2 + $0x40] sm:$0xff] 0.0
    %27 = vst [vmem:[#allocation2 + $0x48] sm:$0xff] 0.0
    %28 = vst [vmem:[#allocation2 + $0x50] sm:$0xff] 0.0
    %29 = vst [vmem:[#allocation2 + $0x58] sm:$0xff] 0.0
    %30 = vst [vmem:[#allocation2 + $0x60] sm:$0xff] 0.0
    %31 = vst [vmem:[#allocation2 + $0x68] sm:$0xff] 0.0
  $region17: #{inception_b.8} parent=0 // pred_fallthru
    _
  %v32 = vld [vmem:[#allocation2] sm:$0xff]
  %v33 = vld [vmem:[#allocation2 + $0x8] sm:$0xff]
  %v34 = vld [vmem:[#allocation2 + $0x10] sm:$0xff]
  %v35 = vld [vmem:[#allocation2 + $0x18] sm:$0xff]
  %v36 = vld [vmem:[#allocation2 + $0x20] sm:$0xff]
  %v37 = vld [vmem:[#allocation2 + $0x28] sm:$0xff]
  %v38 = vld [vmem:[#allocation2 + $0x30] sm:$0xff]
  %v39 = vld [vmem:[#allocation2 + $0x38] sm:$0xff]
  %v40 = vld [vmem:[#allocation2 + $0x40] sm:$0xff]
  %v41 = vld [vmem:[#allocation2 + $0x48] sm:$0xff]
  %v42 = vld [vmem:[#allocation2 + $0x50] sm:$0xff]
  %v43 = vld [vmem:[#allocation2 + $0x58] sm:$0xff]
  %v44 = vld [vmem:[#allocation2 + $0x60] sm:$0xff]
  %v45 = vld [vmem:[#allocation2 + $0x68] sm:$0xff]
  %v46 = vld [vmem:[%s0] sm:$0xff]
  %v47 = vld [vmem:[%s0 + $0x8] sm:$0xff]
  %v48 = vld [vmem:[%s0 + $0x10] sm:$0xff]
  %v49 = vld [vmem:[%s0 + $0x18] sm:$0xf]
  %v50 = vld [vmem:[%s0 + $0x1c] sm:$0xff]
  %v51 = vld [vmem:[%s0 + $0x24] sm:$0xff]
  %v52 = vld [vmem:[%s0 + $0x2c] sm:$0xff]
  %v53 = vld [vmem:[%s0 + $0x34] sm:$0xf]
  %v54 = vld [vmem:[%s0 + $0x38] sm:$0xff]
  %v55 = vld [vmem:[%s0 + $0x40] sm:$0xff]
  %v56 = vld [vmem:[%s0 + $0x48] sm:$0xff]
  %v57 = vld [vmem:[%s0 + $0x50] sm:$0xf]
  %v58 = vld [vmem:[%s0 + $0x54] sm:$0xff]
  %v59 = vld [vmem:[%s0 + $0x5c] sm:$0xff]
  %v60 = vld [vmem:[%s0 + $0x64] sm:$0xff]
  %v61 = vld [vmem:[%s0 + $0x6c] sm:$0xf]
  %v62 = vld [vmem:[%s0 + $0x70] sm:$0xff]
  %v63 = vld [vmem:[%s0 + $0x78] sm:$0xff]
  %v64 = vld [vmem:[%s0 + $0x80] sm:$0xff]
  %v65 = vld [vmem:[%s0 + $0x88] sm:$0xf]
  %v66 = vld [vmem:[%s0 + $0x8c] sm:$0xff]
  %v67 = vld [vmem:[%s0 + $0x94] sm:$0xff]
  %v68 = vld [vmem:[%s0 + $0x9c] sm:$0xff]
  %v69 = vld [vmem:[%s0 + $0xa4] sm:$0xf]
  %v70 = vld [vmem:[%s0 + $0xa8] sm:$0xff]
  %v71 = vld [vmem:[%s0 + $0xb0] sm:$0xff]
  %v72 = vld [vmem:[%s0 + $0xb8] sm:$0xff]
  %v73 = vld [vmem:[%s0 + $0xc0] sm:$0xf]
  %v74 = vld [vmem:[%s0 + $0xc4] sm:$0xff]
  %v75 = vld [vmem:[%s0 + $0xcc] sm:$0xff]
  %v76 = vld [vmem:[%s0 + $0xd4] sm:$0xff]
  %v77 = vld [vmem:[%s0 + $0xdc] sm:$0xf]
  %v78 = vld [vmem:[%s0 + $0xe0] sm:$0xff]
  %v79 = vld [vmem:[%s0 + $0xe8] sm:$0xff]
  %v80 = vld [vmem:[%s0 + $0xf0] sm:$0xff]
  %v81 = vld [vmem:[%s0 + $0xf8] sm:$0xf]
  %v82 = vld [vmem:[%s0 + $0xfc] sm:$0xff]
  %v83 = vld [vmem:[%s0 + $0x104] sm:$0xff]
  %v84 = vld [vmem:[%s0 + $0x10c] sm:$0xff]
  %v85 = vld [vmem:[%s0 + $0x114] sm:$0xf]
  %v86 = vld [vmem:[%s0 + $0x118] sm:$0xff]
  %v87 = vld [vmem:[%s0 + $0x120] sm:$0xff]
  %v88 = vld [vmem:[%s0 + $0x128] sm:$0xff]
  %v89 = vld [vmem:[%s0 + $0x130] sm:$0xf]
  %v90 = vld [vmem:[%s0 + $0x134] sm:$0xff]
  %v91 = vld [vmem:[%s0 + $0x13c] sm:$0xff]
  %v92 = vld [vmem:[%s0 + $0x144] sm:$0xff]
  %v93 = vld [vmem:[%s0 + $0x14c] sm:$0xf]
  %v94 = vld [vmem:[%s0 + $0x150] sm:$0xff]
  %v95 = vld [vmem:[%s0 + $0x158] sm:$0xff]
  %v96 = vld [vmem:[%s0 + $0x160] sm:$0xff]
  %v97 = vld [vmem:[%s0 + $0x168] sm:$0xf]
  %v98 = vld [vmem:[%s0 + $0x16c] sm:$0xff]
  %v99 = vld [vmem:[%s0 + $0x174] sm:$0xff]
  %v100 = vld [vmem:[%s0 + $0x17c] sm:$0xff]
  %v101 = vld [vmem:[%s0 + $0x184] sm:$0xf]
  %v102 = vld [vmem:[%s1] sm:$0xf]
  %v103 = vld [vmem:[%s1 + $0x4] sm:$0xf]
  %v104 = vld [vmem:[%s1 + $0x8] sm:$0xf]
  %v105 = vld [vmem:[%s1 + $0xc] sm:$0xf]
  %v106 = vld [vmem:[%s1 + $0x10] sm:$0xf]
  %v107 = vld [vmem:[%s1 + $0x14] sm:$0xf]
  %v108 = vld [vmem:[%s1 + $0x18] sm:$0xf]
  %v109 = vld [vmem:[%s1 + $0x1c] sm:$0xf]
  %v110 = vld [vmem:[%s1 + $0x20] sm:$0xf]
  %v111 = vld [vmem:[%s1 + $0x24] sm:$0xf]
  %v112 = vld [vmem:[%s1 + $0x28] sm:$0xf]
  %v113 = vld [vmem:[%s1 + $0x2c] sm:$0xf]
  %v114 = vld [vmem:[%s1 + $0x30] sm:$0xf]
  %v115 = vld [vmem:[%s1 + $0x34] sm:$0xf]
  %v116 = vld [vmem:[%s1 + $0x38] sm:$0xf]
  %v117 = vld [vmem:[%s1 + $0x3c] sm:$0xf]
  %v118 = vld [vmem:[%s1 + $0x40] sm:$0xf]
  %v119 = vld [vmem:[%s1 + $0x44] sm:$0xf]
  %v120 = vld [vmem:[%s1 + $0x48] sm:$0xf]
  %v121 = vld [vmem:[%s1 + $0x4c] sm:$0xf]
  %v122 = vld [vmem:[%s1 + $0x50] sm:$0xf]
  %v123 = vld [vmem:[%s1 + $0x54] sm:$0xf]
  %v124 = vld [vmem:[%s1 + $0x58] sm:$0xf]
  %v125 = vld [vmem:[%s1 + $0x5c] sm:$0xf]
  %v126 = vld [vmem:[%s1 + $0x60] sm:$0xf]
  %v127 = vld [vmem:[%s1 + $0x64] sm:$0xf]
  %v128 = vld [vmem:[%s1 + $0x68] sm:$0xf]
  %v129 = vld [vmem:[%s1 + $0x6c] sm:$0xf]
  %v130 = vld [vmem:[%s1 + $0x70] sm:$0xf]
  %v131 = vld [vmem:[%s1 + $0x74] sm:$0xf]
  %v132 = vld [vmem:[%s1 + $0x78] sm:$0xf]
  %v133 = vld [vmem:[%s1 + $0x7c] sm:$0xf]
  %v134 = vld [vmem:[%s1 + $0x80] sm:$0xf]
  %v135 = vld [vmem:[%s1 + $0x84] sm:$0xf]
  %v136 = vld [vmem:[%s1 + $0x88] sm:$0xf]
  %v137 = vld [vmem:[%s1 + $0x8c] sm:$0xf]
  %v138 = vld [vmem:[%s1 + $0x90] sm:$0xf]
  %v139 = vld [vmem:[%s1 + $0x94] sm:$0xf]
  %v140 = vld [vmem:[%s1 + $0x98] sm:$0xf]
  %v141 = vld [vmem:[%s1 + $0x9c] sm:$0xf]
  %v142 = vld [vmem:[%s1 + $0xa0] sm:$0xf]
  %v143 = vld [vmem:[%s1 + $0xa4] sm:$0xf]
  %v144 = vld [vmem:[%s1 + $0xa8] sm:$0xf]
  %v145 = vld [vmem:[%s1 + $0xac] sm:$0xf]
  %v146 = vld [vmem:[%s1 + $0xb0] sm:$0xf]
  %v147 = vld [vmem:[%s1 + $0xb4] sm:$0xf]
  %v148 = vld [vmem:[%s1 + $0xb8] sm:$0xf]
  %v149 = vld [vmem:[%s1 + $0xbc] sm:$0xf]
  %v150 = vld [vmem:[%s1 + $0xc0] sm:$0xf]
  %v151 = vld [vmem:[%s1 + $0xc4] sm:$0xf]
  %v152 = vld [vmem:[%s1 + $0xc8] sm:$0xf]
  %v153 = vld [vmem:[%s1 + $0xcc] sm:$0xf]
  %v154 = vld [vmem:[%s1 + $0xd0] sm:$0xf]
  %v155 = vld [vmem:[%s1 + $0xd4] sm:$0xf]
  %v156 = vld [vmem:[%s1 + $0xd8] sm:$0xf]
  %v157 = vld [vmem:[%s1 + $0xdc] sm:$0xf]
  %v158 = vld [vmem:[%s1 + $0xe0] sm:$0xf]
  %v159 = vld [vmem:[%s1 + $0xe4] sm:$0xf]
  %v160 = vld [vmem:[%s1 + $0xe8] sm:$0xf]
  %v161 = vld [vmem:[%s1 + $0xec] sm:$0xf]
  %v162 = vld [vmem:[%s1 + $0xf0] sm:$0xf]
  %v163 = vld [vmem:[%s1 + $0xf4] sm:$0xf]
  %v164 = vld [vmem:[%s1 + $0xf8] sm:$0xf]
  %v165 = vld [vmem:[%s1 + $0xfc] sm:$0xf]
  %v166 = vld [vmem:[%s1 + $0x100] sm:$0xf]
  %v167 = vld [vmem:[%s1 + $0x104] sm:$0xf]
  %v168 = vld [vmem:[%s1 + $0x108] sm:$0xf]
  %v169 = vld [vmem:[%s1 + $0x10c] sm:$0xf]
  %v170 = vld [vmem:[%s1 + $0x110] sm:$0xf]
  %v171 = vld [vmem:[%s1 + $0x114] sm:$0xf]
  %v172 = vld [vmem:[%s1 + $0x118] sm:$0xf]
  %v173 = vld [vmem:[%s1 + $0x11c] sm:$0xf]
  %v174 = vld [vmem:[%s1 + $0x120] sm:$0xf]
  %v175 = vld [vmem:[%s1 + $0x124] sm:$0xf]
  %v176 = vld [vmem:[%s1 + $0x128] sm:$0xf]
  %v177 = vld [vmem:[%s1 + $0x12c] sm:$0xf]
  %v178 = vld [vmem:[%s1 + $0x130] sm:$0xf]
  %v179 = vld [vmem:[%s1 + $0x134] sm:$0xf]
  %v180 = vld [vmem:[%s1 + $0x138] sm:$0xf]
  %v181 = vld [vmem:[%s1 + $0x13c] sm:$0xf]
  %v182 = vld [vmem:[%s1 + $0x140] sm:$0xf]
  %v183 = vld [vmem:[%s1 + $0x144] sm:$0xf]
  %v184 = vld [vmem:[%s1 + $0x148] sm:$0xf]
  %v185 = vld [vmem:[%s1 + $0x14c] sm:$0xf]
  %v186 = vld [vmem:[%s1 + $0x150] sm:$0xf]
  %v187 = vld [vmem:[%s1 + $0x154] sm:$0xf]
  %v188 = vld [vmem:[%s1 + $0x158] sm:$0xf]
  %v189 = vld [vmem:[%s1 + $0x15c] sm:$0xf]
  %v190 = vld [vmem:[%s1 + $0x160] sm:$0xf]
  %v191 = vld [vmem:[%s1 + $0x164] sm:$0xf]
  %v192 = vld [vmem:[%s1 + $0x168] sm:$0xf]
  %v193 = vld [vmem:[%s1 + $0x16c] sm:$0xf]
  %v194 = vld [vmem:[%s1 + $0x170] sm:$0xf]
  %v195 = vld [vmem:[%s1 + $0x174] sm:$0xf]
  %v196 = vld [vmem:[%s1 + $0x178] sm:$0xf]
  %v197 = vld [vmem:[%s1 + $0x17c] sm:$0xf]
  %v198 = vld [vmem:[%s1 + $0x180] sm:$0xf]
  %v199 = vld [vmem:[%s1 + $0x184] sm:$0xf]
  %v200 = vld [vmem:[%s1 + $0x188] sm:$0xf]
  %v201 = vld [vmem:[%s1 + $0x18c] sm:$0xf]
  %v202 = vld [vmem:[%s1 + $0x190] sm:$0xf]
  %v203 = vld [vmem:[%s1 + $0x194] sm:$0xf]
  %v204 = vld [vmem:[%s1 + $0x198] sm:$0xf]
  %v205 = vld [vmem:[%s1 + $0x19c] sm:$0xf]
  %v206 = vld [vmem:[%s1 + $0x1a0] sm:$0xf]
  %v207 = vld [vmem:[%s1 + $0x1a4] sm:$0xf]
  %v208 = vld [vmem:[%s1 + $0x1a8] sm:$0xf]
  %v209 = vld [vmem:[%s1 + $0x1ac] sm:$0xf]
  %v210 = vld [vmem:[%s1 + $0x1b0] sm:$0xf]
  %v211 = vld [vmem:[%s1 + $0x1b4] sm:$0xf]
  %v212 = vld [vmem:[%s1 + $0x1b8] sm:$0xf]
  %v213 = vld [vmem:[%s1 + $0x1bc] sm:$0xf]
  %v270 = vunpack.c.l.b16 %v46
  %v271 = vunpack.c.h.b16 %v46
  %v272 = vunpack.c.l.b16 %v47
  %v273 = vunpack.c.h.b16 %v47
  %v274 = vunpack.c.l.b16 %v48
  %v275 = vunpack.c.h.b16 %v48
  %v276 = vunpack.c.l.b16 %v49
  %v277 = vunpack.c.l.b16 %v50
  %v278 = vunpack.c.h.b16 %v50
  %v279 = vunpack.c.l.b16 %v51
  %v280 = vunpack.c.h.b16 %v51
  %v281 = vunpack.c.l.b16 %v52
  %v282 = vunpack.c.h.b16 %v52
  %v283 = vunpack.c.l.b16 %v53
  %v284 = vunpack.c.l.b16 %v54
  %v285 = vunpack.c.h.b16 %v54
  %v286 = vunpack.c.l.b16 %v55
  %v287 = vunpack.c.h.b16 %v55
  %v288 = vunpack.c.l.b16 %v56
  %v289 = vunpack.c.h.b16 %v56
  %v290 = vunpack.c.l.b16 %v57
  %v291 = vunpack.c.l.b16 %v58
  %v292 = vunpack.c.h.b16 %v58
  %v293 = vunpack.c.l.b16 %v59
  %v294 = vunpack.c.h.b16 %v59
  %v295 = vunpack.c.l.b16 %v60
  %v296 = vunpack.c.h.b16 %v60
  %v297 = vunpack.c.l.b16 %v61
  %v298 = vunpack.c.l.b16 %v62
  %v299 = vunpack.c.h.b16 %v62
  %v300 = vunpack.c.l.b16 %v63
  %v301 = vunpack.c.h.b16 %v63
  %v302 = vunpack.c.l.b16 %v64
  %v303 = vunpack.c.h.b16 %v64
  %v304 = vunpack.c.l.b16 %v65
  %v305 = vunpack.c.l.b16 %v66
  %v306 = vunpack.c.h.b16 %v66
  %v307 = vunpack.c.l.b16 %v67
  %v308 = vunpack.c.h.b16 %v67
  %v309 = vunpack.c.l.b16 %v68
  %v310 = vunpack.c.h.b16 %v68
  %v311 = vunpack.c.l.b16 %v69
  %v312 = vunpack.c.l.b16 %v70
  %v313 = vunpack.c.h.b16 %v70
  %v314 = vunpack.c.l.b16 %v71
  %v315 = vunpack.c.h.b16 %v71
  %v316 = vunpack.c.l.b16 %v72
  %v317 = vunpack.c.h.b16 %v72
  %v318 = vunpack.c.l.b16 %v73
  %v319 = vunpack.c.l.b16 %v74
  %v320 = vunpack.c.h.b16 %v74
  %v321 = vunpack.c.l.b16 %v75
  %v322 = vunpack.c.h.b16 %v75
  %v323 = vunpack.c.l.b16 %v76
  %v324 = vunpack.c.h.b16 %v76
  %v325 = vunpack.c.l.b16 %v77
  %v326 = vunpack.c.l.b16 %v78
  %v327 = vunpack.c.h.b16 %v78
  %v328 = vunpack.c.l.b16 %v79
  %v329 = vunpack.c.h.b16 %v79
  %v330 = vunpack.c.l.b16 %v80
  %v331 = vunpack.c.h.b16 %v80
  %v332 = vunpack.c.l.b16 %v81
  %v333 = vunpack.c.l.b16 %v82
  %v334 = vunpack.c.h.b16 %v82
  %v335 = vunpack.c.l.b16 %v83
  %v336 = vunpack.c.h.b16 %v83
  %v337 = vunpack.c.l.b16 %v84
  %v338 = vunpack.c.h.b16 %v84
  %v339 = vunpack.c.l.b16 %v85
  %v340 = vunpack.c.l.b16 %v86
  %v341 = vunpack.c.h.b16 %v86
  %v342 = vunpack.c.l.b16 %v87
  %v343 = vunpack.c.h.b16 %v87
  %v344 = vunpack.c.l.b16 %v88
  %v345 = vunpack.c.h.b16 %v88
  %v346 = vunpack.c.l.b16 %v89
  %v347 = vunpack.c.l.b16 %v90
  %v348 = vunpack.c.h.b16 %v90
  %v349 = vunpack.c.l.b16 %v91
  %v350 = vunpack.c.h.b16 %v91
  %v351 = vunpack.c.l.b16 %v92
  %v352 = vunpack.c.h.b16 %v92
  %v353 = vunpack.c.l.b16 %v93
  %v354 = vunpack.c.l.b16 %v94
  %v355 = vunpack.c.h.b16 %v94
  %v356 = vunpack.c.l.b16 %v95
  %v357 = vunpack.c.h.b16 %v95
  %v358 = vunpack.c.l.b16 %v96
  %v359 = vunpack.c.h.b16 %v96
  %v360 = vunpack.c.l.b16 %v97
  %v361 = vunpack.c.l.b16 %v98
  %v362 = vunpack.c.h.b16 %v98
  %v363 = vunpack.c.l.b16 %v99
  %v364 = vunpack.c.h.b16 %v99
  %v365 = vunpack.c.l.b16 %v100
  %v366 = vunpack.c.h.b16 %v100
  %v367 = vunpack.c.l.b16 %v101
  %v368 = vpack.c.b16 %v277, %v270
  %v369 = vpack.c.b16 %v278, %v271
  %v370 = vpack.c.b16 %v279, %v272
  %v371 = vpack.c.b16 %v280, %v273
  %v372 = vpack.c.b16 %v281, %v274
  %v373 = vpack.c.b16 %v282, %v275
  %v374 = vpack.c.b16 %v283, %v276
  %v375 = vpack.c.b16 %v291, %v284
  %v376 = vpack.c.b16 %v292, %v285
  %v377 = vpack.c.b16 %v293, %v286
  %v378 = vpack.c.b16 %v294, %v287
  %v379 = vpack.c.b16 %v295, %v288
  %v380 = vpack.c.b16 %v296, %v289
  %v381 = vpack.c.b16 %v297, %v290
  %v382 = vpack.c.b16 %v305, %v298
  %v383 = vpack.c.b16 %v306, %v299
  %v384 = vpack.c.b16 %v307, %v300
  %v385 = vpack.c.b16 %v308, %v301
  %v386 = vpack.c.b16 %v309, %v302
  %v387 = vpack.c.b16 %v310, %v303
  %v388 = vpack.c.b16 %v311, %v304
  %v389 = vpack.c.b16 %v319, %v312
  %v390 = vpack.c.b16 %v320, %v313
  %v391 = vpack.c.b16 %v321, %v314
  %v392 = vpack.c.b16 %v322, %v315
  %v393 = vpack.c.b16 %v323, %v316
  %v394 = vpack.c.b16 %v324, %v317
  %v395 = vpack.c.b16 %v325, %v318
  %v396 = vpack.c.b16 %v333, %v326
  %v397 = vpack.c.b16 %v334, %v327
  %v398 = vpack.c.b16 %v335, %v328
  %v399 = vpack.c.b16 %v336, %v329
  %v400 = vpack.c.b16 %v337, %v330
  %v401 = vpack.c.b16 %v338, %v331
  %v402 = vpack.c.b16 %v339, %v332
  %v403 = vpack.c.b16 %v347, %v340
  %v404 = vpack.c.b16 %v348, %v341
  %v405 = vpack.c.b16 %v349, %v342
  %v406 = vpack.c.b16 %v350, %v343
  %v407 = vpack.c.b16 %v351, %v344
  %v408 = vpack.c.b16 %v352, %v345
  %v409 = vpack.c.b16 %v353, %v346
  %v410 = vpack.c.b16 %v361, %v354
  %v411 = vpack.c.b16 %v362, %v355
  %v412 = vpack.c.b16 %v363, %v356
  %v413 = vpack.c.b16 %v364, %v357
  %v414 = vpack.c.b16 %v365, %v358
  %v415 = vpack.c.b16 %v366, %v359
  %v416 = vpack.c.b16 %v367, %v360
  %v578 = vunpack.c.l.b16 %v102
  %v579 = vunpack.c.l.b16 %v103
  %v580 = vunpack.c.l.b16 %v104
  %v581 = vunpack.c.l.b16 %v105
  %v582 = vunpack.c.l.b16 %v106
  %v583 = vunpack.c.l.b16 %v107
  %v584 = vunpack.c.l.b16 %v108
  %v585 = vunpack.c.l.b16 %v109
  %v586 = vunpack.c.l.b16 %v110
  %v587 = vunpack.c.l.b16 %v111
  %v588 = vunpack.c.l.b16 %v112
  %v589 = vunpack.c.l.b16 %v113
  %v590 = vunpack.c.l.b16 %v114
  %v591 = vunpack.c.l.b16 %v115
  %v592 = vunpack.c.l.b16 %v116
  %v593 = vunpack.c.l.b16 %v117
  %v594 = vunpack.c.l.b16 %v118
  %v595 = vunpack.c.l.b16 %v119
  %v596 = vunpack.c.l.b16 %v120
  %v597 = vunpack.c.l.b16 %v121
  %v598 = vunpack.c.l.b16 %v122
  %v599 = vunpack.c.l.b16 %v123
  %v600 = vunpack.c.l.b16 %v124
  %v601 = vunpack.c.l.b16 %v125
  %v602 = vunpack.c.l.b16 %v126
  %v603 = vunpack.c.l.b16 %v127
  %v604 = vunpack.c.l.b16 %v128
  %v605 = vunpack.c.l.b16 %v129
  %v606 = vunpack.c.l.b16 %v130
  %v607 = vunpack.c.l.b16 %v131
  %v608 = vunpack.c.l.b16 %v132
  %v609 = vunpack.c.l.b16 %v133
  %v610 = vunpack.c.l.b16 %v134
  %v611 = vunpack.c.l.b16 %v135
  %v612 = vunpack.c.l.b16 %v136
  %v613 = vunpack.c.l.b16 %v137
  %v614 = vunpack.c.l.b16 %v138
  %v615 = vunpack.c.l.b16 %v139
  %v616 = vunpack.c.l.b16 %v140
  %v617 = vunpack.c.l.b16 %v141
  %v618 = vunpack.c.l.b16 %v142
  %v619 = vunpack.c.l.b16 %v143
  %v620 = vunpack.c.l.b16 %v144
  %v621 = vunpack.c.l.b16 %v145
  %v622 = vunpack.c.l.b16 %v146
  %v623 = vunpack.c.l.b16 %v147
  %v624 = vunpack.c.l.b16 %v148
  %v625 = vunpack.c.l.b16 %v149
  %v626 = vunpack.c.l.b16 %v150
  %v627 = vunpack.c.l.b16 %v151
  %v628 = vunpack.c.l.b16 %v152
  %v629 = vunpack.c.l.b16 %v153
  %v630 = vunpack.c.l.b16 %v154
  %v631 = vunpack.c.l.b16 %v155
  %v632 = vunpack.c.l.b16 %v156
  %v633 = vunpack.c.l.b16 %v157
  %v634 = vunpack.c.l.b16 %v158
  %v635 = vunpack.c.l.b16 %v159
  %v636 = vunpack.c.l.b16 %v160
  %v637 = vunpack.c.l.b16 %v161
  %v638 = vunpack.c.l.b16 %v162
  %v639 = vunpack.c.l.b16 %v163
  %v640 = vunpack.c.l.b16 %v164
  %v641 = vunpack.c.l.b16 %v165
  %v642 = vunpack.c.l.b16 %v166
  %v643 = vunpack.c.l.b16 %v167
  %v644 = vunpack.c.l.b16 %v168
  %v645 = vunpack.c.l.b16 %v169
  %v646 = vunpack.c.l.b16 %v170
  %v647 = vunpack.c.l.b16 %v171
  %v648 = vunpack.c.l.b16 %v172
  %v649 = vunpack.c.l.b16 %v173
  %v650 = vunpack.c.l.b16 %v174
  %v651 = vunpack.c.l.b16 %v175
  %v652 = vunpack.c.l.b16 %v176
  %v653 = vunpack.c.l.b16 %v177
  %v654 = vunpack.c.l.b16 %v178
  %v655 = vunpack.c.l.b16 %v179
  %v656 = vunpack.c.l.b16 %v180
  %v657 = vunpack.c.l.b16 %v181
  %v658 = vunpack.c.l.b16 %v182
  %v659 = vunpack.c.l.b16 %v183
  %v660 = vunpack.c.l.b16 %v184
  %v661 = vunpack.c.l.b16 %v185
  %v662 = vunpack.c.l.b16 %v186
  %v663 = vunpack.c.l.b16 %v187
  %v664 = vunpack.c.l.b16 %v188
  %v665 = vunpack.c.l.b16 %v189
  %v666 = vunpack.c.l.b16 %v190
  %v667 = vunpack.c.l.b16 %v191
  %v668 = vunpack.c.l.b16 %v192
  %v669 = vunpack.c.l.b16 %v193
  %v670 = vunpack.c.l.b16 %v194
  %v671 = vunpack.c.l.b16 %v195
  %v672 = vunpack.c.l.b16 %v196
  %v673 = vunpack.c.l.b16 %v197
  %v674 = vunpack.c.l.b16 %v198
  %v675 = vunpack.c.l.b16 %v199
  %v676 = vunpack.c.l.b16 %v200
  %v677 = vunpack.c.l.b16 %v201
  %v678 = vunpack.c.l.b16 %v202
  %v679 = vunpack.c.l.b16 %v203
  %v680 = vunpack.c.l.b16 %v204
  %v681 = vunpack.c.l.b16 %v205
  %v682 = vunpack.c.l.b16 %v206
  %v683 = vunpack.c.l.b16 %v207
  %v684 = vunpack.c.l.b16 %v208
  %v685 = vunpack.c.l.b16 %v209
  %v686 = vunpack.c.l.b16 %v210
  %v687 = vunpack.c.l.b16 %v211
  %v688 = vunpack.c.l.b16 %v212
  %v689 = vunpack.c.l.b16 %v213
  %v690 = vpack.c.b16 %v579, %v578
  %v691 = vpack.c.b16 %v581, %v580
  %v692 = vpack.c.b16 %v583, %v582
  %v693 = vpack.c.b16 %v585, %v584
  %v694 = vpack.c.b16 %v587, %v586
  %v695 = vpack.c.b16 %v589, %v588
  %v696 = vpack.c.b16 %v591, %v590
  %v697 = vpack.c.b16 %v593, %v592
  %v698 = vpack.c.b16 %v595, %v594
  %v699 = vpack.c.b16 %v597, %v596
  %v700 = vpack.c.b16 %v599, %v598
  %v701 = vpack.c.b16 %v601, %v600
  %v702 = vpack.c.b16 %v603, %v602
  %v703 = vpack.c.b16 %v605, %v604
  %v704 = vpack.c.b16 %v607, %v606
  %v705 = vpack.c.b16 %v609, %v608
  %v706 = vpack.c.b16 %v611, %v610
  %v707 = vpack.c.b16 %v613, %v612
  %v708 = vpack.c.b16 %v615, %v614
  %v709 = vpack.c.b16 %v617, %v616
  %v710 = vpack.c.b16 %v619, %v618
  %v711 = vpack.c.b16 %v621, %v620
  %v712 = vpack.c.b16 %v623, %v622
  %v713 = vpack.c.b16 %v625, %v624
  %v714 = vpack.c.b16 %v627, %v626
  %v715 = vpack.c.b16 %v629, %v628
  %v716 = vpack.c.b16 %v631, %v630
  %v717 = vpack.c.b16 %v633, %v632
  %v718 = vpack.c.b16 %v635, %v634
  %v719 = vpack.c.b16 %v637, %v636
  %v720 = vpack.c.b16 %v639, %v638
  %v721 = vpack.c.b16 %v641, %v640
  %v722 = vpack.c.b16 %v643, %v642
  %v723 = vpack.c.b16 %v645, %v644
  %v724 = vpack.c.b16 %v647, %v646
  %v725 = vpack.c.b16 %v649, %v648
  %v726 = vpack.c.b16 %v651, %v650
  %v727 = vpack.c.b16 %v653, %v652
  %v728 = vpack.c.b16 %v655, %v654
  %v729 = vpack.c.b16 %v657, %v656
  %v730 = vpack.c.b16 %v659, %v658
  %v731 = vpack.c.b16 %v661, %v660
  %v732 = vpack.c.b16 %v663, %v662
  %v733 = vpack.c.b16 %v665, %v664
  %v734 = vpack.c.b16 %v667, %v666
  %v735 = vpack.c.b16 %v669, %v668
  %v736 = vpack.c.b16 %v671, %v670
  %v737 = vpack.c.b16 %v673, %v672
  %v738 = vpack.c.b16 %v675, %v674
  %v739 = vpack.c.b16 %v677, %v676
  %v740 = vpack.c.b16 %v679, %v678
  %v741 = vpack.c.b16 %v681, %v680
  %v742 = vpack.c.b16 %v683, %v682
  %v743 = vpack.c.b16 %v685, %v684
  %v744 = vpack.c.b16 %v687, %v686
  %v745 = vpack.c.b16 %v689, %v688
  %802 = vmatpush.bf16.msra.mxu0 %v697
  %803 = vmatpush.bf16.msra.mxu0 %v696
  %804 = vmatpush.bf16.msra.mxu0 %v695
  %805 = vmatpush.bf16.msra.mxu0 %v694
  %806 = vmatpush.bf16.msra.mxu0 %v693
  %807 = vmatpush.bf16.msra.mxu0 %v692
  %808 = vmatpush.bf16.msra.mxu0 %v691
  %809 = vmatpush.bf16.msra.mxu0 %v690
  %810 = vmatmul.bf16.gmra.mxu0 %v368
  %v811 = vpop.f32.mrf.mxu0
  %v812 = vadd.f32 0.0, %v811
  %v813 = vpop.f32.mrf.mxu0
  %v814 = vadd.f32 0.0, %v813
  %815 = vmatmul.bf16.gmra.mxu0 %v375
  %v816 = vpop.f32.mrf.mxu0
  %v817 = vadd.f32 0.0, %v816
  %v818 = vpop.f32.mrf.mxu0
  %v819 = vadd.f32 0.0, %v818
  %820 = vmatmul.bf16.gmra.mxu0 %v382
  %v821 = vpop.f32.mrf.mxu0
  %v822 = vadd.f32 0.0, %v821
  %v823 = vpop.f32.mrf.mxu0
  %v824 = vadd.f32 0.0, %v823
  %825 = vmatmul.bf16.gmra.mxu0 %v389
  %v826 = vpop.f32.mrf.mxu0
  %v827 = vadd.f32 0.0, %v826
  %v828 = vpop.f32.mrf.mxu0
  %v829 = vadd.f32 0.0, %v828
  %830 = vmatmul.bf16.gmra.mxu0 %v396
  %v831 = vpop.f32.mrf.mxu0
  %v832 = vadd.f32 0.0, %v831
  %v833 = vpop.f32.mrf.mxu0
  %v834 = vadd.f32 0.0, %v833
  %835 = vmatmul.bf16.gmra.mxu0 %v403
  %v836 = vpop.f32.mrf.mxu0
  %v837 = vadd.f32 0.0, %v836
  %v838 = vpop.f32.mrf.mxu0
  %v839 = vadd.f32 0.0, %v838
  %840 = vmatmul.bf16.gmra.mxu0 %v410
  %v841 = vpop.f32.mrf.mxu0
  %v842 = vadd.f32 0.0, %v841
  %v843 = vpop.f32.mrf.mxu0
  %v844 = vadd.f32 0.0, %v843
  %845 = vdwg.mxu0
  %846 = vmatpush.bf16.msra.mxu0 %v705
  %847 = vmatpush.bf16.msra.mxu0 %v704
  %848 = vmatpush.bf16.msra.mxu0 %v703
  %849 = vmatpush.bf16.msra.mxu0 %v702
  %850 = vmatpush.bf16.msra.mxu0 %v701
  %851 = vmatpush.bf16.msra.mxu0 %v700
  %852 = vmatpush.bf16.msra.mxu0 %v699
  %853 = vmatpush.bf16.msra.mxu0 %v698
  %854 = vmatmul.bf16.gmra.mxu0 %v369
  %v855 = vpop.f32.mrf.mxu0
  %v856 = vadd.f32 %v812, %v855
  %v857 = vpop.f32.mrf.mxu0
  %v858 = vadd.f32 %v814, %v857
  %859 = vmatmul.bf16.gmra.mxu0 %v376
  %v860 = vpop.f32.mrf.mxu0
  %v861 = vadd.f32 %v817, %v860
  %v862 = vpop.f32.mrf.mxu0
  %v863 = vadd.f32 %v819, %v862
  %864 = vmatmul.bf16.gmra.mxu0 %v383
  %v865 = vpop.f32.mrf.mxu0
  %v866 = vadd.f32 %v822, %v865
  %v867 = vpop.f32.mrf.mxu0
  %v868 = vadd.f32 %v824, %v867
  %869 = vmatmul.bf16.gmra.mxu0 %v390
  %v870 = vpop.f32.mrf.mxu0
  %v871 = vadd.f32 %v827, %v870
  %v872 = vpop.f32.mrf.mxu0
  %v873 = vadd.f32 %v829, %v872
  %874 = vmatmul.bf16.gmra.mxu0 %v397
  %v875 = vpop.f32.mrf.mxu0
  %v876 = vadd.f32 %v832, %v875
  %v877 = vpop.f32.mrf.mxu0
  %v878 = vadd.f32 %v834, %v877
  %879 = vmatmul.bf16.gmra.mxu0 %v404
  %v880 = vpop.f32.mrf.mxu0
  %v881 = vadd.f32 %v837, %v880
  %v882 = vpop.f32.mrf.mxu0
  %v883 = vadd.f32 %v839, %v882
  %884 = vmatmul.bf16.gmra.mxu0 %v411
  %v885 = vpop.f32.mrf.mxu0
  %v886 = vadd.f32 %v842, %v885
  %v887 = vpop.f32.mrf.mxu0
  %v888 = vadd.f32 %v844, %v887
  %889 = vdwg.mxu0
  %890 = vmatpush.bf16.msra.mxu0 %v713
  %891 = vmatpush.bf16.msra.mxu0 %v712
  %892 = vmatpush.bf16.msra.mxu0 %v711
  %893 = vmatpush.bf16.msra.mxu0 %v710
  %894 = vmatpush.bf16.msra.mxu0 %v709
  %895 = vmatpush.bf16.msra.mxu0 %v708
  %896 = vmatpush.bf16.msra.mxu0 %v707
  %897 = vmatpush.bf16.msra.mxu0 %v706
  %898 = vmatmul.bf16.gmra.mxu0 %v370
  %v899 = vpop.f32.mrf.mxu0
  %v900 = vadd.f32 %v856, %v899
  %v901 = vpop.f32.mrf.mxu0
  %v902 = vadd.f32 %v858, %v901
  %903 = vmatmul.bf16.gmra.mxu0 %v377
  %v904 = vpop.f32.mrf.mxu0
  %v905 = vadd.f32 %v861, %v904
  %v906 = vpop.f32.mrf.mxu0
  %v907 = vadd.f32 %v863, %v906
  %908 = vmatmul.bf16.gmra.mxu0 %v384
  %v909 = vpop.f32.mrf.mxu0
  %v910 = vadd.f32 %v866, %v909
  %v911 = vpop.f32.mrf.mxu0
  %v912 = vadd.f32 %v868, %v911
  %913 = vmatmul.bf16.gmra.mxu0 %v391
  %v914 = vpop.f32.mrf.mxu0
  %v915 = vadd.f32 %v871, %v914
  %v916 = vpop.f32.mrf.mxu0
  %v917 = vadd.f32 %v873, %v916
  %918 = vmatmul.bf16.gmra.mxu0 %v398
  %v919 = vpop.f32.mrf.mxu0
  %v920 = vadd.f32 %v876, %v919
  %v921 = vpop.f32.mrf.mxu0
  %v922 = vadd.f32 %v878, %v921
  %923 = vmatmul.bf16.gmra.mxu0 %v405
  %v924 = vpop.f32.mrf.mxu0
  %v925 = vadd.f32 %v881, %v924
  %v926 = vpop.f32.mrf.mxu0
  %v927 = vadd.f32 %v883, %v926
  %928 = vmatmul.bf16.gmra.mxu0 %v412
  %v929 = vpop.f32.mrf.mxu0
  %v930 = vadd.f32 %v886, %v929
  %v931 = vpop.f32.mrf.mxu0
  %v932 = vadd.f32 %v888, %v931
  %933 = vdwg.mxu0
  %934 = vmatpush.bf16.msra.mxu0 %v721
  %935 = vmatpush.bf16.msra.mxu0 %v720
  %936 = vmatpush.bf16.msra.mxu0 %v719
  %937 = vmatpush.bf16.msra.mxu0 %v718
  %938 = vmatpush.bf16.msra.mxu0 %v717
  %939 = vmatpush.bf16.msra.mxu0 %v716
  %940 = vmatpush.bf16.msra.mxu0 %v715
  %941 = vmatpush.bf16.msra.mxu0 %v714
  %942 = vmatmul.bf16.gmra.mxu0 %v371
  %v943 = vpop.f32.mrf.mxu0
  %v944 = vadd.f32 %v900, %v943
  %v945 = vpop.f32.mrf.mxu0
  %v946 = vadd.f32 %v902, %v945
  %947 = vmatmul.bf16.gmra.mxu0 %v378
  %v948 = vpop.f32.mrf.mxu0
  %v949 = vadd.f32 %v905, %v948
  %v950 = vpop.f32.mrf.mxu0
  %v951 = vadd.f32 %v907, %v950
  %952 = vmatmul.bf16.gmra.mxu0 %v385
  %v953 = vpop.f32.mrf.mxu0
  %v954 = vadd.f32 %v910, %v953
  %v955 = vpop.f32.mrf.mxu0
  %v956 = vadd.f32 %v912, %v955
  %957 = vmatmul.bf16.gmra.mxu0 %v392
  %v958 = vpop.f32.mrf.mxu0
  %v959 = vadd.f32 %v915, %v958
  %v960 = vpop.f32.mrf.mxu0
  %v961 = vadd.f32 %v917, %v960
  %962 = vmatmul.bf16.gmra.mxu0 %v399
  %v963 = vpop.f32.mrf.mxu0
  %v964 = vadd.f32 %v920, %v963
  %v965 = vpop.f32.mrf.mxu0
  %v966 = vadd.f32 %v922, %v965
  %967 = vmatmul.bf16.gmra.mxu0 %v406
  %v968 = vpop.f32.mrf.mxu0
  %v969 = vadd.f32 %v925, %v968
  %v970 = vpop.f32.mrf.mxu0
  %v971 = vadd.f32 %v927, %v970
  %972 = vmatmul.bf16.gmra.mxu0 %v413
  %v973 = vpop.f32.mrf.mxu0
  %v974 = vadd.f32 %v930, %v973
  %v975 = vpop.f32.mrf.mxu0
  %v976 = vadd.f32 %v932, %v975
  %977 = vdwg.mxu0
  %978 = vmatpush.bf16.msra.mxu0 %v729
  %979 = vmatpush.bf16.msra.mxu0 %v728
  %980 = vmatpush.bf16.msra.mxu0 %v727
  %981 = vmatpush.bf16.msra.mxu0 %v726
  %982 = vmatpush.bf16.msra.mxu0 %v725
  %983 = vmatpush.bf16.msra.mxu0 %v724
  %984 = vmatpush.bf16.msra.mxu0 %v723
  %985 = vmatpush.bf16.msra.mxu0 %v722
  %986 = vmatmul.bf16.gmra.mxu0 %v372
  %v987 = vpop.f32.mrf.mxu0
  %v988 = vadd.f32 %v944, %v987
  %v989 = vpop.f32.mrf.mxu0
  %v990 = vadd.f32 %v946, %v989
  %991 = vmatmul.bf16.gmra.mxu0 %v379
  %v992 = vpop.f32.mrf.mxu0
  %v993 = vadd.f32 %v949, %v992
  %v994 = vpop.f32.mrf.mxu0
  %v995 = vadd.f32 %v951, %v994
  %996 = vmatmul.bf16.gmra.mxu0 %v386
  %v997 = vpop.f32.mrf.mxu0
  %v998 = vadd.f32 %v954, %v997
  %v999 = vpop.f32.mrf.mxu0
  %v1000 = vadd.f32 %v956, %v999
  %1001 = vmatmul.bf16.gmra.mxu0 %v393
  %v1002 = vpop.f32.mrf.mxu0
  %v1003 = vadd.f32 %v959, %v1002
  %v1004 = vpop.f32.mrf.mxu0
  %v1005 = vadd.f32 %v961, %v1004
  %1006 = vmatmul.bf16.gmra.mxu0 %v400
  %v1007 = vpop.f32.mrf.mxu0
  %v1008 = vadd.f32 %v964, %v1007
  %v1009 = vpop.f32.mrf.mxu0
  %v1010 = vadd.f32 %v966, %v1009
  %1011 = vmatmul.bf16.gmra.mxu0 %v407
  %v1012 = vpop.f32.mrf.mxu0
  %v1013 = vadd.f32 %v969, %v1012
  %v1014 = vpop.f32.mrf.mxu0
  %v1015 = vadd.f32 %v971, %v1014
  %1016 = vmatmul.bf16.gmra.mxu0 %v414
  %v1017 = vpop.f32.mrf.mxu0
  %v1018 = vadd.f32 %v974, %v1017
  %v1019 = vpop.f32.mrf.mxu0
  %v1020 = vadd.f32 %v976, %v1019
  %1021 = vdwg.mxu0
  %1022 = vmatpush.bf16.msra.mxu0 %v737
  %1023 = vmatpush.bf16.msra.mxu0 %v736
  %1024 = vmatpush.bf16.msra.mxu0 %v735
  %1025 = vmatpush.bf16.msra.mxu0 %v734
  %1026 = vmatpush.bf16.msra.mxu0 %v733
  %1027 = vmatpush.bf16.msra.mxu0 %v732
  %1028 = vmatpush.bf16.msra.mxu0 %v731
  %1029 = vmatpush.bf16.msra.mxu0 %v730
  %1030 = vmatmul.bf16.gmra.mxu0 %v373
  %v1031 = vpop.f32.mrf.mxu0
  %v1032 = vadd.f32 %v988, %v1031
  %v1033 = vpop.f32.mrf.mxu0
  %v1034 = vadd.f32 %v990, %v1033
  %1035 = vmatmul.bf16.gmra.mxu0 %v380
  %v1036 = vpop.f32.mrf.mxu0
  %v1037 = vadd.f32 %v993, %v1036
  %v1038 = vpop.f32.mrf.mxu0
  %v1039 = vadd.f32 %v995, %v1038
  %1040 = vmatmul.bf16.gmra.mxu0 %v387
  %v1041 = vpop.f32.mrf.mxu0
  %v1042 = vadd.f32 %v998, %v1041
  %v1043 = vpop.f32.mrf.mxu0
  %v1044 = vadd.f32 %v1000, %v1043
  %1045 = vmatmul.bf16.gmra.mxu0 %v394
  %v1046 = vpop.f32.mrf.mxu0
  %v1047 = vadd.f32 %v1003, %v1046
  %v1048 = vpop.f32.mrf.mxu0
  %v1049 = vadd.f32 %v1005, %v1048
  %1050 = vmatmul.bf16.gmra.mxu0 %v401
  %v1051 = vpop.f32.mrf.mxu0
  %v1052 = vadd.f32 %v1008, %v1051
  %v1053 = vpop.f32.mrf.mxu0
  %v1054 = vadd.f32 %v1010, %v1053
  %1055 = vmatmul.bf16.gmra.mxu0 %v408
  %v1056 = vpop.f32.mrf.mxu0
  %v1057 = vadd.f32 %v1013, %v1056
  %v1058 = vpop.f32.mrf.mxu0
  %v1059 = vadd.f32 %v1015, %v1058
  %1060 = vmatmul.bf16.gmra.mxu0 %v415
  %v1061 = vpop.f32.mrf.mxu0
  %v1062 = vadd.f32 %v1018, %v1061
  %v1063 = vpop.f32.mrf.mxu0
  %v1064 = vadd.f32 %v1020, %v1063
  %1065 = vdwg.mxu0
  %1066 = vmatpush.bf16.msra.mxu0 %v745
  %1067 = vmatpush.bf16.msra.mxu0 %v744
  %1068 = vmatpush.bf16.msra.mxu0 %v743
  %1069 = vmatpush.bf16.msra.mxu0 %v742
  %1070 = vmatpush.bf16.msra.mxu0 %v741
  %1071 = vmatpush.bf16.msra.mxu0 %v740
  %1072 = vmatpush.bf16.msra.mxu0 %v739
  %1073 = vmatpush.bf16.msra.mxu0 %v738
  %1074 = vmatmul.bf16.gmra.mxu0 %v374
  %v1075 = vpop.f32.mrf.mxu0
  %v1076 = vadd.f32 %v1032, %v1075
  %v1077 = vpop.f32.mrf.mxu0
  %v1078 = vadd.f32 %v1034, %v1077
  %1079 = vmatmul.bf16.gmra.mxu0 %v381
  %v1080 = vpop.f32.mrf.mxu0
  %v1081 = vadd.f32 %v1037, %v1080
  %v1082 = vpop.f32.mrf.mxu0
  %v1083 = vadd.f32 %v1039, %v1082
  %1084 = vmatmul.bf16.gmra.mxu0 %v388
  %v1085 = vpop.f32.mrf.mxu0
  %v1086 = vadd.f32 %v1042, %v1085
  %v1087 = vpop.f32.mrf.mxu0
  %v1088 = vadd.f32 %v1044, %v1087
  %1089 = vmatmul.bf16.gmra.mxu0 %v395
  %v1090 = vpop.f32.mrf.mxu0
  %v1091 = vadd.f32 %v1047, %v1090
  %v1092 = vpop.f32.mrf.mxu0
  %v1093 = vadd.f32 %v1049, %v1092
  %1094 = vmatmul.bf16.gmra.mxu0 %v402
  %v1095 = vpop.f32.mrf.mxu0
  %v1096 = vadd.f32 %v1052, %v1095
  %v1097 = vpop.f32.mrf.mxu0
  %v1098 = vadd.f32 %v1054, %v1097
  %1099 = vmatmul.bf16.gmra.mxu0 %v409
  %v1100 = vpop.f32.mrf.mxu0
  %v1101 = vadd.f32 %v1057, %v1100
  %v1102 = vpop.f32.mrf.mxu0
  %v1103 = vadd.f32 %v1059, %v1102
  %1104 = vmatmul.bf16.gmra.mxu0 %v416
  %v1105 = vpop.f32.mrf.mxu0
  %v1106 = vadd.f32 %v1062, %v1105
  %v1107 = vpop.f32.mrf.mxu0
  %v1108 = vadd.f32 %v1064, %v1107
  %1109 = vdwg.mxu0
  %v1110 = vadd.f32 %v32, %v1076
  %v1111 = vadd.f32 %v33, %v1078
  %v1112 = vadd.f32 %v34, %v1081
  %v1113 = vadd.f32 %v35, %v1083
  %v1114 = vadd.f32 %v36, %v1086
  %v1115 = vadd.f32 %v37, %v1088
  %v1116 = vadd.f32 %v38, %v1091
  %v1117 = vadd.f32 %v39, %v1093
  %v1118 = vadd.f32 %v40, %v1096
  %v1119 = vadd.f32 %v41, %v1098
  %v1120 = vadd.f32 %v42, %v1101
  %v1121 = vadd.f32 %v43, %v1103
  %v1122 = vadd.f32 %v44, %v1106
  %v1123 = vadd.f32 %v45, %v1108
  %1124 = vst [vmem:[#allocation2] sm:$0xff] %v1110
  %1125 = vst [vmem:[#allocation2 + $0x8] sm:$0xff] %v1111
  %1126 = vst [vmem:[#allocation2 + $0x10] sm:$0xff] %v1112
  %1127 = vst [vmem:[#allocation2 + $0x18] sm:$0xff] %v1113
  %1128 = vst [vmem:[#allocation2 + $0x20] sm:$0xff] %v1114
  %1129 = vst [vmem:[#allocation2 + $0x28] sm:$0xff] %v1115
  %1130 = vst [vmem:[#allocation2 + $0x30] sm:$0xff] %v1116
  %1131 = vst [vmem:[#allocation2 + $0x38] sm:$0xff] %v1117
  %1132 = vst [vmem:[#allocation2 + $0x40] sm:$0xff] %v1118
  %1133 = vst [vmem:[#allocation2 + $0x48] sm:$0xff] %v1119
  %1134 = vst [vmem:[#allocation2 + $0x50] sm:$0xff] %v1120
  %1135 = vst [vmem:[#allocation2 + $0x58] sm:$0xff] %v1121
  %1136 = vst [vmem:[#allocation2 + $0x60] sm:$0xff] %v1122
  %1137 = vst [vmem:[#allocation2 + $0x68] sm:$0xff] %v1123
  // Predicated region
  $region18: #{inception_b.8} parent=0 // pred_check
    %p1138 = pneg %p14
  $region19: #{inception_b.8} parent=0 // pred_check_branch
    %1140 = sbr.rel (%p1138) target = $region21
  $region20: #{inception_b.8} parent=0 // pred_region
    %v1141 = vld [vmem:[#allocation2] sm:$0xff]
    %v1142 = vld [vmem:[#allocation2 + $0x8] sm:$0xff]
    %v1143 = vld [vmem:[#allocation2 + $0x10] sm:$0xff]
    %v1144 = vld [vmem:[#allocation2 + $0x18] sm:$0xff]
    %v1145 = vld [vmem:[#allocation2 + $0x20] sm:$0xff]
    %v1146 = vld [vmem:[#allocation2 + $0x28] sm:$0xff]
    %v1147 = vld [vmem:[#allocation2 + $0x30] sm:$0xff]
    %v1148 = vld [vmem:[#allocation2 + $0x38] sm:$0xff]
    %v1149 = vld [vmem:[#allocation2 + $0x40] sm:$0xff]
    %v1150 = vld [vmem:[#allocation2 + $0x48] sm:$0xff]
    %v1151 = vld [vmem:[#allocation2 + $0x50] sm:$0xff]
    %v1152 = vld [vmem:[#allocation2 + $0x58] sm:$0xff]
    %v1153 = vld [vmem:[#allocation2 + $0x60] sm:$0xff]
    %v1154 = vld [vmem:[#allocation2 + $0x68] sm:$0xff]
    %v1155 = vld [vmem:[%s2] sm:$0x1]
    %v1157 = vperm.slane %v1155, 0
    %v1159 = vadd.f32 %v1141, %v1157
    %v1160 = vadd.f32 %v1142, %v1157
    %v1161 = vadd.f32 %v1143, %v1157
    %v1162 = vadd.f32 %v1144, %v1157
    %v1163 = vadd.f32 %v1145, %v1157
    %v1164 = vadd.f32 %v1146, %v1157
    %v1165 = vadd.f32 %v1147, %v1157
    %v1166 = vadd.f32 %v1148, %v1157
    %v1167 = vadd.f32 %v1149, %v1157
    %v1168 = vadd.f32 %v1150, %v1157
    %v1169 = vadd.f32 %v1151, %v1157
    %v1170 = vadd.f32 %v1152, %v1157
    %v1171 = vadd.f32 %v1153, %v1157
    %v1172 = vadd.f32 %v1154, %v1157
    %v1173 = vmax.f32 %v1159, 0.0
    %v1174 = vmax.f32 %v1160, 0.0
    %v1175 = vmax.f32 %v1161, 0.0
    %v1176 = vmax.f32 %v1162, 0.0
    %v1177 = vmax.f32 %v1163, 0.0
    %v1178 = vmax.f32 %v1164, 0.0
    %v1179 = vmax.f32 %v1165, 0.0
    %v1180 = vmax.f32 %v1166, 0.0
    %v1181 = vmax.f32 %v1167, 0.0
    %v1182 = vmax.f32 %v1168, 0.0
    %v1183 = vmax.f32 %v1169, 0.0
    %v1184 = vmax.f32 %v1170, 0.0
    %v1185 = vmax.f32 %v1171, 0.0
    %v1186 = vmax.f32 %v1172, 0.0
    %1187 = vst [vmem:[%s3] sm:$0xff] %v1173
    %1188 = vst [vmem:[%s3 + $0x8] sm:$0xff] %v1174
    %1189 = vst [vmem:[%s3 + $0x10] sm:$0xff] %v1175
    %1190 = vst [vmem:[%s3 + $0x18] sm:$0xff] %v1176
    %1191 = vst [vmem:[%s3 + $0x20] sm:$0xff] %v1177
    %1192 = vst [vmem:[%s3 + $0x28] sm:$0xff] %v1178
    %1193 = vst [vmem:[%s3 + $0x30] sm:$0xff] %v1179
    %1194 = vst [vmem:[%s3 + $0x38] sm:$0xff] %v1180
    %1195 = vst [vmem:[%s3 + $0x40] sm:$0xff] %v1181
    %1196 = vst [vmem:[%s3 + $0x48] sm:$0xff] %v1182
    %1197 = vst [vmem:[%s3 + $0x50] sm:$0xff] %v1183
    %1198 = vst [vmem:[%s3 + $0x58] sm:$0xff] %v1184
    %1199 = vst [vmem:[%s3 + $0x60] sm:$0xff] %v1185
    %1200 = vst [vmem:[%s3 + $0x68] sm:$0xff] %v1186
  $region21: #{inception_b.8} parent=0 // pred_fallthru
    _
  // Predicated region
  $region22: #{inception_b.8} parent=0 // pred_check
    _
  $region23: #{inception_b.8} parent=0 // pred_check_branch
    %1202 = sbr.rel (0) target = $region25
  $region24: #{inception_b.8} parent=0 // pred_region
    _
  $region25: #{inception_b.8} parent=0 // pred_fallthru
    _
  // Predicated region
  $region26: #{inception_b.8} parent=0 // pred_check
    _
  $region27: #{inception_b.8} parent=0 // pred_check_branch
    %1204 = sbr.rel (0) target = $region29
  $region28: #{inception_b.8} parent=0 // pred_region
    _
  $region29: #{inception_b.8} parent=0 // pred_fallthru
    _

// kernel: inception_b.5
$region0: #{inception_b.5}
  #allocation0 [shape = 'u32[]', space=smem, size = 0x4, offset = 0x4, fixed_abs, tag = 'smem constant byte address 0x4 - core index']
  #allocation1 [shape = 'u32[72,128]{1,0:T(1,128)}', space=vmem, size = 0x9000, scoped, tag = 'internal scratch']
  #allocation2 [shape = 'f32[112,384]{1,0:T(8,128)}', space=vmem, size = 0x2a000, scoped, tag = 'scratch operand']
  %s0 = inlined_call_operand.vmem [shape: bf16[112,128], index: 0, kind: input, shape index: {}]
  %s1 = inlined_call_operand.vmem [shape: bf16[128,384], index: 1, kind: input, shape index: {}]
  %s2 = inlined_call_operand.vmem [shape: f32[1,384], index: 2, kind: input, shape index: {}]
  %s3 = inlined_call_operand.vmem [shape: f32[112,384], index: 3, kind: output, shape index: {}]
  %s4 = sld [smem:[#allocation0]]
  $region30: #{inception_b.5} parent=0
    _
  %s6 = ssub.s32 1, %s4
  %s7 = scalar_select 0, %s6, %s4
  // Predicated region
  $region2: #{inception_b.5} parent=0 // pred_check
    _
  $region3: #{inception_b.5} parent=0 // pred_check_branch
    %9 = sbr.rel (0) target = $region5
  $region4: #{inception_b.5} parent=0 // pred_region
    _
  $region5: #{inception_b.5} parent=0 // pred_fallthru
    _
  // Predicated region
  $region6: #{inception_b.5} parent=0 // pred_check
    _
  $region7: #{inception_b.5} parent=0 // pred_check_branch
    %11 = sbr.rel (0) target = $region9
  $region8: #{inception_b.5} parent=0 // pred_region
    _
  $region9: #{inception_b.5} parent=0 // pred_fallthru
    _
  // Predicated region
  $region10: #{inception_b.5} parent=0 // pred_check
    _
  $region11: #{inception_b.5} parent=0 // pred_check_branch
    %13 = sbr.rel (0) target = $region13
  $region12: #{inception_b.5} parent=0 // pred_region
    _
  $region13: #{inception_b.5} parent=0 // pred_fallthru
    _
  %p14 = scmp.eq.s32.totalorder 0, 0
  // Predicated region
  $region14: #{inception_b.5} parent=0 // pred_check
    %p15 = pneg %p14
  $region15: #{inception_b.5} parent=0 // pred_check_branch
    %17 = sbr.rel (%p15) target = $region17
  $region16: #{inception_b.5} parent=0 // pred_region
    %18 = vst [vmem:[#allocation2] sm:$0xff] 0.0
    %19 = vst [vmem:[#allocation2 + $0x8] sm:$0xff] 0.0
    %20 = vst [vmem:[#allocation2 + $0x10] sm:$0xff] 0.0
    %21 = vst [vmem:[#allocation2 + $0x18] sm:$0xff] 0.0
    %22 = vst [vmem:[#allocation2 + $0x20] sm:$0xff] 0.0
    %23 = vst [vmem:[#allocation2 + $0x28] sm:$0xff] 0.0
    %24 = vst [vmem:[#allocation2 + $0x30] sm:$0xff] 0.0
    %25 = vst [vmem:[#allocation2 + $0x38] sm:$0xff] 0.0
    %26 = vst [vmem:[#allocation2 + $0x40] sm:$0xff] 0.0
    %27 = vst [vmem:[#allocation2 + $0x48] sm:$0xff] 0.0
    %28 = vst [vmem:[#allocation2 + $0x50] sm:$0xff] 0.0
    %29 = vst [vmem:[#allocation2 + $0x58] sm:$0xff] 0.0
    %30 = vst [vmem:[#allocation2 + $0x60] sm:$0xff] 0.0
    %31 = vst [vmem:[#allocation2 + $0x68] sm:$0xff] 0.0
    %32 = vst [vmem:[#allocation2 + $0x70] sm:$0xff] 0.0
    %33 = vst [vmem:[#allocation2 + $0x78] sm:$0xff] 0.0
    %34 = vst [vmem:[#allocation2 + $0x80] sm:$0xff] 0.0
    %35 = vst [vmem:[#allocation2 + $0x88] sm:$0xff] 0.0
    %36 = vst [vmem:[#allocation2 + $0x90] sm:$0xff] 0.0
    %37 = vst [vmem:[#allocation2 + $0x98] sm:$0xff] 0.0
    %38 = vst [vmem:[#allocation2 + $0xa0] sm:$0xff] 0.0
    %39 = vst [vmem:[#allocation2 + $0xa8] sm:$0xff] 0.0
    %40 = vst [vmem:[#allocation2 + $0xb0] sm:$0xff] 0.0
    %41 = vst [vmem:[#allocation2 + $0xb8] sm:$0xff] 0.0
    %42 = vst [vmem:[#allocation2 + $0xc0] sm:$0xff] 0.0
    %43 = vst [vmem:[#allocation2 + $0xc8] sm:$0xff] 0.0
    %44 = vst [vmem:[#allocation2 + $0xd0] sm:$0xff] 0.0
    %45 = vst [vmem:[#allocation2 + $0xd8] sm:$0xff] 0.0
    %46 = vst [vmem:[#allocation2 + $0xe0] sm:$0xff] 0.0
    %47 = vst [vmem:[#allocation2 + $0xe8] sm:$0xff] 0.0
    %48 = vst [vmem:[#allocation2 + $0xf0] sm:$0xff] 0.0
    %49 = vst [vmem:[#allocation2 + $0xf8] sm:$0xff] 0.0
    %50 = vst [vmem:[#allocation2 + $0x100] sm:$0xff] 0.0
    %51 = vst [vmem:[#allocation2 + $0x108] sm:$0xff] 0.0
    %52 = vst [vmem:[#allocation2 + $0x110] sm:$0xff] 0.0
    %53 = vst [vmem:[#allocation2 + $0x118] sm:$0xff] 0.0
    %54 = vst [vmem:[#allocation2 + $0x120] sm:$0xff] 0.0
    %55 = vst [vmem:[#allocation2 + $0x128] sm:$0xff] 0.0
    %56 = vst [vmem:[#allocation2 + $0x130] sm:$0xff] 0.0
    %57 = vst [vmem:[#allocation2 + $0x138] sm:$0xff] 0.0
    %58 = vst [vmem:[#allocation2 + $0x140] sm:$0xff] 0.0
    %59 = vst [vmem:[#allocation2 + $0x148] sm:$0xff] 0.0
  $region17: #{inception_b.5} parent=0 // pred_fallthru
    _
  %v60 = vld [vmem:[#allocation2] sm:$0xff]
  %v61 = vld [vmem:[#allocation2 + $0x8] sm:$0xff]
  %v62 = vld [vmem:[#allocation2 + $0x10] sm:$0xff]
  %v63 = vld [vmem:[#allocation2 + $0x18] sm:$0xff]
  %v64 = vld [vmem:[#allocation2 + $0x20] sm:$0xff]
  %v65 = vld [vmem:[#allocation2 + $0x28] sm:$0xff]
  %v66 = vld [vmem:[#allocation2 + $0x30] sm:$0xff]
  %v67 = vld [vmem:[#allocation2 + $0x38] sm:$0xff]
  %v68 = vld [vmem:[#allocation2 + $0x40] sm:$0xff]
  %v69 = vld [vmem:[#allocation2 + $0x48] sm:$0xff]
  %v70 = vld [vmem:[#allocation2 + $0x50] sm:$0xff]
  %v71 = vld [vmem:[#allocation2 + $0x58] sm:$0xff]
  %v72 = vld [vmem:[#allocation2 + $0x60] sm:$0xff]
  %v73 = vld [vmem:[#allocation2 + $0x68] sm:$0xff]
  %v74 = vld [vmem:[#allocation2 + $0x70] sm:$0xff]
  %v75 = vld [vmem:[#allocation2 + $0x78] sm:$0xff]
  %v76 = vld [vmem:[#allocation2 + $0x80] sm:$0xff]
  %v77 = vld [vmem:[#allocation2 + $0x88] sm:$0xff]
  %v78 = vld [vmem:[#allocation2 + $0x90] sm:$0xff]
  %v79 = vld [vmem:[#allocation2 + $0x98] sm:$0xff]
  %v80 = vld [vmem:[#allocation2 + $0xa0] sm:$0xff]
  %v81 = vld [vmem:[#allocation2 + $0xa8] sm:$0xff]
  %v82 = vld [vmem:[#allocation2 + $0xb0] sm:$0xff]
  %v83 = vld [vmem:[#allocation2 + $0xb8] sm:$0xff]
  %v84 = vld [vmem:[#allocation2 + $0xc0] sm:$0xff]
  %v85 = vld [vmem:[#allocation2 + $0xc8] sm:$0xff]
  %v86 = vld [vmem:[#allocation2 + $0xd0] sm:$0xff]
  %v87 = vld [vmem:[#allocation2 + $0xd8] sm:$0xff]
  %v88 = vld [vmem:[#allocation2 + $0xe0] sm:$0xff]
  %v89 = vld [vmem:[#allocation2 + $0xe8] sm:$0xff]
  %v90 = vld [vmem:[#allocation2 + $0xf0] sm:$0xff]
  %v91 = vld [vmem:[#allocation2 + $0xf8] sm:$0xff]
  %v92 = vld [vmem:[#allocation2 + $0x100] sm:$0xff]
  %v93 = vld [vmem:[#allocation2 + $0x108] sm:$0xff]
  %v94 = vld [vmem:[#allocation2 + $0x110] sm:$0xff]
  %v95 = vld [vmem:[#allocation2 + $0x118] sm:$0xff]
  %v96 = vld [vmem:[#allocation2 + $0x120] sm:$0xff]
  %v97 = vld [vmem:[#allocation2 + $0x128] sm:$0xff]
  %v98 = vld [vmem:[#allocation2 + $0x130] sm:$0xff]
  %v99 = vld [vmem:[#allocation2 + $0x138] sm:$0xff]
  %v100 = vld [vmem:[#allocation2 + $0x140] sm:$0xff]
  %v101 = vld [vmem:[#allocation2 + $0x148] sm:$0xff]
  %v102 = vld [vmem:[%s0] sm:$0xf]
  %v103 = vld [vmem:[%s0 + $0x4] sm:$0xf]
  %v104 = vld [vmem:[%s0 + $0x8] sm:$0xf]
  %v105 = vld [vmem:[%s0 + $0xc] sm:$0xf]
  %v106 = vld [vmem:[%s0 + $0x10] sm:$0xf]
  %v107 = vld [vmem:[%s0 + $0x14] sm:$0xf]
  %v108 = vld [vmem:[%s0 + $0x18] sm:$0xf]
  %v109 = vld [vmem:[%s0 + $0x1c] sm:$0xf]
  %v110 = vld [vmem:[%s0 + $0x20] sm:$0xf]
  %v111 = vld [vmem:[%s0 + $0x24] sm:$0xf]
  %v112 = vld [vmem:[%s0 + $0x28] sm:$0xf]
  %v113 = vld [vmem:[%s0 + $0x2c] sm:$0xf]
  %v114 = vld [vmem:[%s0 + $0x30] sm:$0xf]
  %v115 = vld [vmem:[%s0 + $0x34] sm:$0xf]
  %v116 = vld [vmem:[%s1] sm:$0xff]
  %v117 = vld [vmem:[%s1 + $0x8] sm:$0xf]
  %v118 = vld [vmem:[%s1 + $0xc] sm:$0xff]
  %v119 = vld [vmem:[%s1 + $0x14] sm:$0xf]
  %v120 = vld [vmem:[%s1 + $0x18] sm:$0xff]
  %v121 = vld [vmem:[%s1 + $0x20] sm:$0xf]
  %v122 = vld [vmem:[%s1 + $0x24] sm:$0xff]
  %v123 = vld [vmem:[%s1 + $0x2c] sm:$0xf]
  %v124 = vld [vmem:[%s1 + $0x30] sm:$0xff]
  %v125 = vld [vmem:[%s1 + $0x38] sm:$0xf]
  %v126 = vld [vmem:[%s1 + $0x3c] sm:$0xff]
  %v127 = vld [vmem:[%s1 + $0x44] sm:$0xf]
  %v128 = vld [vmem:[%s1 + $0x48] sm:$0xff]
  %v129 = vld [vmem:[%s1 + $0x50] sm:$0xf]
  %v130 = vld [vmem:[%s1 + $0x54] sm:$0xff]
  %v131 = vld [vmem:[%s1 + $0x5c] sm:$0xf]
  %v132 = vld [vmem:[%s1 + $0x60] sm:$0xff]
  %v133 = vld [vmem:[%s1 + $0x68] sm:$0xf]
  %v134 = vld [vmem:[%s1 + $0x6c] sm:$0xff]
  %v135 = vld [vmem:[%s1 + $0x74] sm:$0xf]
  %v136 = vld [vmem:[%s1 + $0x78] sm:$0xff]
  %v137 = vld [vmem:[%s1 + $0x80] sm:$0xf]
  %v138 = vld [vmem:[%s1 + $0x84] sm:$0xff]
  %v139 = vld [vmem:[%s1 + $0x8c] sm:$0xf]
  %v140 = vld [vmem:[%s1 + $0x90] sm:$0xff]
  %v141 = vld [vmem:[%s1 + $0x98] sm:$0xf]
  %v142 = vld [vmem:[%s1 + $0x9c] sm:$0xff]
  %v143 = vld [vmem:[%s1 + $0xa4] sm:$0xf]
  %v144 = vld [vmem:[%s1 + $0xa8] sm:$0xff]
  %v145 = vld [vmem:[%s1 + $0xb0] sm:$0xf]
  %v146 = vld [vmem:[%s1 + $0xb4] sm:$0xff]
  %v147 = vld [vmem:[%s1 + $0xbc] sm:$0xf]
  %v162 = vunpack.c.l.b16 %v102
  %v163 = vunpack.c.l.b16 %v103
  %v164 = vunpack.c.l.b16 %v104
  %v165 = vunpack.c.l.b16 %v105
  %v166 = vunpack.c.l.b16 %v106
  %v167 = vunpack.c.l.b16 %v107
  %v168 = vunpack.c.l.b16 %v108
  %v169 = vunpack.c.l.b16 %v109
  %v170 = vunpack.c.l.b16 %v110
  %v171 = vunpack.c.l.b16 %v111
  %v172 = vunpack.c.l.b16 %v112
  %v173 = vunpack.c.l.b16 %v113
  %v174 = vunpack.c.l.b16 %v114
  %v175 = vunpack.c.l.b16 %v115
  %v176 = vpack.c.b16 %v163, %v162
  %v177 = vpack.c.b16 %v165, %v164
  %v178 = vpack.c.b16 %v167, %v166
  %v179 = vpack.c.b16 %v169, %v168
  %v180 = vpack.c.b16 %v171, %v170
  %v181 = vpack.c.b16 %v173, %v172
  %v182 = vpack.c.b16 %v175, %v174
  %v222 = vunpack.c.l.b16 %v116
  %v223 = vunpack.c.h.b16 %v116
  %v224 = vunpack.c.l.b16 %v117
  %v225 = vunpack.c.l.b16 %v118
  %v226 = vunpack.c.h.b16 %v118
  %v227 = vunpack.c.l.b16 %v119
  %v228 = vunpack.c.l.b16 %v120
  %v229 = vunpack.c.h.b16 %v120
  %v230 = vunpack.c.l.b16 %v121
  %v231 = vunpack.c.l.b16 %v122
  %v232 = vunpack.c.h.b16 %v122
  %v233 = vunpack.c.l.b16 %v123
  %v234 = vunpack.c.l.b16 %v124
  %v235 = vunpack.c.h.b16 %v124
  %v236 = vunpack.c.l.b16 %v125
  %v237 = vunpack.c.l.b16 %v126
  %v238 = vunpack.c.h.b16 %v126
  %v239 = vunpack.c.l.b16 %v127
  %v240 = vunpack.c.l.b16 %v128
  %v241 = vunpack.c.h.b16 %v128
  %v242 = vunpack.c.l.b16 %v129
  %v243 = vunpack.c.l.b16 %v130
  %v244 = vunpack.c.h.b16 %v130
  %v245 = vunpack.c.l.b16 %v131
  %v246 = vunpack.c.l.b16 %v132
  %v247 = vunpack.c.h.b16 %v132
  %v248 = vunpack.c.l.b16 %v133
  %v249 = vunpack.c.l.b16 %v134
  %v250 = vunpack.c.h.b16 %v134
  %v251 = vunpack.c.l.b16 %v135
  %v252 = vunpack.c.l.b16 %v136
  %v253 = vunpack.c.h.b16 %v136
  %v254 = vunpack.c.l.b16 %v137
  %v255 = vunpack.c.l.b16 %v138
  %v256 = vunpack.c.h.b16 %v138
  %v257 = vunpack.c.l.b16 %v139
  %v258 = vunpack.c.l.b16 %v140
  %v259 = vunpack.c.h.b16 %v140
  %v260 = vunpack.c.l.b16 %v141
  %v261 = vunpack.c.l.b16 %v142
  %v262 = vunpack.c.h.b16 %v142
  %v263 = vunpack.c.l.b16 %v143
  %v264 = vunpack.c.l.b16 %v144
  %v265 = vunpack.c.h.b16 %v144
  %v266 = vunpack.c.l.b16 %v145
  %v267 = vunpack.c.l.b16 %v146
  %v268 = vunpack.c.h.b16 %v146
  %v269 = vunpack.c.l.b16 %v147
  %v270 = vpack.c.b16 %v225, %v222
  %v271 = vpack.c.b16 %v226, %v223
  %v272 = vpack.c.b16 %v227, %v224
  %v273 = vpack.c.b16 %v231, %v228
  %v274 = vpack.c.b16 %v232, %v229
  %v275 = vpack.c.b16 %v233, %v230
  %v276 = vpack.c.b16 %v237, %v234
  %v277 = vpack.c.b16 %v238, %v235
  %v278 = vpack.c.b16 %v239, %v236
  %v279 = vpack.c.b16 %v243, %v240
  %v280 = vpack.c.b16 %v244, %v241
  %v281 = vpack.c.b16 %v245, %v242
  %v282 = vpack.c.b16 %v249, %v246
  %v283 = vpack.c.b16 %v250, %v247
  %v284 = vpack.c.b16 %v251, %v248
  %v285 = vpack.c.b16 %v255, %v252
  %v286 = vpack.c.b16 %v256, %v253
  %v287 = vpack.c.b16 %v257, %v254
  %v288 = vpack.c.b16 %v261, %v258
  %v289 = vpack.c.b16 %v262, %v259
  %v290 = vpack.c.b16 %v263, %v260
  %v291 = vpack.c.b16 %v267, %v264
  %v292 = vpack.c.b16 %v268, %v265
  %v293 = vpack.c.b16 %v269, %v266
  %318 = vmatpush.bf16.msra.mxu0 %v291
  %319 = vmatpush.bf16.msra.mxu0 %v288
  %320 = vmatpush.bf16.msra.mxu0 %v285
  %321 = vmatpush.bf16.msra.mxu0 %v282
  %322 = vmatpush.bf16.msra.mxu0 %v279
  %323 = vmatpush.bf16.msra.mxu0 %v276
  %324 = vmatpush.bf16.msra.mxu0 %v273
  %325 = vmatpush.bf16.msra.mxu0 %v270
  %326 = vmatmul.bf16.gmra.mxu0 %v176
  %v327 = vpop.f32.mrf.mxu0
  %v328 = vadd.f32 0.0, %v327
  %v329 = vpop.f32.mrf.mxu0
  %v330 = vadd.f32 0.0, %v329
  %331 = vmatmul.bf16.gmra.mxu0 %v177
  %v332 = vpop.f32.mrf.mxu0
  %v333 = vadd.f32 0.0, %v332
  %v334 = vpop.f32.mrf.mxu0
  %v335 = vadd.f32 0.0, %v334
  %336 = vmatmul.bf16.gmra.mxu0 %v178
  %v337 = vpop.f32.mrf.mxu0
  %v338 = vadd.f32 0.0, %v337
  %v339 = vpop.f32.mrf.mxu0
  %v340 = vadd.f32 0.0, %v339
  %341 = vmatmul.bf16.gmra.mxu0 %v179
  %v342 = vpop.f32.mrf.mxu0
  %v343 = vadd.f32 0.0, %v342
  %v344 = vpop.f32.mrf.mxu0
  %v345 = vadd.f32 0.0, %v344
  %346 = vmatmul.bf16.gmra.mxu0 %v180
  %v347 = vpop.f32.mrf.mxu0
  %v348 = vadd.f32 0.0, %v347
  %v349 = vpop.f32.mrf.mxu0
  %v350 = vadd.f32 0.0, %v349
  %351 = vmatmul.bf16.gmra.mxu0 %v181
  %v352 = vpop.f32.mrf.mxu0
  %v353 = vadd.f32 0.0, %v352
  %v354 = vpop.f32.mrf.mxu0
  %v355 = vadd.f32 0.0, %v354
  %356 = vmatmul.bf16.gmra.mxu0 %v182
  %v357 = vpop.f32.mrf.mxu0
  %v358 = vadd.f32 0.0, %v357
  %v359 = vpop.f32.mrf.mxu0
  %v360 = vadd.f32 0.0, %v359
  %361 = vdwg.mxu0
  %362 = vmatpush.bf16.msra.mxu0 %v292
  %363 = vmatpush.bf16.msra.mxu0 %v289
  %364 = vmatpush.bf16.msra.mxu0 %v286
  %365 = vmatpush.bf16.msra.mxu0 %v283
  %366 = vmatpush.bf16.msra.mxu0 %v280
  %367 = vmatpush.bf16.msra.mxu0 %v277
  %368 = vmatpush.bf16.msra.mxu0 %v274
  %369 = vmatpush.bf16.msra.mxu0 %v271
  %370 = vmatmul.bf16.gmra.mxu0 %v176
  %v371 = vpop.f32.mrf.mxu0
  %v372 = vadd.f32 0.0, %v371
  %v373 = vpop.f32.mrf.mxu0
  %v374 = vadd.f32 0.0, %v373
  %375 = vmatmul.bf16.gmra.mxu0 %v177
  %v376 = vpop.f32.mrf.mxu0
  %v377 = vadd.f32 0.0, %v376
  %v378 = vpop.f32.mrf.mxu0
  %v379 = vadd.f32 0.0, %v378
  %380 = vmatmul.bf16.gmra.mxu0 %v178
  %v381 = vpop.f32.mrf.mxu0
  %v382 = vadd.f32 0.0, %v381
  %v383 = vpop.f32.mrf.mxu0
  %v384 = vadd.f32 0.0, %v383
  %385 = vmatmul.bf16.gmra.mxu0 %v179
  %v386 = vpop.f32.mrf.mxu0
  %v387 = vadd.f32 0.0, %v386
  %v388 = vpop.f32.mrf.mxu0
  %v389 = vadd.f32 0.0, %v388
  %390 = vmatmul.bf16.gmra.mxu0 %v180
  %v391 = vpop.f32.mrf.mxu0
  %v392 = vadd.f32 0.0, %v391
  %v393 = vpop.f32.mrf.mxu0
  %v394 = vadd.f32 0.0, %v393
  %395 = vmatmul.bf16.gmra.mxu0 %v181
  %v396 = vpop.f32.mrf.mxu0
  %v397 = vadd.f32 0.0, %v396
  %v398 = vpop.f32.mrf.mxu0
  %v399 = vadd.f32 0.0, %v398
  %400 = vmatmul.bf16.gmra.mxu0 %v182
  %v401 = vpop.f32.mrf.mxu0
  %v402 = vadd.f32 0.0, %v401
  %v403 = vpop.f32.mrf.mxu0
  %v404 = vadd.f32 0.0, %v403
  %405 = vdwg.mxu0
  %406 = vmatpush.bf16.msra.mxu0 %v293
  %407 = vmatpush.bf16.msra.mxu0 %v290
  %408 = vmatpush.bf16.msra.mxu0 %v287
  %409 = vmatpush.bf16.msra.mxu0 %v284
  %410 = vmatpush.bf16.msra.mxu0 %v281
  %411 = vmatpush.bf16.msra.mxu0 %v278
  %412 = vmatpush.bf16.msra.mxu0 %v275
  %413 = vmatpush.bf16.msra.mxu0 %v272
  %414 = vmatmul.bf16.gmra.mxu0 %v176
  %v415 = vpop.f32.mrf.mxu0
  %v416 = vadd.f32 0.0, %v415
  %v417 = vpop.f32.mrf.mxu0
  %v418 = vadd.f32 0.0, %v417
  %419 = vmatmul.bf16.gmra.mxu0 %v177
  %v420 = vpop.f32.mrf.mxu0
  %v421 = vadd.f32 0.0, %v420
  %v422 = vpop.f32.mrf.mxu0
  %v423 = vadd.f32 0.0, %v422
  %424 = vmatmul.bf16.gmra.mxu0 %v178
  %v425 = vpop.f32.mrf.mxu0
  %v426 = vadd.f32 0.0, %v425
  %v427 = vpop.f32.mrf.mxu0
  %v428 = vadd.f32 0.0, %v427
  %429 = vmatmul.bf16.gmra.mxu0 %v179
  %v430 = vpop.f32.mrf.mxu0
  %v431 = vadd.f32 0.0, %v430
  %v432 = vpop.f32.mrf.mxu0
  %v433 = vadd.f32 0.0, %v432
  %434 = vmatmul.bf16.gmra.mxu0 %v180
  %v435 = vpop.f32.mrf.mxu0
  %v436 = vadd.f32 0.0, %v435
  %v437 = vpop.f32.mrf.mxu0
  %v438 = vadd.f32 0.0, %v437
  %439 = vmatmul.bf16.gmra.mxu0 %v181
  %v440 = vpop.f32.mrf.mxu0
  %v441 = vadd.f32 0.0, %v440
  %v442 = vpop.f32.mrf.mxu0
  %v443 = vadd.f32 0.0, %v442
  %444 = vmatmul.bf16.gmra.mxu0 %v182
  %v445 = vpop.f32.mrf.mxu0
  %v446 = vadd.f32 0.0, %v445
  %v447 = vpop.f32.mrf.mxu0
  %v448 = vadd.f32 0.0, %v447
  %449 = vdwg.mxu0
  %v450 = vadd.f32 %v60, %v328
  %v451 = vadd.f32 %v61, %v372
  %v452 = vadd.f32 %v62, %v416
  %v453 = vadd.f32 %v63, %v330
  %v454 = vadd.f32 %v64, %v374
  %v455 = vadd.f32 %v65, %v418
  %v456 = vadd.f32 %v66, %v333
  %v457 = vadd.f32 %v67, %v377
  %v458 = vadd.f32 %v68, %v421
  %v459 = vadd.f32 %v69, %v335
  %v460 = vadd.f32 %v70, %v379
  %v461 = vadd.f32 %v71, %v423
  %v462 = vadd.f32 %v72, %v338
  %v463 = vadd.f32 %v73, %v382
  %v464 = vadd.f32 %v74, %v426
  %v465 = vadd.f32 %v75, %v340
  %v466 = vadd.f32 %v76, %v384
  %v467 = vadd.f32 %v77, %v428
  %v468 = vadd.f32 %v78, %v343
  %v469 = vadd.f32 %v79, %v387
  %v470 = vadd.f32 %v80, %v431
  %v471 = vadd.f32 %v81, %v345
  %v472 = vadd.f32 %v82, %v389
  %v473 = vadd.f32 %v83, %v433
  %v474 = vadd.f32 %v84, %v348
  %v475 = vadd.f32 %v85, %v392
  %v476 = vadd.f32 %v86, %v436
  %v477 = vadd.f32 %v87, %v350
  %v478 = vadd.f32 %v88, %v394
  %v479 = vadd.f32 %v89, %v438
  %v480 = vadd.f32 %v90, %v353
  %v481 = vadd.f32 %v91, %v397
  %v482 = vadd.f32 %v92, %v441
  %v483 = vadd.f32 %v93, %v355
  %v484 = vadd.f32 %v94, %v399
  %v485 = vadd.f32 %v95, %v443
  %v486 = vadd.f32 %v96, %v358
  %v487 = vadd.f32 %v97, %v402
  %v488 = vadd.f32 %v98, %v446
  %v489 = vadd.f32 %v99, %v360
  %v490 = vadd.f32 %v100, %v404
  %v491 = vadd.f32 %v101, %v448
  %492 = vst [vmem:[#allocation2] sm:$0xff] %v450
  %493 = vst [vmem:[#allocation2 + $0x8] sm:$0xff] %v451
  %494 = vst [vmem:[#allocation2 + $0x10] sm:$0xff] %v452
  %495 = vst [vmem:[#allocation2 + $0x18] sm:$0xff] %v453
  %496 = vst [vmem:[#allocation2 + $0x20] sm:$0xff] %v454
  %497 = vst [vmem:[#allocation2 + $0x28] sm:$0xff] %v455
  %498 = vst [vmem:[#allocation2 + $0x30] sm:$0xff] %v456
  %499 = vst [vmem:[#allocation2 + $0x38] sm:$0xff] %v457
  %500 = vst [vmem:[#allocation2 + $0x40] sm:$0xff] %v458
  %501 = vst [vmem:[#allocation2 + $0x48] sm:$0xff] %v459
  %502 = vst [vmem:[#allocation2 + $0x50] sm:$0xff] %v460
  %503 = vst [vmem:[#allocation2 + $0x58] sm:$0xff] %v461
  %504 = vst [vmem:[#allocation2 + $0x60] sm:$0xff] %v462
  %505 = vst [vmem:[#allocation2 + $0x68] sm:$0xff] %v463
  %506 = vst [vmem:[#allocation2 + $0x70] sm:$0xff] %v464
  %507 = vst [vmem:[#allocation2 + $0x78] sm:$0xff] %v465
  %508 = vst [vmem:[#allocation2 + $0x80] sm:$0xff] %v466
  %509 = vst [vmem:[#allocation2 + $0x88] sm:$0xff] %v467
  %510 = vst [vmem:[#allocation2 + $0x90] sm:$0xff] %v468
  %511 = vst [vmem:[#allocation2 + $0x98] sm:$0xff] %v469
  %512 = vst [vmem:[#allocation2 + $0xa0] sm:$0xff] %v470
  %513 = vst [vmem:[#allocation2 + $0xa8] sm:$0xff] %v471
  %514 = vst [vmem:[#allocation2 + $0xb0] sm:$0xff] %v472
  %515 = vst [vmem:[#allocation2 + $0xb8] sm:$0xff] %v473
  %516 = vst [vmem:[#allocation2 + $0xc0] sm:$0xff] %v474
  %517 = vst [vmem:[#allocation2 + $0xc8] sm:$0xff] %v475
  %518 = vst [vmem:[#allocation2 + $0xd0] sm:$0xff] %v476
  %519 = vst [vmem:[#allocation2 + $0xd8] sm:$0xff] %v477
  %520 = vst [vmem:[#allocation2 + $0xe0] sm:$0xff] %v478
  %521 = vst [vmem:[#allocation2 + $0xe8] sm:$0xff] %v479
  %522 = vst [vmem:[#allocation2 + $0xf0] sm:$0xff] %v480
  %523 = vst [vmem:[#allocation2 + $0xf8] sm:$0xff] %v481
  %524 = vst [vmem:[#allocation2 + $0x100] sm:$0xff] %v482
  %525 = vst [vmem:[#allocation2 + $0x108] sm:$0xff] %v483
  %526 = vst [vmem:[#allocation2 + $0x110] sm:$0xff] %v484
  %527 = vst [vmem:[#allocation2 + $0x118] sm:$0xff] %v485
  %528 = vst [vmem:[#allocation2 + $0x120] sm:$0xff] %v486
  %529 = vst [vmem:[#allocation2 + $0x128] sm:$0xff] %v487
  %530 = vst [vmem:[#allocation2 + $0x130] sm:$0xff] %v488
  %531 = vst [vmem:[#allocation2 + $0x138] sm:$0xff] %v489
  %532 = vst [vmem:[#allocation2 + $0x140] sm:$0xff] %v490
  %533 = vst [vmem:[#allocation2 + $0x148] sm:$0xff] %v491
  // Predicated region
  $region18: #{inception_b.5} parent=0 // pred_check
    %p534 = pneg %p14
  $region19: #{inception_b.5} parent=0 // pred_check_branch
    %536 = sbr.rel (%p534) target = $region21
  $region20: #{inception_b.5} parent=0 // pred_region
    %v537 = vld [vmem:[#allocation2] sm:$0xff]
    %v538 = vld [vmem:[#allocation2 + $0x8] sm:$0xff]
    %v539 = vld [vmem:[#allocation2 + $0x10] sm:$0xff]
    %v540 = vld [vmem:[#allocation2 + $0x18] sm:$0xff]
    %v541 = vld [vmem:[#allocation2 + $0x20] sm:$0xff]
    %v542 = vld [vmem:[#allocation2 + $0x28] sm:$0xff]
    %v543 = vld [vmem:[#allocation2 + $0x30] sm:$0xff]
    %v544 = vld [vmem:[#allocation2 + $0x38] sm:$0xff]
    %v545 = vld [vmem:[#allocation2 + $0x40] sm:$0xff]
    %v546 = vld [vmem:[#allocation2 + $0x48] sm:$0xff]
    %v547 = vld [vmem:[#allocation2 + $0x50] sm:$0xff]
    %v548 = vld [vmem:[#allocation2 + $0x58] sm:$0xff]
    %v549 = vld [vmem:[#allocation2 + $0x60] sm:$0xff]
    %v550 = vld [vmem:[#allocation2 + $0x68] sm:$0xff]
    %v551 = vld [vmem:[#allocation2 + $0x70] sm:$0xff]
    %v552 = vld [vmem:[#allocation2 + $0x78] sm:$0xff]
    %v553 = vld [vmem:[#allocation2 + $0x80] sm:$0xff]
    %v554 = vld [vmem:[#allocation2 + $0x88] sm:$0xff]
    %v555 = vld [vmem:[#allocation2 + $0x90] sm:$0xff]
    %v556 = vld [vmem:[#allocation2 + $0x98] sm:$0xff]
    %v557 = vld [vmem:[#allocation2 + $0xa0] sm:$0xff]
    %v558 = vld [vmem:[#allocation2 + $0xa8] sm:$0xff]
    %v559 = vld [vmem:[#allocation2 + $0xb0] sm:$0xff]
    %v560 = vld [vmem:[#allocation2 + $0xb8] sm:$0xff]
    %v561 = vld [vmem:[#allocation2 + $0xc0] sm:$0xff]
    %v562 = vld [vmem:[#allocation2 + $0xc8] sm:$0xff]
    %v563 = vld [vmem:[#allocation2 + $0xd0] sm:$0xff]
    %v564 = vld [vmem:[#allocation2 + $0xd8] sm:$0xff]
    %v565 = vld [vmem:[#allocation2 + $0xe0] sm:$0xff]
    %v566 = vld [vmem:[#allocation2 + $0xe8] sm:$0xff]
    %v567 = vld [vmem:[#allocation2 + $0xf0] sm:$0xff]
    %v568 = vld [vmem:[#allocation2 + $0xf8] sm:$0xff]
    %v569 = vld [vmem:[#allocation2 + $0x100] sm:$0xff]
    %v570 = vld [vmem:[#allocation2 + $0x108] sm:$0xff]
    %v571 = vld [vmem:[#allocation2 + $0x110] sm:$0xff]
    %v572 = vld [vmem:[#allocation2 + $0x118] sm:$0xff]
    %v573 = vld [vmem:[#allocation2 + $0x120] sm:$0xff]
    %v574 = vld [vmem:[#allocation2 + $0x128] sm:$0xff]
    %v575 = vld [vmem:[#allocation2 + $0x130] sm:$0xff]
    %v576 = vld [vmem:[#allocation2 + $0x138] sm:$0xff]
    %v577 = vld [vmem:[#allocation2 + $0x140] sm:$0xff]
    %v578 = vld [vmem:[#allocation2 + $0x148] sm:$0xff]
    %v579 = vld [vmem:[%s2] sm:$0x7]
    %v581 = vperm.slane %v579, 0
    %v582 = vperm.slane %v579, 1
    %v583 = vperm.slane %v579, 2
    %v587 = vadd.f32 %v537, %v581
    %v588 = vadd.f32 %v538, %v582
    %v589 = vadd.f32 %v539, %v583
    %v590 = vadd.f32 %v540, %v581
    %v591 = vadd.f32 %v541, %v582
    %v592 = vadd.f32 %v542, %v583
    %v593 = vadd.f32 %v543, %v581
    %v594 = vadd.f32 %v544, %v582
    %v595 = vadd.f32 %v545, %v583
    %v596 = vadd.f32 %v546, %v581
    %v597 = vadd.f32 %v547, %v582
    %v598 = vadd.f32 %v548, %v583
    %v599 = vadd.f32 %v549, %v581
    %v600 = vadd.f32 %v550, %v582
    %v601 = vadd.f32 %v551, %v583
    %v602 = vadd.f32 %v552, %v581
    %v603 = vadd.f32 %v553, %v582
    %v604 = vadd.f32 %v554, %v583
    %v605 = vadd.f32 %v555, %v581
    %v606 = vadd.f32 %v556, %v582
    %v607 = vadd.f32 %v557, %v583
    %v608 = vadd.f32 %v558, %v581
    %v609 = vadd.f32 %v559, %v582
    %v610 = vadd.f32 %v560, %v583
    %v611 = vadd.f32 %v561, %v581
    %v612 = vadd.f32 %v562, %v582
    %v613 = vadd.f32 %v563, %v583
    %v614 = vadd.f32 %v564, %v581
    %v615 = vadd.f32 %v565, %v582
    %v616 = vadd.f32 %v566, %v583
    %v617 = vadd.f32 %v567, %v581
    %v618 = vadd.f32 %v568, %v582
    %v619 = vadd.f32 %v569, %v583
    %v620 = vadd.f32 %v570, %v581
    %v621 = vadd.f32 %v571, %v582
    %v622 = vadd.f32 %v572, %v583
    %v623 = vadd.f32 %v573, %v581
    %v624 = vadd.f32 %v574, %v582
    %v625 = vadd.f32 %v575, %v583
    %v626 = vadd.f32 %v576, %v581
    %v627 = vadd.f32 %v577, %v582
    %v628 = vadd.f32 %v578, %v583
    %v629 = vmax.f32 %v587, 0.0
    %v630 = vmax.f32 %v588, 0.0
    %v631 = vmax.f32 %v589, 0.0
    %v632 = vmax.f32 %v590, 0.0
    %v633 = vmax.f32 %v591, 0.0
    %v634 = vmax.f32 %v592, 0.0
    %v635 = vmax.f32 %v593, 0.0
    %v636 = vmax.f32 %v594, 0.0
    %v637 = vmax.f32 %v595, 0.0
    %v638 = vmax.f32 %v596, 0.0
    %v639 = vmax.f32 %v597, 0.0
    %v640 = vmax.f32 %v598, 0.0
    %v641 = vmax.f32 %v599, 0.0
    %v642 = vmax.f32 %v600, 0.0
    %v643 = vmax.f32 %v601, 0.0
    %v644 = vmax.f32 %v602, 0.0
    %v645 = vmax.f32 %v603, 0.0
    %v646 = vmax.f32 %v604, 0.0
    %v647 = vmax.f32 %v605, 0.0
    %v648 = vmax.f32 %v606, 0.0
    %v649 = vmax.f32 %v607, 0.0
    %v650 = vmax.f32 %v608, 0.0
    %v651 = vmax.f32 %v609, 0.0
    %v652 = vmax.f32 %v610, 0.0
    %v653 = vmax.f32 %v611, 0.0
    %v654 = vmax.f32 %v612, 0.0
    %v655 = vmax.f32 %v613, 0.0
    %v656 = vmax.f32 %v614, 0.0
    %v657 = vmax.f32 %v615, 0.0
    %v658 = vmax.f32 %v616, 0.0
    %v659 = vmax.f32 %v617, 0.0
    %v660 = vmax.f32 %v618, 0.0
    %v661 = vmax.f32 %v619, 0.0
    %v662 = vmax.f32 %v620, 0.0
    %v663 = vmax.f32 %v621, 0.0
    %v664 = vmax.f32 %v622, 0.0
    %v665 = vmax.f32 %v623, 0.0
    %v666 = vmax.f32 %v624, 0.0
    %v667 = vmax.f32 %v625, 0.0
    %v668 = vmax.f32 %v626, 0.0
    %v669 = vmax.f32 %v627, 0.0
    %v670 = vmax.f32 %v628, 0.0
    %671 = vst [vmem:[%s3] sm:$0xff] %v629
    %672 = vst [vmem:[%s3 + $0x8] sm:$0xff] %v630
    %673 = vst [vmem:[%s3 + $0x10] sm:$0xff] %v631
    %674 = vst [vmem:[%s3 + $0x18] sm:$0xff] %v632
    %675 = vst [vmem:[%s3 + $0x20] sm:$0xff] %v633
    %676 = vst [vmem:[%s3 + $0x28] sm:$0xff] %v634
    %677 = vst [vmem:[%s3 + $0x30] sm:$0xff] %v635
    %678 = vst [vmem:[%s3 + $0x38] sm:$0xff] %v636
    %679 = vst [vmem:[%s3 + $0x40] sm:$0xff] %v637
    %680 = vst [vmem:[%s3 + $0x48] sm:$0xff] %v638
    %681 = vst [vmem:[%s3 + $0x50] sm:$0xff] %v639
    %682 = vst [vmem:[%s3 + $0x58] sm:$0xff] %v640
    %683 = vst [vmem:[%s3 + $0x60] sm:$0xff] %v641
    %684 = vst [vmem:[%s3 + $0x68] sm:$0xff] %v642
    %685 = vst [vmem:[%s3 + $0x70] sm:$0xff] %v643
    %686 = vst [vmem:[%s3 + $0x78] sm:$0xff] %v644
    %687 = vst [vmem:[%s3 + $0x80] sm:$0xff] %v645
    %688 = vst [vmem:[%s3 + $0x88] sm:$0xff] %v646
    %689 = vst [vmem:[%s3 + $0x90] sm:$0xff] %v647
    %690 = vst [vmem:[%s3 + $0x98] sm:$0xff] %v648
    %691 = vst [vmem:[%s3 + $0xa0] sm:$0xff] %v649
    %692 = vst [vmem:[%s3 + $0xa8] sm:$0xff] %v650
    %693 = vst [vmem:[%s3 + $0xb0] sm:$0xff] %v651
    %694 = vst [vmem:[%s3 + $0xb8] sm:$0xff] %v652
    %695 = vst [vmem:[%s3 + $0xc0] sm:$0xff] %v653
    %696 = vst [vmem:[%s3 + $0xc8] sm:$0xff] %v654
    %697 = vst [vmem:[%s3 + $0xd0] sm:$0xff] %v655
    %698 = vst [vmem:[%s3 + $0xd8] sm:$0xff] %v656
    %699 = vst [vmem:[%s3 + $0xe0] sm:$0xff] %v657
    %700 = vst [vmem:[%s3 + $0xe8] sm:$0xff] %v658
    %701 = vst [vmem:[%s3 + $0xf0] sm:$0xff] %v659
    %702 = vst [vmem:[%s3 + $0xf8] sm:$0xff] %v660
    %703 = vst [vmem:[%s3 + $0x100] sm:$0xff] %v661
    %704 = vst [vmem:[%s3 + $0x108] sm:$0xff] %v662
    %705 = vst [vmem:[%s3 + $0x110] sm:$0xff] %v663
    %706 = vst [vmem:[%s3 + $0x118] sm:$0xff] %v664
    %707 = vst [vmem:[%s3 + $0x120] sm:$0xff] %v665
    %708 = vst [vmem:[%s3 + $0x128] sm:$0xff] %v666
    %709 = vst [vmem:[%s3 + $0x130] sm:$0xff] %v667
    %710 = vst [vmem:[%s3 + $0x138] sm:$0xff] %v668
    %711 = vst [vmem:[%s3 + $0x140] sm:$0xff] %v669
    %712 = vst [vmem:[%s3 + $0x148] sm:$0xff] %v670
  $region21: #{inception_b.5} parent=0 // pred_fallthru
    _
  // Predicated region
  $region22: #{inception_b.5} parent=0 // pred_check
    _
  $region23: #{inception_b.5} parent=0 // pred_check_branch
    %714 = sbr.rel (0) target = $region25
  $region24: #{inception_b.5} parent=0 // pred_region
    _
  $region25: #{inception_b.5} parent=0 // pred_fallthru
    _
  // Predicated region
  $region26: #{inception_b.5} parent=0 // pred_check
    _
  $region27: #{inception_b.5} parent=0 // pred_check_branch
    %716 = sbr.rel (0) target = $region29
  $region28: #{inception_b.5} parent=0 // pred_region
    _
  $region29: #{inception_b.5} parent=0 // pred_fallthru
    _

// kernel: inception_b.9
$region0: #{inception_b.9}
  #allocation0 [shape = 'u32[]', space=smem, size = 0x4, offset = 0x4, fixed_abs, tag = 'smem constant byte address 0x4 - core index']
  #allocation1 [shape = 'u32[72,128]{1,0:T(1,128)}', space=vmem, size = 0x9000, scoped, tag = 'internal scratch']
  %s0 = inlined_call_operand.vmem [shape: f32[9,104,128], index: 0, kind: input, shape index: {}]
  %s1 = inlined_call_operand.vmem [shape: f32[104,128], index: 1, kind: output, shape index: {}]
  %s2 = sld [smem:[#allocation0]]
  $region14: #{inception_b.9} parent=0
    _
  %s4 = ssub.s32 1, %s2
  %s5 = scalar_select 0, %s4, %s2
  // Predicated region
  $region2: #{inception_b.9} parent=0 // pred_check
    _
  $region3: #{inception_b.9} parent=0 // pred_check_branch
    %7 = sbr.rel (0) target = $region5
  $region4: #{inception_b.9} parent=0 // pred_region
    _
  $region5: #{inception_b.9} parent=0 // pred_fallthru
    _
  %v8 = vld [vmem:[%s0] sm:$0xff]
  %v9 = vld [vmem:[%s0 + $0x8] sm:$0xff]
  %v10 = vld [vmem:[%s0 + $0x10] sm:$0xff]
  %v11 = vld [vmem:[%s0 + $0x18] sm:$0xff]
  %v12 = vld [vmem:[%s0 + $0x20] sm:$0xff]
  %v13 = vld [vmem:[%s0 + $0x28] sm:$0xff]
  %v14 = vld [vmem:[%s0 + $0x30] sm:$0xff]
  %v15 = vld [vmem:[%s0 + $0x38] sm:$0xff]
  %v16 = vld [vmem:[%s0 + $0x40] sm:$0xff]
  %v17 = vld [vmem:[%s0 + $0x48] sm:$0xff]
  %v18 = vld [vmem:[%s0 + $0x50] sm:$0xff]
  %v19 = vld [vmem:[%s0 + $0x58] sm:$0xff]
  %v20 = vld [vmem:[%s0 + $0x60] sm:$0xff]
  %v21 = vld [vmem:[%s0 + $0x68] sm:$0xff]
  %v22 = vld [vmem:[%s0 + $0x70] sm:$0xff]
  %v23 = vld [vmem:[%s0 + $0x78] sm:$0xff]
  %v24 = vld [vmem:[%s0 + $0x80] sm:$0xff]
  %v25 = vld [vmem:[%s0 + $0x88] sm:$0xff]
  %v26 = vld [vmem:[%s0 + $0x90] sm:$0xff]
  %v27 = vld [vmem:[%s0 + $0x98] sm:$0xff]
  %v28 = vld [vmem:[%s0 + $0xa0] sm:$0xff]
  %v29 = vld [vmem:[%s0 + $0xa8] sm:$0xff]
  %v30 = vld [vmem:[%s0 + $0xb0] sm:$0xff]
  %v31 = vld [vmem:[%s0 + $0xb8] sm:$0xff]
  %v32 = vld [vmem:[%s0 + $0xc0] sm:$0xff]
  %v33 = vld [vmem:[%s0 + $0xc8] sm:$0xff]
  %v34 = vld [vmem:[%s0 + $0xd0] sm:$0xff]
  %v35 = vld [vmem:[%s0 + $0xd8] sm:$0xff]
  %v36 = vld [vmem:[%s0 + $0xe0] sm:$0xff]
  %v37 = vld [vmem:[%s0 + $0xe8] sm:$0xff]
  %v38 = vld [vmem:[%s0 + $0xf0] sm:$0xff]
  %v39 = vld [vmem:[%s0 + $0xf8] sm:$0xff]
  %v40 = vld [vmem:[%s0 + $0x100] sm:$0xff]
  %v41 = vld [vmem:[%s0 + $0x108] sm:$0xff]
  %v42 = vld [vmem:[%s0 + $0x110] sm:$0xff]
  %v43 = vld [vmem:[%s0 + $0x118] sm:$0xff]
  %v44 = vld [vmem:[%s0 + $0x120] sm:$0xff]
  %v45 = vld [vmem:[%s0 + $0x128] sm:$0xff]
  %v46 = vld [vmem:[%s0 + $0x130] sm:$0xff]
  %v47 = vld [vmem:[%s0 + $0x138] sm:$0xff]
  %v48 = vld [vmem:[%s0 + $0x140] sm:$0xff]
  %v49 = vld [vmem:[%s0 + $0x148] sm:$0xff]
  %v50 = vld [vmem:[%s0 + $0x150] sm:$0xff]
  %v51 = vld [vmem:[%s0 + $0x158] sm:$0xff]
  %v52 = vld [vmem:[%s0 + $0x160] sm:$0xff]
  %v53 = vld [vmem:[%s0 + $0x168] sm:$0xff]
  %v54 = vld [vmem:[%s0 + $0x170] sm:$0xff]
  %v55 = vld [vmem:[%s0 + $0x178] sm:$0xff]
  %v56 = vld [vmem:[%s0 + $0x180] sm:$0xff]
  %v57 = vld [vmem:[%s0 + $0x188] sm:$0xff]
  %v58 = vld [vmem:[%s0 + $0x190] sm:$0xff]
  %v59 = vld [vmem:[%s0 + $0x198] sm:$0xff]
  %v60 = vld [vmem:[%s0 + $0x1a0] sm:$0xff]
  %v61 = vld [vmem:[%s0 + $0x1a8] sm:$0xff]
  %v62 = vld [vmem:[%s0 + $0x1b0] sm:$0xff]
  %v63 = vld [vmem:[%s0 + $0x1b8] sm:$0xff]
  %v64 = vld [vmem:[%s0 + $0x1c0] sm:$0xff]
  %v65 = vld [vmem:[%s0 + $0x1c8] sm:$0xff]
  %v66 = vld [vmem:[%s0 + $0x1d0] sm:$0xff]
  %v67 = vld [vmem:[%s0 + $0x1d8] sm:$0xff]
  %v68 = vld [vmem:[%s0 + $0x1e0] sm:$0xff]
  %v69 = vld [vmem:[%s0 + $0x1e8] sm:$0xff]
  %v70 = vld [vmem:[%s0 + $0x1f0] sm:$0xff]
  %v71 = vld [vmem:[%s0 + $0x1f8] sm:$0xff]
  %v72 = vld [vmem:[%s0 + $0x200] sm:$0xff]
  %v73 = vld [vmem:[%s0 + $0x208] sm:$0xff]
  %v74 = vld [vmem:[%s0 + $0x210] sm:$0xff]
  %v75 = vld [vmem:[%s0 + $0x218] sm:$0xff]
  %v76 = vld [vmem:[%s0 + $0x220] sm:$0xff]
  %v77 = vld [vmem:[%s0 + $0x228] sm:$0xff]
  %v78 = vld [vmem:[%s0 + $0x230] sm:$0xff]
  %v79 = vld [vmem:[%s0 + $0x238] sm:$0xff]
  %v80 = vld [vmem:[%s0 + $0x240] sm:$0xff]
  %v81 = vld [vmem:[%s0 + $0x248] sm:$0xff]
  %v82 = vld [vmem:[%s0 + $0x250] sm:$0xff]
  %v83 = vld [vmem:[%s0 + $0x258] sm:$0xff]
  %v84 = vld [vmem:[%s0 + $0x260] sm:$0xff]
  %v85 = vld [vmem:[%s0 + $0x268] sm:$0xff]
  %v86 = vld [vmem:[%s0 + $0x270] sm:$0xff]
  %v87 = vld [vmem:[%s0 + $0x278] sm:$0xff]
  %v88 = vld [vmem:[%s0 + $0x280] sm:$0xff]
  %v89 = vld [vmem:[%s0 + $0x288] sm:$0xff]
  %v90 = vld [vmem:[%s0 + $0x290] sm:$0xff]
  %v91 = vld [vmem:[%s0 + $0x298] sm:$0xff]
  %v92 = vld [vmem:[%s0 + $0x2a0] sm:$0xff]
  %v93 = vld [vmem:[%s0 + $0x2a8] sm:$0xff]
  %v94 = vld [vmem:[%s0 + $0x2b0] sm:$0xff]
  %v95 = vld [vmem:[%s0 + $0x2b8] sm:$0xff]
  %v96 = vld [vmem:[%s0 + $0x2c0] sm:$0xff]
  %v97 = vld [vmem:[%s0 + $0x2c8] sm:$0xff]
  %v98 = vld [vmem:[%s0 + $0x2d0] sm:$0xff]
  %v99 = vld [vmem:[%s0 + $0x2d8] sm:$0xff]
  %v100 = vld [vmem:[%s0 + $0x2e0] sm:$0xff]
  %v101 = vld [vmem:[%s0 + $0x2e8] sm:$0xff]
  %v102 = vld [vmem:[%s0 + $0x2f0] sm:$0xff]
  %v103 = vld [vmem:[%s0 + $0x2f8] sm:$0xff]
  %v104 = vld [vmem:[%s0 + $0x300] sm:$0xff]
  %v105 = vld [vmem:[%s0 + $0x308] sm:$0xff]
  %v106 = vld [vmem:[%s0 + $0x310] sm:$0xff]
  %v107 = vld [vmem:[%s0 + $0x318] sm:$0xff]
  %v108 = vld [vmem:[%s0 + $0x320] sm:$0xff]
  %v109 = vld [vmem:[%s0 + $0x328] sm:$0xff]
  %v110 = vld [vmem:[%s0 + $0x330] sm:$0xff]
  %v111 = vld [vmem:[%s0 + $0x338] sm:$0xff]
  %v112 = vld [vmem:[%s0 + $0x340] sm:$0xff]
  %v113 = vld [vmem:[%s0 + $0x348] sm:$0xff]
  %v114 = vld [vmem:[%s0 + $0x350] sm:$0xff]
  %v115 = vld [vmem:[%s0 + $0x358] sm:$0xff]
  %v116 = vld [vmem:[%s0 + $0x360] sm:$0xff]
  %v117 = vld [vmem:[%s0 + $0x368] sm:$0xff]
  %v118 = vld [vmem:[%s0 + $0x370] sm:$0xff]
  %v119 = vld [vmem:[%s0 + $0x378] sm:$0xff]
  %v120 = vld [vmem:[%s0 + $0x380] sm:$0xff]
  %v121 = vld [vmem:[%s0 + $0x388] sm:$0xff]
  %v122 = vld [vmem:[%s0 + $0x390] sm:$0xff]
  %v123 = vld [vmem:[%s0 + $0x398] sm:$0xff]
  %v124 = vld [vmem:[%s0 + $0x3a0] sm:$0xff]
  %v125 = vmax.f32 %v8, %v21
  %v126 = vmax.f32 %v125, %v34
  %v127 = vmax.f32 %v126, %v47
  %v128 = vmax.f32 %v127, %v60
  %v129 = vmax.f32 %v128, %v73
  %v130 = vmax.f32 %v129, %v86
  %v131 = vmax.f32 %v130, %v99
  %v132 = vmax.f32 %v131, %v112
  %v133 = vmax.f32 %v9, %v22
  %v134 = vmax.f32 %v133, %v35
  %v135 = vmax.f32 %v134, %v48
  %v136 = vmax.f32 %v135, %v61
  %v137 = vmax.f32 %v136, %v74
  %v138 = vmax.f32 %v137, %v87
  %v139 = vmax.f32 %v138, %v100
  %v140 = vmax.f32 %v139, %v113
  %v141 = vmax.f32 %v10, %v23
  %v142 = vmax.f32 %v141, %v36
  %v143 = vmax.f32 %v142, %v49
  %v144 = vmax.f32 %v143, %v62
  %v145 = vmax.f32 %v144, %v75
  %v146 = vmax.f32 %v145, %v88
  %v147 = vmax.f32 %v146, %v101
  %v148 = vmax.f32 %v147, %v114
  %v149 = vmax.f32 %v11, %v24
  %v150 = vmax.f32 %v149, %v37
  %v151 = vmax.f32 %v150, %v50
  %v152 = vmax.f32 %v151, %v63
  %v153 = vmax.f32 %v152, %v76
  %v154 = vmax.f32 %v153, %v89
  %v155 = vmax.f32 %v154, %v102
  %v156 = vmax.f32 %v155, %v115
  %v157 = vmax.f32 %v12, %v25
  %v158 = vmax.f32 %v157, %v38
  %v159 = vmax.f32 %v158, %v51
  %v160 = vmax.f32 %v159, %v64
  %v161 = vmax.f32 %v160, %v77
  %v162 = vmax.f32 %v161, %v90
  %v163 = vmax.f32 %v162, %v103
  %v164 = vmax.f32 %v163, %v116
  %v165 = vmax.f32 %v13, %v26
  %v166 = vmax.f32 %v165, %v39
  %v167 = vmax.f32 %v166, %v52
  %v168 = vmax.f32 %v167, %v65
  %v169 = vmax.f32 %v168, %v78
  %v170 = vmax.f32 %v169, %v91
  %v171 = vmax.f32 %v170, %v104
  %v172 = vmax.f32 %v171, %v117
  %v173 = vmax.f32 %v14, %v27
  %v174 = vmax.f32 %v173, %v40
  %v175 = vmax.f32 %v174, %v53
  %v176 = vmax.f32 %v175, %v66
  %v177 = vmax.f32 %v176, %v79
  %v178 = vmax.f32 %v177, %v92
  %v179 = vmax.f32 %v178, %v105
  %v180 = vmax.f32 %v179, %v118
  %v181 = vmax.f32 %v15, %v28
  %v182 = vmax.f32 %v181, %v41
  %v183 = vmax.f32 %v182, %v54
  %v184 = vmax.f32 %v183, %v67
  %v185 = vmax.f32 %v184, %v80
  %v186 = vmax.f32 %v185, %v93
  %v187 = vmax.f32 %v186, %v106
  %v188 = vmax.f32 %v187, %v119
  %v189 = vmax.f32 %v16, %v29
  %v190 = vmax.f32 %v189, %v42
  %v191 = vmax.f32 %v190, %v55
  %v192 = vmax.f32 %v191, %v68
  %v193 = vmax.f32 %v192, %v81
  %v194 = vmax.f32 %v193, %v94
  %v195 = vmax.f32 %v194, %v107
  %v196 = vmax.f32 %v195, %v120
  %v197 = vmax.f32 %v17, %v30
  %v198 = vmax.f32 %v197, %v43
  %v199 = vmax.f32 %v198, %v56
  %v200 = vmax.f32 %v199, %v69
  %v201 = vmax.f32 %v200, %v82
  %v202 = vmax.f32 %v201, %v95
  %v203 = vmax.f32 %v202, %v108
  %v204 = vmax.f32 %v203, %v121
  %v205 = vmax.f32 %v18, %v31
  %v206 = vmax.f32 %v205, %v44
  %v207 = vmax.f32 %v206, %v57
  %v208 = vmax.f32 %v207, %v70
  %v209 = vmax.f32 %v208, %v83
  %v210 = vmax.f32 %v209, %v96
  %v211 = vmax.f32 %v210, %v109
  %v212 = vmax.f32 %v211, %v122
  %v213 = vmax.f32 %v19, %v32
  %v214 = vmax.f32 %v213, %v45
  %v215 = vmax.f32 %v214, %v58
  %v216 = vmax.f32 %v215, %v71
  %v217 = vmax.f32 %v216, %v84
  %v218 = vmax.f32 %v217, %v97
  %v219 = vmax.f32 %v218, %v110
  %v220 = vmax.f32 %v219, %v123
  %v221 = vmax.f32 %v20, %v33
  %v222 = vmax.f32 %v221, %v46
  %v223 = vmax.f32 %v222, %v59
  %v224 = vmax.f32 %v223, %v72
  %v225 = vmax.f32 %v224, %v85
  %v226 = vmax.f32 %v225, %v98
  %v227 = vmax.f32 %v226, %v111
  %v228 = vmax.f32 %v227, %v124
  %229 = vst [vmem:[%s1] sm:$0xff] %v132
  %230 = vst [vmem:[%s1 + $0x8] sm:$0xff] %v140
  %231 = vst [vmem:[%s1 + $0x10] sm:$0xff] %v148
  %232 = vst [vmem:[%s1 + $0x18] sm:$0xff] %v156
  %233 = vst [vmem:[%s1 + $0x20] sm:$0xff] %v164
  %234 = vst [vmem:[%s1 + $0x28] sm:$0xff] %v172
  %235 = vst [vmem:[%s1 + $0x30] sm:$0xff] %v180
  %236 = vst [vmem:[%s1 + $0x38] sm:$0xff] %v188
  %237 = vst [vmem:[%s1 + $0x40] sm:$0xff] %v196
  %238 = vst [vmem:[%s1 + $0x48] sm:$0xff] %v204
  %239 = vst [vmem:[%s1 + $0x50] sm:$0xff] %v212
  %240 = vst [vmem:[%s1 + $0x58] sm:$0xff] %v220
  %241 = vst [vmem:[%s1 + $0x60] sm:$0xff] %v228
  // Predicated region
  $region6: #{inception_b.9} parent=0 // pred_check
    _
  $region7: #{inception_b.9} parent=0 // pred_check_branch
    %243 = sbr.rel (0) target = $region9
  $region8: #{inception_b.9} parent=0 // pred_region
    _
  $region9: #{inception_b.9} parent=0 // pred_fallthru
    _
  // Predicated region
  $region10: #{inception_b.9} parent=0 // pred_check
    _
  $region11: #{inception_b.9} parent=0 // pred_check_branch
    %245 = sbr.rel (0) target = $region13
  $region12: #{inception_b.9} parent=0 // pred_region
    _
  $region13: #{inception_b.9} parent=0 // pred_fallthru
    _

</llo_original>
